<compile_context>
chip_gen: v6e
topology: v6e:2x2x1
jax: 0.10.0
libtpu: 0.0.40
codegen_flags: <defaults>
</compile_context>

<pallas_src>
import functools
import math

import jax
import jax.numpy as jnp
from jax.experimental import pallas as pl
from jax.experimental.pallas import tpu as pltpu

# ----------------------------- model config ---------------------------------
DIM = 32        # model dim
DEPTH = 2       # number of transformer layers
HEADS = 4
DIM_HEAD = 8
INNER = HEADS * DIM_HEAD   # 32
MLP_DIM = 64
BATCH = 2
SEQ = 8
EPS = 1e-5


# ------------------------------- kernel --------------------------------------
def _layernorm(x, gamma, beta):
    # x: (T, D) f32, gamma/beta: (1, D).  PyTorch LayerNorm: biased variance
    # over the last dim, eps=1e-5.
    mean = jnp.mean(x, axis=-1, keepdims=True)
    var = jnp.mean((x - mean) ** 2, axis=-1, keepdims=True)
    return (x - mean) * jax.lax.rsqrt(var + EPS) * gamma + beta


def transformer_kernel(x_ref,
                       attn_g_ref, attn_b_ref, wq_ref, wk_ref, wv_ref,
                       wo_ref, bo_ref,
                       ff_g_ref, ff_b_ref, w1_ref, b1_ref, w2_ref, b2_ref,
                       o_ref,
                       *, depth, batch, seq, heads, dim_head):
    # x_ref: (B*N, D) -- whole activation resident in VMEM, single invocation.
    f32 = jnp.float32
    tokens = batch * seq
    scale = dim_head ** -0.5

    xf = x_ref[...].astype(f32)                                    # (T, D)

    for l in range(depth):                       # static unroll (DEPTH=2)
        # ---------------- PreNorm(Attention) + residual ---------------------
        normed = _layernorm(xf, attn_g_ref[l], attn_b_ref[l])      # (T, D)
        q = jnp.dot(normed, wq_ref[l], preferred_element_type=f32)  # (T, inner)
        k = jnp.dot(normed, wk_ref[l], preferred_element_type=f32)
        v = jnp.dot(normed, wv_ref[l], preferred_element_type=f32)

        head_outs = []
        for h in range(heads):                   # static unroll (HEADS=4)
            sl = slice(h * dim_head, (h + 1) * dim_head)
            qh = q[:, sl].reshape(batch, seq, dim_head)            # (B, N, dh)
            kh = k[:, sl].reshape(batch, seq, dim_head)
            vh = v[:, sl].reshape(batch, seq, dim_head)
            # batched over B in one einsum (flash-attention style pattern)
            s = jnp.einsum('bnd,bmd->bnm', qh, kh,
                           preferred_element_type=f32) * scale     # (B, N, N)
            s = s - jnp.max(s, axis=-1, keepdims=True)
            p = jnp.exp(s)
            inv = pl.reciprocal(jnp.sum(p, axis=-1, keepdims=True),
                                approx=True)                       # EUP slot
            p = p * inv                                            # softmax
            oh = jnp.einsum('bnm,bmd->bnd', p, vh,
                            preferred_element_type=f32)            # (B, N, dh)
            head_outs.append(oh.reshape(tokens, dim_head))
        attn_out = jnp.concatenate(head_outs, axis=-1)             # (T, inner)

        y = jnp.dot(attn_out, wo_ref[l], preferred_element_type=f32) + bo_ref[l]
        xf = y + xf                                                # residual

        # ---------------- PreNorm(FeedForward) + residual -------------------
        normed = _layernorm(xf, ff_g_ref[l], ff_b_ref[l])
        hdn = jnp.dot(normed, w1_ref[l], preferred_element_type=f32) + b1_ref[l]
        # PyTorch nn.GELU() default = exact erf formulation.
        hdn = 0.5 * hdn * (1.0 + jax.lax.erf(hdn / jnp.sqrt(jnp.float32(2.0))))
        y = jnp.dot(hdn, w2_ref[l], preferred_element_type=f32) + b2_ref[l]
        xf = y + xf                                                # residual

    o_ref[...] = xf.astype(o_ref.dtype)


# ------------------------------ wrapper ---------------------------------------
def transformer_forward(x, params):
    # TODO(synk): dropout=0.0 assumed (eval mode); no dropout ops emitted.
    B, N, D = x.shape
    xf = x.reshape(B * N, D)                      # flatten tokens in wrapper

    vmem = pl.BlockSpec(memory_space=pltpu.MemorySpace.VMEM)  # whole array, resident
    kern = functools.partial(transformer_kernel, depth=DEPTH, batch=B, seq=N,
                             heads=HEADS, dim_head=DIM_HEAD)

    args = (xf,
            params["attn_ln_g"], params["attn_ln_b"],
            params["w_q"], params["w_k"], params["w_v"],
            params["w_out"], params["b_out"],
            params["ff_ln_g"], params["ff_ln_b"],
            params["w1"], params["b1"], params["w2"], params["b2"])

    out = pl.pallas_call(
        kern,
        out_shape=jax.ShapeDtypeStruct((B * N, D), x.dtype),
        in_specs=[vmem] * len(args),
        out_specs=vmem,
    )(*args)
    return out.reshape(B, N, D)


# --------------------------- deterministic init --------------------------------
def init_params(key):
    def lin(k, fan_in, fan_out):
        bound = 1.0 / math.sqrt(fan_in)
        return jax.random.uniform(k, (fan_in, fan_out), jnp.float32, -bound, bound)

    layer_keys = jax.random.split(key, DEPTH)
    layers = []
    for lk in layer_keys:
        ks = jax.random.split(lk, 6)
        w_qkv = lin(ks[0], DIM, 3 * INNER)        # to_qkv (bias=False)
        layers.append({
            # PreNorm(Attention)
            "attn_ln_g": jnp.ones((1, DIM), jnp.float32),
            "attn_ln_b": jnp.zeros((1, DIM), jnp.float32),
            "w_q": w_qkv[:, :INNER],
            "w_k": w_qkv[:, INNER:2 * INNER],
            "w_v": w_qkv[:, 2 * INNER:],
            "w_out": lin(ks[1], INNER, DIM),
            "b_out": jax.random.uniform(ks[2], (1, DIM), jnp.float32,
                                        -1.0 / math.sqrt(INNER),
                                        1.0 / math.sqrt(INNER)),
            # PreNorm(FeedForward)
            "ff_ln_g": jnp.ones((1, DIM), jnp.float32),
            "ff_ln_b": jnp.zeros((1, DIM), jnp.float32),
            "w1": lin(ks[3], DIM, MLP_DIM),
            "b1": jax.random.uniform(ks[4], (1, MLP_DIM), jnp.float32,
                                     -1.0 / math.sqrt(DIM), 1.0 / math.sqrt(DIM)),
            "w2": lin(ks[5], MLP_DIM, DIM),
            "b2": jnp.zeros((1, DIM), jnp.float32),
        })
    # Stack every parameter along a leading layer axis so the fused kernel can
    # index layers with static slices.
    return {k: jnp.stack([lay[k] for lay in layers], axis=0) for k in layers[0]}


if __name__ == "__main__":
    root = jax.random.PRNGKey(0)
    kx, kp = jax.random.split(root)

    x = jax.random.normal(kx, (BATCH, SEQ, DIM), jnp.float32)
    params = init_params(kp)

    out = jax.jit(transformer_forward)(x, params)
    jax.block_until_ready(out)
    assert out.shape == (BATCH, SEQ, DIM)
    print("KERNEL_OK")
</pallas_src>

<mosaic_0001>
module attributes {stable_mosaic.version = 11 : i64} {
  func.func @transformer_kernel(%arg0: memref<16x32xf32, #tpu.memory_space<vmem>>, %arg1: memref<2x1x32xf32, #tpu.memory_space<vmem>>, %arg2: memref<2x1x32xf32, #tpu.memory_space<vmem>>, %arg3: memref<2x32x32xf32, #tpu.memory_space<vmem>>, %arg4: memref<2x32x32xf32, #tpu.memory_space<vmem>>, %arg5: memref<2x32x32xf32, #tpu.memory_space<vmem>>, %arg6: memref<2x32x32xf32, #tpu.memory_space<vmem>>, %arg7: memref<2x1x32xf32, #tpu.memory_space<vmem>>, %arg8: memref<2x1x32xf32, #tpu.memory_space<vmem>>, %arg9: memref<2x1x32xf32, #tpu.memory_space<vmem>>, %arg10: memref<2x32x64xf32, #tpu.memory_space<vmem>>, %arg11: memref<2x1x64xf32, #tpu.memory_space<vmem>>, %arg12: memref<2x64x32xf32, #tpu.memory_space<vmem>>, %arg13: memref<2x1x32xf32, #tpu.memory_space<vmem>>, %arg14: memref<16x32xf32, #tpu.memory_space<vmem>>) attributes {dimension_semantics = [], scalar_prefetch = 0 : i64, scratch_operands = 0 : i64, tpu.core_type = #tpu.core_type<tc>} {
    %c0 = arith.constant 0 : index
    %c0_0 = arith.constant 0 : index
    %0 = vector.load %arg0[%c0, %c0_0] : memref<16x32xf32, #tpu.memory_space<vmem>>, vector<16x32xf32>
    %c0_1 = arith.constant 0 : index
    %c0_2 = arith.constant 0 : index
    %c0_3 = arith.constant 0 : index
    %1 = vector.load %arg1[%c0_1, %c0_2, %c0_3] : memref<2x1x32xf32, #tpu.memory_space<vmem>>, vector<1x1x32xf32>
    %2 = vector.shape_cast %1 : vector<1x1x32xf32> to vector<1x32xf32>
    %c0_4 = arith.constant 0 : index
    %c0_5 = arith.constant 0 : index
    %c0_6 = arith.constant 0 : index
    %3 = vector.load %arg2[%c0_4, %c0_5, %c0_6] : memref<2x1x32xf32, #tpu.memory_space<vmem>>, vector<1x1x32xf32>
    %4 = vector.shape_cast %3 : vector<1x1x32xf32> to vector<1x32xf32>
    %cst = arith.constant dense<0.000000e+00> : vector<16xf32>
    %5 = vector.multi_reduction <add>, %0, %cst [1] : vector<16x32xf32> to vector<16xf32>
    %6 = vector.shape_cast %5 : vector<16xf32> to vector<16x1xf32>
    %cst_7 = arith.constant 3.200000e+01 : f32
    %7 = vector.broadcast %cst_7 : f32 to vector<16x1xf32>
    %8 = arith.divf %6, %7 : vector<16x1xf32>
    %9 = vector.broadcast %8 : vector<16x1xf32> to vector<16x32xf32>
    %10 = arith.subf %0, %9 : vector<16x32xf32>
    %11 = arith.mulf %10, %10 : vector<16x32xf32>
    %cst_8 = arith.constant dense<0.000000e+00> : vector<16xf32>
    %12 = vector.multi_reduction <add>, %11, %cst_8 [1] : vector<16x32xf32> to vector<16xf32>
    %13 = vector.shape_cast %12 : vector<16xf32> to vector<16x1xf32>
    %cst_9 = arith.constant 3.200000e+01 : f32
    %14 = vector.broadcast %cst_9 : f32 to vector<16x1xf32>
    %15 = arith.divf %13, %14 : vector<16x1xf32>
    %16 = vector.broadcast %8 : vector<16x1xf32> to vector<16x32xf32>
    %17 = arith.subf %0, %16 : vector<16x32xf32>
    %cst_10 = arith.constant 9.99999974E-6 : f32
    %18 = vector.broadcast %cst_10 : f32 to vector<16x1xf32>
    %19 = arith.addf %15, %18 : vector<16x1xf32>
    %20 = math.rsqrt %19 : vector<16x1xf32>
    %21 = vector.broadcast %20 : vector<16x1xf32> to vector<16x32xf32>
    %22 = arith.mulf %17, %21 : vector<16x32xf32>
    %23 = vector.broadcast %2 : vector<1x32xf32> to vector<16x32xf32>
    %24 = arith.mulf %22, %23 : vector<16x32xf32>
    %25 = vector.broadcast %4 : vector<1x32xf32> to vector<16x32xf32>
    %26 = arith.addf %24, %25 : vector<16x32xf32>
    %c0_11 = arith.constant 0 : index
    %c0_12 = arith.constant 0 : index
    %c0_13 = arith.constant 0 : index
    %27 = vector.load %arg3[%c0_11, %c0_12, %c0_13] : memref<2x32x32xf32, #tpu.memory_space<vmem>>, vector<1x32x32xf32>
    %28 = vector.shape_cast %27 : vector<1x32x32xf32> to vector<32x32xf32>
    %cst_14 = arith.constant dense<0.000000e+00> : vector<16x32xf32>
    %29 = tpu.matmul %26, %28, %cst_14 {dimension_numbers = #tpu.dot_dimension_numbers<[1], [0], [0], [1], [0, 0, 1, 1], [], []>} : vector<16x32xf32>, vector<32x32xf32>, vector<16x32xf32> -> vector<16x32xf32>
    %c0_15 = arith.constant 0 : index
    %c0_16 = arith.constant 0 : index
    %c0_17 = arith.constant 0 : index
    %30 = vector.load %arg4[%c0_15, %c0_16, %c0_17] : memref<2x32x32xf32, #tpu.memory_space<vmem>>, vector<1x32x32xf32>
    %31 = vector.shape_cast %30 : vector<1x32x32xf32> to vector<32x32xf32>
    %cst_18 = arith.constant dense<0.000000e+00> : vector<16x32xf32>
    %32 = tpu.matmul %26, %31, %cst_18 {dimension_numbers = #tpu.dot_dimension_numbers<[1], [0], [0], [1], [0, 0, 1, 1], [], []>} : vector<16x32xf32>, vector<32x32xf32>, vector<16x32xf32> -> vector<16x32xf32>
    %c0_19 = arith.constant 0 : index
    %c0_20 = arith.constant 0 : index
    %c0_21 = arith.constant 0 : index
    %33 = vector.load %arg5[%c0_19, %c0_20, %c0_21] : memref<2x32x32xf32, #tpu.memory_space<vmem>>, vector<1x32x32xf32>
    %34 = vector.shape_cast %33 : vector<1x32x32xf32> to vector<32x32xf32>
    %cst_22 = arith.constant dense<0.000000e+00> : vector<16x32xf32>
    %35 = tpu.matmul %26, %34, %cst_22 {dimension_numbers = #tpu.dot_dimension_numbers<[1], [0], [0], [1], [0, 0, 1, 1], [], []>} : vector<16x32xf32>, vector<32x32xf32>, vector<16x32xf32> -> vector<16x32xf32>
    %36 = vector.extract_strided_slice %29 {offsets = [0, 0], sizes = [16, 8], strides = [1, 1]} : vector<16x32xf32> to vector<16x8xf32>
    %37 = vector.shape_cast %36 : vector<16x8xf32> to vector<2x8x8xf32>
    %38 = vector.extract_strided_slice %32 {offsets = [0, 0], sizes = [16, 8], strides = [1, 1]} : vector<16x32xf32> to vector<16x8xf32>
    %39 = vector.shape_cast %38 : vector<16x8xf32> to vector<2x8x8xf32>
    %40 = vector.extract_strided_slice %35 {offsets = [0, 0], sizes = [16, 8], strides = [1, 1]} : vector<16x32xf32> to vector<16x8xf32>
    %41 = vector.shape_cast %40 : vector<16x8xf32> to vector<2x8x8xf32>
    "tpu.trace_start"() <{level = 10 : i32, message = "bnd,bmd->bnm"}> : () -> ()
    %cst_23 = arith.constant dense<0.000000e+00> : vector<2x8x8xf32>
    %42 = tpu.matmul %37, %39, %cst_23 {dimension_numbers = #tpu.dot_dimension_numbers<[2], [2], [1], [1], [0, 0, 0, 1, 1, 1], [0], [0]>} : vector<2x8x8xf32>, vector<2x8x8xf32>, vector<2x8x8xf32> -> vector<2x8x8xf32>
    "tpu.trace_stop"() : () -> ()
    %cst_24 = arith.constant 0.353553385 : f32
    %43 = vector.broadcast %cst_24 : f32 to vector<2x8x8xf32>
    %44 = arith.mulf %42, %43 : vector<2x8x8xf32>
    %cst_25 = arith.constant dense<0xFF800000> : vector<2x8xf32>
    %45 = vector.multi_reduction <maximumf>, %44, %cst_25 [2] : vector<2x8x8xf32> to vector<2x8xf32>
    %46 = vector.shape_cast %45 : vector<2x8xf32> to vector<2x8x1xf32>
    %47 = vector.broadcast %46 : vector<2x8x1xf32> to vector<2x8x8xf32>
    %48 = arith.subf %44, %47 : vector<2x8x8xf32>
    %49 = math.exp %48 : vector<2x8x8xf32>
    %cst_26 = arith.constant dense<0.000000e+00> : vector<2x8xf32>
    %50 = vector.multi_reduction <add>, %49, %cst_26 [2] : vector<2x8x8xf32> to vector<2x8xf32>
    %51 = vector.shape_cast %50 : vector<2x8xf32> to vector<2x8x1xf32>
    %52 = tpu.reciprocal %51 {approx = true} : vector<2x8x1xf32> -> vector<2x8x1xf32>
    %53 = vector.broadcast %52 : vector<2x8x1xf32> to vector<2x8x8xf32>
    %54 = arith.mulf %49, %53 : vector<2x8x8xf32>
    "tpu.trace_start"() <{level = 10 : i32, message = "bnm,bmd->bnd"}> : () -> ()
    %cst_27 = arith.constant dense<0.000000e+00> : vector<2x8x8xf32>
    %55 = tpu.matmul %54, %41, %cst_27 {dimension_numbers = #tpu.dot_dimension_numbers<[2], [1], [1], [2], [0, 0, 0, 1, 1, 2], [0], [0]>} : vector<2x8x8xf32>, vector<2x8x8xf32>, vector<2x8x8xf32> -> vector<2x8x8xf32>
    "tpu.trace_stop"() : () -> ()
    %56 = vector.shape_cast %55 : vector<2x8x8xf32> to vector<16x8xf32>
    %57 = vector.extract_strided_slice %29 {offsets = [0, 8], sizes = [16, 8], strides = [1, 1]} : vector<16x32xf32> to vector<16x8xf32>
    %58 = vector.shape_cast %57 : vector<16x8xf32> to vector<2x8x8xf32>
    %59 = vector.extract_strided_slice %32 {offsets = [0, 8], sizes = [16, 8], strides = [1, 1]} : vector<16x32xf32> to vector<16x8xf32>
    %60 = vector.shape_cast %59 : vector<16x8xf32> to vector<2x8x8xf32>
    %61 = vector.extract_strided_slice %35 {offsets = [0, 8], sizes = [16, 8], strides = [1, 1]} : vector<16x32xf32> to vector<16x8xf32>
    %62 = vector.shape_cast %61 : vector<16x8xf32> to vector<2x8x8xf32>
    "tpu.trace_start"() <{level = 10 : i32, message = "bnd,bmd->bnm"}> : () -> ()
    %cst_28 = arith.constant dense<0.000000e+00> : vector<2x8x8xf32>
    %63 = tpu.matmul %58, %60, %cst_28 {dimension_numbers = #tpu.dot_dimension_numbers<[2], [2], [1], [1], [0, 0, 0, 1, 1, 1], [0], [0]>} : vector<2x8x8xf32>, vector<2x8x8xf32>, vector<2x8x8xf32> -> vector<2x8x8xf32>
    "tpu.trace_stop"() : () -> ()
    %cst_29 = arith.constant 0.353553385 : f32
    %64 = vector.broadcast %cst_29 : f32 to vector<2x8x8xf32>
    %65 = arith.mulf %63, %64 : vector<2x8x8xf32>
    %cst_30 = arith.constant dense<0xFF800000> : vector<2x8xf32>
    %66 = vector.multi_reduction <maximumf>, %65, %cst_30 [2] : vector<2x8x8xf32> to vector<2x8xf32>
    %67 = vector.shape_cast %66 : vector<2x8xf32> to vector<2x8x1xf32>
    %68 = vector.broadcast %67 : vector<2x8x1xf32> to vector<2x8x8xf32>
    %69 = arith.subf %65, %68 : vector<2x8x8xf32>
    %70 = math.exp %69 : vector<2x8x8xf32>
    %cst_31 = arith.constant dense<0.000000e+00> : vector<2x8xf32>
    %71 = vector.multi_reduction <add>, %70, %cst_31 [2] : vector<2x8x8xf32> to vector<2x8xf32>
    %72 = vector.shape_cast %71 : vector<2x8xf32> to vector<2x8x1xf32>
    %73 = tpu.reciprocal %72 {approx = true} : vector<2x8x1xf32> -> vector<2x8x1xf32>
    %74 = vector.broadcast %73 : vector<2x8x1xf32> to vector<2x8x8xf32>
    %75 = arith.mulf %70, %74 : vector<2x8x8xf32>
    "tpu.trace_start"() <{level = 10 : i32, message = "bnm,bmd->bnd"}> : () -> ()
    %cst_32 = arith.constant dense<0.000000e+00> : vector<2x8x8xf32>
    %76 = tpu.matmul %75, %62, %cst_32 {dimension_numbers = #tpu.dot_dimension_numbers<[2], [1], [1], [2], [0, 0, 0, 1, 1, 2], [0], [0]>} : vector<2x8x8xf32>, vector<2x8x8xf32>, vector<2x8x8xf32> -> vector<2x8x8xf32>
    "tpu.trace_stop"() : () -> ()
    %77 = vector.shape_cast %76 : vector<2x8x8xf32> to vector<16x8xf32>
    %78 = vector.extract_strided_slice %29 {offsets = [0, 16], sizes = [16, 8], strides = [1, 1]} : vector<16x32xf32> to vector<16x8xf32>
    %79 = vector.shape_cast %78 : vector<16x8xf32> to vector<2x8x8xf32>
    %80 = vector.extract_strided_slice %32 {offsets = [0, 16], sizes = [16, 8], strides = [1, 1]} : vector<16x32xf32> to vector<16x8xf32>
    %81 = vector.shape_cast %80 : vector<16x8xf32> to vector<2x8x8xf32>
    %82 = vector.extract_strided_slice %35 {offsets = [0, 16], sizes = [16, 8], strides = [1, 1]} : vector<16x32xf32> to vector<16x8xf32>
    %83 = vector.shape_cast %82 : vector<16x8xf32> to vector<2x8x8xf32>
    "tpu.trace_start"() <{level = 10 : i32, message = "bnd,bmd->bnm"}> : () -> ()
    %cst_33 = arith.constant dense<0.000000e+00> : vector<2x8x8xf32>
    %84 = tpu.matmul %79, %81, %cst_33 {dimension_numbers = #tpu.dot_dimension_numbers<[2], [2], [1], [1], [0, 0, 0, 1, 1, 1], [0], [0]>} : vector<2x8x8xf32>, vector<2x8x8xf32>, vector<2x8x8xf32> -> vector<2x8x8xf32>
    "tpu.trace_stop"() : () -> ()
    %cst_34 = arith.constant 0.353553385 : f32
    %85 = vector.broadcast %cst_34 : f32 to vector<2x8x8xf32>
    %86 = arith.mulf %84, %85 : vector<2x8x8xf32>
    %cst_35 = arith.constant dense<0xFF800000> : vector<2x8xf32>
    %87 = vector.multi_reduction <maximumf>, %86, %cst_35 [2] : vector<2x8x8xf32> to vector<2x8xf32>
    %88 = vector.shape_cast %87 : vector<2x8xf32> to vector<2x8x1xf32>
    %89 = vector.broadcast %88 : vector<2x8x1xf32> to vector<2x8x8xf32>
    %90 = arith.subf %86, %89 : vector<2x8x8xf32>
    %91 = math.exp %90 : vector<2x8x8xf32>
    %cst_36 = arith.constant dense<0.000000e+00> : vector<2x8xf32>
    %92 = vector.multi_reduction <add>, %91, %cst_36 [2] : vector<2x8x8xf32> to vector<2x8xf32>
    %93 = vector.shape_cast %92 : vector<2x8xf32> to vector<2x8x1xf32>
    %94 = tpu.reciprocal %93 {approx = true} : vector<2x8x1xf32> -> vector<2x8x1xf32>
    %95 = vector.broadcast %94 : vector<2x8x1xf32> to vector<2x8x8xf32>
    %96 = arith.mulf %91, %95 : vector<2x8x8xf32>
    "tpu.trace_start"() <{level = 10 : i32, message = "bnm,bmd->bnd"}> : () -> ()
    %cst_37 = arith.constant dense<0.000000e+00> : vector<2x8x8xf32>
    %97 = tpu.matmul %96, %83, %cst_37 {dimension_numbers = #tpu.dot_dimension_numbers<[2], [1], [1], [2], [0, 0, 0, 1, 1, 2], [0], [0]>} : vector<2x8x8xf32>, vector<2x8x8xf32>, vector<2x8x8xf32> -> vector<2x8x8xf32>
    "tpu.trace_stop"() : () -> ()
    %98 = vector.shape_cast %97 : vector<2x8x8xf32> to vector<16x8xf32>
    %99 = vector.extract_strided_slice %29 {offsets = [0, 24], sizes = [16, 8], strides = [1, 1]} : vector<16x32xf32> to vector<16x8xf32>
    %100 = vector.shape_cast %99 : vector<16x8xf32> to vector<2x8x8xf32>
    %101 = vector.extract_strided_slice %32 {offsets = [0, 24], sizes = [16, 8], strides = [1, 1]} : vector<16x32xf32> to vector<16x8xf32>
    %102 = vector.shape_cast %101 : vector<16x8xf32> to vector<2x8x8xf32>
    %103 = vector.extract_strided_slice %35 {offsets = [0, 24], sizes = [16, 8], strides = [1, 1]} : vector<16x32xf32> to vector<16x8xf32>
    %104 = vector.shape_cast %103 : vector<16x8xf32> to vector<2x8x8xf32>
    "tpu.trace_start"() <{level = 10 : i32, message = "bnd,bmd->bnm"}> : () -> ()
    %cst_38 = arith.constant dense<0.000000e+00> : vector<2x8x8xf32>
    %105 = tpu.matmul %100, %102, %cst_38 {dimension_numbers = #tpu.dot_dimension_numbers<[2], [2], [1], [1], [0, 0, 0, 1, 1, 1], [0], [0]>} : vector<2x8x8xf32>, vector<2x8x8xf32>, vector<2x8x8xf32> -> vector<2x8x8xf32>
    "tpu.trace_stop"() : () -> ()
    %cst_39 = arith.constant 0.353553385 : f32
    %106 = vector.broadcast %cst_39 : f32 to vector<2x8x8xf32>
    %107 = arith.mulf %105, %106 : vector<2x8x8xf32>
    %cst_40 = arith.constant dense<0xFF800000> : vector<2x8xf32>
    %108 = vector.multi_reduction <maximumf>, %107, %cst_40 [2] : vector<2x8x8xf32> to vector<2x8xf32>
    %109 = vector.shape_cast %108 : vector<2x8xf32> to vector<2x8x1xf32>
    %110 = vector.broadcast %109 : vector<2x8x1xf32> to vector<2x8x8xf32>
    %111 = arith.subf %107, %110 : vector<2x8x8xf32>
    %112 = math.exp %111 : vector<2x8x8xf32>
    %cst_41 = arith.constant dense<0.000000e+00> : vector<2x8xf32>
    %113 = vector.multi_reduction <add>, %112, %cst_41 [2] : vector<2x8x8xf32> to vector<2x8xf32>
    %114 = vector.shape_cast %113 : vector<2x8xf32> to vector<2x8x1xf32>
    %115 = tpu.reciprocal %114 {approx = true} : vector<2x8x1xf32> -> vector<2x8x1xf32>
    %116 = vector.broadcast %115 : vector<2x8x1xf32> to vector<2x8x8xf32>
    %117 = arith.mulf %112, %116 : vector<2x8x8xf32>
    "tpu.trace_start"() <{level = 10 : i32, message = "bnm,bmd->bnd"}> : () -> ()
    %cst_42 = arith.constant dense<0.000000e+00> : vector<2x8x8xf32>
    %118 = tpu.matmul %117, %104, %cst_42 {dimension_numbers = #tpu.dot_dimension_numbers<[2], [1], [1], [2], [0, 0, 0, 1, 1, 2], [0], [0]>} : vector<2x8x8xf32>, vector<2x8x8xf32>, vector<2x8x8xf32> -> vector<2x8x8xf32>
    "tpu.trace_stop"() : () -> ()
    %119 = vector.shape_cast %118 : vector<2x8x8xf32> to vector<16x8xf32>
    %120 = tpu.concatenate %56, %77, %98, %119 in 1 : vector<16x8xf32>, vector<16x8xf32>, vector<16x8xf32>, vector<16x8xf32> -> vector<16x32xf32>
    %c0_43 = arith.constant 0 : index
    %c0_44 = arith.constant 0 : index
    %c0_45 = arith.constant 0 : index
    %121 = vector.load %arg6[%c0_43, %c0_44, %c0_45] : memref<2x32x32xf32, #tpu.memory_space<vmem>>, vector<1x32x32xf32>
    %122 = vector.shape_cast %121 : vector<1x32x32xf32> to vector<32x32xf32>
    %cst_46 = arith.constant dense<0.000000e+00> : vector<16x32xf32>
    %123 = tpu.matmul %120, %122, %cst_46 {dimension_numbers = #tpu.dot_dimension_numbers<[1], [0], [0], [1], [0, 0, 1, 1], [], []>} : vector<16x32xf32>, vector<32x32xf32>, vector<16x32xf32> -> vector<16x32xf32>
    %c0_47 = arith.constant 0 : index
    %c0_48 = arith.constant 0 : index
    %c0_49 = arith.constant 0 : index
    %124 = vector.load %arg7[%c0_47, %c0_48, %c0_49] : memref<2x1x32xf32, #tpu.memory_space<vmem>>, vector<1x1x32xf32>
    %125 = vector.shape_cast %124 : vector<1x1x32xf32> to vector<1x32xf32>
    %126 = vector.broadcast %125 : vector<1x32xf32> to vector<16x32xf32>
    %127 = arith.addf %123, %126 : vector<16x32xf32>
    %128 = arith.addf %127, %0 : vector<16x32xf32>
    %c0_50 = arith.constant 0 : index
    %c0_51 = arith.constant 0 : index
    %c0_52 = arith.constant 0 : index
    %129 = vector.load %arg8[%c0_50, %c0_51, %c0_52] : memref<2x1x32xf32, #tpu.memory_space<vmem>>, vector<1x1x32xf32>
    %130 = vector.shape_cast %129 : vector<1x1x32xf32> to vector<1x32xf32>
    %c0_53 = arith.constant 0 : index
    %c0_54 = arith.constant 0 : index
    %c0_55 = arith.constant 0 : index
    %131 = vector.load %arg9[%c0_53, %c0_54, %c0_55] : memref<2x1x32xf32, #tpu.memory_space<vmem>>, vector<1x1x32xf32>
    %132 = vector.shape_cast %131 : vector<1x1x32xf32> to vector<1x32xf32>
    %cst_56 = arith.constant dense<0.000000e+00> : vector<16xf32>
    %133 = vector.multi_reduction <add>, %128, %cst_56 [1] : vector<16x32xf32> to vector<16xf32>
    %134 = vector.shape_cast %133 : vector<16xf32> to vector<16x1xf32>
    %cst_57 = arith.constant 3.200000e+01 : f32
    %135 = vector.broadcast %cst_57 : f32 to vector<16x1xf32>
    %136 = arith.divf %134, %135 : vector<16x1xf32>
    %137 = vector.broadcast %136 : vector<16x1xf32> to vector<16x32xf32>
    %138 = arith.subf %128, %137 : vector<16x32xf32>
    %139 = arith.mulf %138, %138 : vector<16x32xf32>
    %cst_58 = arith.constant dense<0.000000e+00> : vector<16xf32>
    %140 = vector.multi_reduction <add>, %139, %cst_58 [1] : vector<16x32xf32> to vector<16xf32>
    %141 = vector.shape_cast %140 : vector<16xf32> to vector<16x1xf32>
    %cst_59 = arith.constant 3.200000e+01 : f32
    %142 = vector.broadcast %cst_59 : f32 to vector<16x1xf32>
    %143 = arith.divf %141, %142 : vector<16x1xf32>
    %144 = vector.broadcast %136 : vector<16x1xf32> to vector<16x32xf32>
    %145 = arith.subf %128, %144 : vector<16x32xf32>
    %cst_60 = arith.constant 9.99999974E-6 : f32
    %146 = vector.broadcast %cst_60 : f32 to vector<16x1xf32>
    %147 = arith.addf %143, %146 : vector<16x1xf32>
    %148 = math.rsqrt %147 : vector<16x1xf32>
    %149 = vector.broadcast %148 : vector<16x1xf32> to vector<16x32xf32>
    %150 = arith.mulf %145, %149 : vector<16x32xf32>
    %151 = vector.broadcast %130 : vector<1x32xf32> to vector<16x32xf32>
    %152 = arith.mulf %150, %151 : vector<16x32xf32>
    %153 = vector.broadcast %132 : vector<1x32xf32> to vector<16x32xf32>
    %154 = arith.addf %152, %153 : vector<16x32xf32>
    %c0_61 = arith.constant 0 : index
    %c0_62 = arith.constant 0 : index
    %c0_63 = arith.constant 0 : index
    %155 = vector.load %arg10[%c0_61, %c0_62, %c0_63] : memref<2x32x64xf32, #tpu.memory_space<vmem>>, vector<1x32x64xf32>
    %156 = vector.shape_cast %155 : vector<1x32x64xf32> to vector<32x64xf32>
    %cst_64 = arith.constant dense<0.000000e+00> : vector<16x64xf32>
    %157 = tpu.matmul %154, %156, %cst_64 {dimension_numbers = #tpu.dot_dimension_numbers<[1], [0], [0], [1], [0, 0, 1, 1], [], []>} : vector<16x32xf32>, vector<32x64xf32>, vector<16x64xf32> -> vector<16x64xf32>
    %c0_65 = arith.constant 0 : index
    %c0_66 = arith.constant 0 : index
    %c0_67 = arith.constant 0 : index
    %158 = vector.load %arg11[%c0_65, %c0_66, %c0_67] : memref<2x1x64xf32, #tpu.memory_space<vmem>>, vector<1x1x64xf32>
    %159 = vector.shape_cast %158 : vector<1x1x64xf32> to vector<1x64xf32>
    %160 = vector.broadcast %159 : vector<1x64xf32> to vector<16x64xf32>
    %161 = arith.addf %157, %160 : vector<16x64xf32>
    %cst_68 = arith.constant 5.000000e-01 : f32
    %162 = vector.broadcast %cst_68 : f32 to vector<16x64xf32>
    %163 = arith.mulf %162, %161 : vector<16x64xf32>
    %cst_69 = arith.constant 2.000000e+00 : f32
    %164 = math.sqrt %cst_69 : f32
    %165 = vector.broadcast %164 : f32 to vector<16x64xf32>
    %166 = arith.divf %161, %165 : vector<16x64xf32>
    %167 = math.erf %166 : vector<16x64xf32>
    %cst_70 = arith.constant 1.000000e+00 : f32
    %168 = vector.broadcast %cst_70 : f32 to vector<16x64xf32>
    %169 = arith.addf %168, %167 : vector<16x64xf32>
    %170 = arith.mulf %163, %169 : vector<16x64xf32>
    %c0_71 = arith.constant 0 : index
    %c0_72 = arith.constant 0 : index
    %c0_73 = arith.constant 0 : index
    %171 = vector.load %arg12[%c0_71, %c0_72, %c0_73] : memref<2x64x32xf32, #tpu.memory_space<vmem>>, vector<1x64x32xf32>
    %172 = vector.shape_cast %171 : vector<1x64x32xf32> to vector<64x32xf32>
    %cst_74 = arith.constant dense<0.000000e+00> : vector<16x32xf32>
    %173 = tpu.matmul %170, %172, %cst_74 {dimension_numbers = #tpu.dot_dimension_numbers<[1], [0], [0], [1], [0, 0, 1, 1], [], []>} : vector<16x64xf32>, vector<64x32xf32>, vector<16x32xf32> -> vector<16x32xf32>
    %c0_75 = arith.constant 0 : index
    %c0_76 = arith.constant 0 : index
    %c0_77 = arith.constant 0 : index
    %174 = vector.load %arg13[%c0_75, %c0_76, %c0_77] : memref<2x1x32xf32, #tpu.memory_space<vmem>>, vector<1x1x32xf32>
    %175 = vector.shape_cast %174 : vector<1x1x32xf32> to vector<1x32xf32>
    %176 = vector.broadcast %175 : vector<1x32xf32> to vector<16x32xf32>
    %177 = arith.addf %173, %176 : vector<16x32xf32>
    %178 = arith.addf %177, %128 : vector<16x32xf32>
    %c1 = arith.constant 1 : index
    %c0_78 = arith.constant 0 : index
    %c0_79 = arith.constant 0 : index
    %179 = vector.load %arg1[%c1, %c0_78, %c0_79] : memref<2x1x32xf32, #tpu.memory_space<vmem>>, vector<1x1x32xf32>
    %180 = vector.shape_cast %179 : vector<1x1x32xf32> to vector<1x32xf32>
    %c1_80 = arith.constant 1 : index
    %c0_81 = arith.constant 0 : index
    %c0_82 = arith.constant 0 : index
    %181 = vector.load %arg2[%c1_80, %c0_81, %c0_82] : memref<2x1x32xf32, #tpu.memory_space<vmem>>, vector<1x1x32xf32>
    %182 = vector.shape_cast %181 : vector<1x1x32xf32> to vector<1x32xf32>
    %cst_83 = arith.constant dense<0.000000e+00> : vector<16xf32>
    %183 = vector.multi_reduction <add>, %178, %cst_83 [1] : vector<16x32xf32> to vector<16xf32>
    %184 = vector.shape_cast %183 : vector<16xf32> to vector<16x1xf32>
    %cst_84 = arith.constant 3.200000e+01 : f32
    %185 = vector.broadcast %cst_84 : f32 to vector<16x1xf32>
    %186 = arith.divf %184, %185 : vector<16x1xf32>
    %187 = vector.broadcast %186 : vector<16x1xf32> to vector<16x32xf32>
    %188 = arith.subf %178, %187 : vector<16x32xf32>
    %189 = arith.mulf %188, %188 : vector<16x32xf32>
    %cst_85 = arith.constant dense<0.000000e+00> : vector<16xf32>
    %190 = vector.multi_reduction <add>, %189, %cst_85 [1] : vector<16x32xf32> to vector<16xf32>
    %191 = vector.shape_cast %190 : vector<16xf32> to vector<16x1xf32>
    %cst_86 = arith.constant 3.200000e+01 : f32
    %192 = vector.broadcast %cst_86 : f32 to vector<16x1xf32>
    %193 = arith.divf %191, %192 : vector<16x1xf32>
    %194 = vector.broadcast %186 : vector<16x1xf32> to vector<16x32xf32>
    %195 = arith.subf %178, %194 : vector<16x32xf32>
    %cst_87 = arith.constant 9.99999974E-6 : f32
    %196 = vector.broadcast %cst_87 : f32 to vector<16x1xf32>
    %197 = arith.addf %193, %196 : vector<16x1xf32>
    %198 = math.rsqrt %197 : vector<16x1xf32>
    %199 = vector.broadcast %198 : vector<16x1xf32> to vector<16x32xf32>
    %200 = arith.mulf %195, %199 : vector<16x32xf32>
    %201 = vector.broadcast %180 : vector<1x32xf32> to vector<16x32xf32>
    %202 = arith.mulf %200, %201 : vector<16x32xf32>
    %203 = vector.broadcast %182 : vector<1x32xf32> to vector<16x32xf32>
    %204 = arith.addf %202, %203 : vector<16x32xf32>
    %c1_88 = arith.constant 1 : index
    %c0_89 = arith.constant 0 : index
    %c0_90 = arith.constant 0 : index
    %205 = vector.load %arg3[%c1_88, %c0_89, %c0_90] : memref<2x32x32xf32, #tpu.memory_space<vmem>>, vector<1x32x32xf32>
    %206 = vector.shape_cast %205 : vector<1x32x32xf32> to vector<32x32xf32>
    %cst_91 = arith.constant dense<0.000000e+00> : vector<16x32xf32>
    %207 = tpu.matmul %204, %206, %cst_91 {dimension_numbers = #tpu.dot_dimension_numbers<[1], [0], [0], [1], [0, 0, 1, 1], [], []>} : vector<16x32xf32>, vector<32x32xf32>, vector<16x32xf32> -> vector<16x32xf32>
    %c1_92 = arith.constant 1 : index
    %c0_93 = arith.constant 0 : index
    %c0_94 = arith.constant 0 : index
    %208 = vector.load %arg4[%c1_92, %c0_93, %c0_94] : memref<2x32x32xf32, #tpu.memory_space<vmem>>, vector<1x32x32xf32>
    %209 = vector.shape_cast %208 : vector<1x32x32xf32> to vector<32x32xf32>
    %cst_95 = arith.constant dense<0.000000e+00> : vector<16x32xf32>
    %210 = tpu.matmul %204, %209, %cst_95 {dimension_numbers = #tpu.dot_dimension_numbers<[1], [0], [0], [1], [0, 0, 1, 1], [], []>} : vector<16x32xf32>, vector<32x32xf32>, vector<16x32xf32> -> vector<16x32xf32>
    %c1_96 = arith.constant 1 : index
    %c0_97 = arith.constant 0 : index
    %c0_98 = arith.constant 0 : index
    %211 = vector.load %arg5[%c1_96, %c0_97, %c0_98] : memref<2x32x32xf32, #tpu.memory_space<vmem>>, vector<1x32x32xf32>
    %212 = vector.shape_cast %211 : vector<1x32x32xf32> to vector<32x32xf32>
    %cst_99 = arith.constant dense<0.000000e+00> : vector<16x32xf32>
    %213 = tpu.matmul %204, %212, %cst_99 {dimension_numbers = #tpu.dot_dimension_numbers<[1], [0], [0], [1], [0, 0, 1, 1], [], []>} : vector<16x32xf32>, vector<32x32xf32>, vector<16x32xf32> -> vector<16x32xf32>
    %214 = vector.extract_strided_slice %207 {offsets = [0, 0], sizes = [16, 8], strides = [1, 1]} : vector<16x32xf32> to vector<16x8xf32>
    %215 = vector.shape_cast %214 : vector<16x8xf32> to vector<2x8x8xf32>
    %216 = vector.extract_strided_slice %210 {offsets = [0, 0], sizes = [16, 8], strides = [1, 1]} : vector<16x32xf32> to vector<16x8xf32>
    %217 = vector.shape_cast %216 : vector<16x8xf32> to vector<2x8x8xf32>
    %218 = vector.extract_strided_slice %213 {offsets = [0, 0], sizes = [16, 8], strides = [1, 1]} : vector<16x32xf32> to vector<16x8xf32>
    %219 = vector.shape_cast %218 : vector<16x8xf32> to vector<2x8x8xf32>
    "tpu.trace_start"() <{level = 10 : i32, message = "bnd,bmd->bnm"}> : () -> ()
    %cst_100 = arith.constant dense<0.000000e+00> : vector<2x8x8xf32>
    %220 = tpu.matmul %215, %217, %cst_100 {dimension_numbers = #tpu.dot_dimension_numbers<[2], [2], [1], [1], [0, 0, 0, 1, 1, 1], [0], [0]>} : vector<2x8x8xf32>, vector<2x8x8xf32>, vector<2x8x8xf32> -> vector<2x8x8xf32>
    "tpu.trace_stop"() : () -> ()
    %cst_101 = arith.constant 0.353553385 : f32
    %221 = vector.broadcast %cst_101 : f32 to vector<2x8x8xf32>
    %222 = arith.mulf %220, %221 : vector<2x8x8xf32>
    %cst_102 = arith.constant dense<0xFF800000> : vector<2x8xf32>
    %223 = vector.multi_reduction <maximumf>, %222, %cst_102 [2] : vector<2x8x8xf32> to vector<2x8xf32>
    %224 = vector.shape_cast %223 : vector<2x8xf32> to vector<2x8x1xf32>
    %225 = vector.broadcast %224 : vector<2x8x1xf32> to vector<2x8x8xf32>
    %226 = arith.subf %222, %225 : vector<2x8x8xf32>
    %227 = math.exp %226 : vector<2x8x8xf32>
    %cst_103 = arith.constant dense<0.000000e+00> : vector<2x8xf32>
    %228 = vector.multi_reduction <add>, %227, %cst_103 [2] : vector<2x8x8xf32> to vector<2x8xf32>
    %229 = vector.shape_cast %228 : vector<2x8xf32> to vector<2x8x1xf32>
    %230 = tpu.reciprocal %229 {approx = true} : vector<2x8x1xf32> -> vector<2x8x1xf32>
    %231 = vector.broadcast %230 : vector<2x8x1xf32> to vector<2x8x8xf32>
    %232 = arith.mulf %227, %231 : vector<2x8x8xf32>
    "tpu.trace_start"() <{level = 10 : i32, message = "bnm,bmd->bnd"}> : () -> ()
    %cst_104 = arith.constant dense<0.000000e+00> : vector<2x8x8xf32>
    %233 = tpu.matmul %232, %219, %cst_104 {dimension_numbers = #tpu.dot_dimension_numbers<[2], [1], [1], [2], [0, 0, 0, 1, 1, 2], [0], [0]>} : vector<2x8x8xf32>, vector<2x8x8xf32>, vector<2x8x8xf32> -> vector<2x8x8xf32>
    "tpu.trace_stop"() : () -> ()
    %234 = vector.shape_cast %233 : vector<2x8x8xf32> to vector<16x8xf32>
    %235 = vector.extract_strided_slice %207 {offsets = [0, 8], sizes = [16, 8], strides = [1, 1]} : vector<16x32xf32> to vector<16x8xf32>
    %236 = vector.shape_cast %235 : vector<16x8xf32> to vector<2x8x8xf32>
    %237 = vector.extract_strided_slice %210 {offsets = [0, 8], sizes = [16, 8], strides = [1, 1]} : vector<16x32xf32> to vector<16x8xf32>
    %238 = vector.shape_cast %237 : vector<16x8xf32> to vector<2x8x8xf32>
    %239 = vector.extract_strided_slice %213 {offsets = [0, 8], sizes = [16, 8], strides = [1, 1]} : vector<16x32xf32> to vector<16x8xf32>
    %240 = vector.shape_cast %239 : vector<16x8xf32> to vector<2x8x8xf32>
    "tpu.trace_start"() <{level = 10 : i32, message = "bnd,bmd->bnm"}> : () -> ()
    %cst_105 = arith.constant dense<0.000000e+00> : vector<2x8x8xf32>
    %241 = tpu.matmul %236, %238, %cst_105 {dimension_numbers = #tpu.dot_dimension_numbers<[2], [2], [1], [1], [0, 0, 0, 1, 1, 1], [0], [0]>} : vector<2x8x8xf32>, vector<2x8x8xf32>, vector<2x8x8xf32> -> vector<2x8x8xf32>
    "tpu.trace_stop"() : () -> ()
    %cst_106 = arith.constant 0.353553385 : f32
    %242 = vector.broadcast %cst_106 : f32 to vector<2x8x8xf32>
    %243 = arith.mulf %241, %242 : vector<2x8x8xf32>
    %cst_107 = arith.constant dense<0xFF800000> : vector<2x8xf32>
    %244 = vector.multi_reduction <maximumf>, %243, %cst_107 [2] : vector<2x8x8xf32> to vector<2x8xf32>
    %245 = vector.shape_cast %244 : vector<2x8xf32> to vector<2x8x1xf32>
    %246 = vector.broadcast %245 : vector<2x8x1xf32> to vector<2x8x8xf32>
    %247 = arith.subf %243, %246 : vector<2x8x8xf32>
    %248 = math.exp %247 : vector<2x8x8xf32>
    %cst_108 = arith.constant dense<0.000000e+00> : vector<2x8xf32>
    %249 = vector.multi_reduction <add>, %248, %cst_108 [2] : vector<2x8x8xf32> to vector<2x8xf32>
    %250 = vector.shape_cast %249 : vector<2x8xf32> to vector<2x8x1xf32>
    %251 = tpu.reciprocal %250 {approx = true} : vector<2x8x1xf32> -> vector<2x8x1xf32>
    %252 = vector.broadcast %251 : vector<2x8x1xf32> to vector<2x8x8xf32>
    %253 = arith.mulf %248, %252 : vector<2x8x8xf32>
    "tpu.trace_start"() <{level = 10 : i32, message = "bnm,bmd->bnd"}> : () -> ()
    %cst_109 = arith.constant dense<0.000000e+00> : vector<2x8x8xf32>
    %254 = tpu.matmul %253, %240, %cst_109 {dimension_numbers = #tpu.dot_dimension_numbers<[2], [1], [1], [2], [0, 0, 0, 1, 1, 2], [0], [0]>} : vector<2x8x8xf32>, vector<2x8x8xf32>, vector<2x8x8xf32> -> vector<2x8x8xf32>
    "tpu.trace_stop"() : () -> ()
    %255 = vector.shape_cast %254 : vector<2x8x8xf32> to vector<16x8xf32>
    %256 = vector.extract_strided_slice %207 {offsets = [0, 16], sizes = [16, 8], strides = [1, 1]} : vector<16x32xf32> to vector<16x8xf32>
    %257 = vector.shape_cast %256 : vector<16x8xf32> to vector<2x8x8xf32>
    %258 = vector.extract_strided_slice %210 {offsets = [0, 16], sizes = [16, 8], strides = [1, 1]} : vector<16x32xf32> to vector<16x8xf32>
    %259 = vector.shape_cast %258 : vector<16x8xf32> to vector<2x8x8xf32>
    %260 = vector.extract_strided_slice %213 {offsets = [0, 16], sizes = [16, 8], strides = [1, 1]} : vector<16x32xf32> to vector<16x8xf32>
    %261 = vector.shape_cast %260 : vector<16x8xf32> to vector<2x8x8xf32>
    "tpu.trace_start"() <{level = 10 : i32, message = "bnd,bmd->bnm"}> : () -> ()
    %cst_110 = arith.constant dense<0.000000e+00> : vector<2x8x8xf32>
    %262 = tpu.matmul %257, %259, %cst_110 {dimension_numbers = #tpu.dot_dimension_numbers<[2], [2], [1], [1], [0, 0, 0, 1, 1, 1], [0], [0]>} : vector<2x8x8xf32>, vector<2x8x8xf32>, vector<2x8x8xf32> -> vector<2x8x8xf32>
    "tpu.trace_stop"() : () -> ()
    %cst_111 = arith.constant 0.353553385 : f32
    %263 = vector.broadcast %cst_111 : f32 to vector<2x8x8xf32>
    %264 = arith.mulf %262, %263 : vector<2x8x8xf32>
    %cst_112 = arith.constant dense<0xFF800000> : vector<2x8xf32>
    %265 = vector.multi_reduction <maximumf>, %264, %cst_112 [2] : vector<2x8x8xf32> to vector<2x8xf32>
    %266 = vector.shape_cast %265 : vector<2x8xf32> to vector<2x8x1xf32>
    %267 = vector.broadcast %266 : vector<2x8x1xf32> to vector<2x8x8xf32>
    %268 = arith.subf %264, %267 : vector<2x8x8xf32>
    %269 = math.exp %268 : vector<2x8x8xf32>
    %cst_113 = arith.constant dense<0.000000e+00> : vector<2x8xf32>
    %270 = vector.multi_reduction <add>, %269, %cst_113 [2] : vector<2x8x8xf32> to vector<2x8xf32>
    %271 = vector.shape_cast %270 : vector<2x8xf32> to vector<2x8x1xf32>
    %272 = tpu.reciprocal %271 {approx = true} : vector<2x8x1xf32> -> vector<2x8x1xf32>
    %273 = vector.broadcast %272 : vector<2x8x1xf32> to vector<2x8x8xf32>
    %274 = arith.mulf %269, %273 : vector<2x8x8xf32>
    "tpu.trace_start"() <{level = 10 : i32, message = "bnm,bmd->bnd"}> : () -> ()
    %cst_114 = arith.constant dense<0.000000e+00> : vector<2x8x8xf32>
    %275 = tpu.matmul %274, %261, %cst_114 {dimension_numbers = #tpu.dot_dimension_numbers<[2], [1], [1], [2], [0, 0, 0, 1, 1, 2], [0], [0]>} : vector<2x8x8xf32>, vector<2x8x8xf32>, vector<2x8x8xf32> -> vector<2x8x8xf32>
    "tpu.trace_stop"() : () -> ()
    %276 = vector.shape_cast %275 : vector<2x8x8xf32> to vector<16x8xf32>
    %277 = vector.extract_strided_slice %207 {offsets = [0, 24], sizes = [16, 8], strides = [1, 1]} : vector<16x32xf32> to vector<16x8xf32>
    %278 = vector.shape_cast %277 : vector<16x8xf32> to vector<2x8x8xf32>
    %279 = vector.extract_strided_slice %210 {offsets = [0, 24], sizes = [16, 8], strides = [1, 1]} : vector<16x32xf32> to vector<16x8xf32>
    %280 = vector.shape_cast %279 : vector<16x8xf32> to vector<2x8x8xf32>
    %281 = vector.extract_strided_slice %213 {offsets = [0, 24], sizes = [16, 8], strides = [1, 1]} : vector<16x32xf32> to vector<16x8xf32>
    %282 = vector.shape_cast %281 : vector<16x8xf32> to vector<2x8x8xf32>
    "tpu.trace_start"() <{level = 10 : i32, message = "bnd,bmd->bnm"}> : () -> ()
    %cst_115 = arith.constant dense<0.000000e+00> : vector<2x8x8xf32>
    %283 = tpu.matmul %278, %280, %cst_115 {dimension_numbers = #tpu.dot_dimension_numbers<[2], [2], [1], [1], [0, 0, 0, 1, 1, 1], [0], [0]>} : vector<2x8x8xf32>, vector<2x8x8xf32>, vector<2x8x8xf32> -> vector<2x8x8xf32>
    "tpu.trace_stop"() : () -> ()
    %cst_116 = arith.constant 0.353553385 : f32
    %284 = vector.broadcast %cst_116 : f32 to vector<2x8x8xf32>
    %285 = arith.mulf %283, %284 : vector<2x8x8xf32>
    %cst_117 = arith.constant dense<0xFF800000> : vector<2x8xf32>
    %286 = vector.multi_reduction <maximumf>, %285, %cst_117 [2] : vector<2x8x8xf32> to vector<2x8xf32>
    %287 = vector.shape_cast %286 : vector<2x8xf32> to vector<2x8x1xf32>
    %288 = vector.broadcast %287 : vector<2x8x1xf32> to vector<2x8x8xf32>
    %289 = arith.subf %285, %288 : vector<2x8x8xf32>
    %290 = math.exp %289 : vector<2x8x8xf32>
    %cst_118 = arith.constant dense<0.000000e+00> : vector<2x8xf32>
    %291 = vector.multi_reduction <add>, %290, %cst_118 [2] : vector<2x8x8xf32> to vector<2x8xf32>
    %292 = vector.shape_cast %291 : vector<2x8xf32> to vector<2x8x1xf32>
    %293 = tpu.reciprocal %292 {approx = true} : vector<2x8x1xf32> -> vector<2x8x1xf32>
    %294 = vector.broadcast %293 : vector<2x8x1xf32> to vector<2x8x8xf32>
    %295 = arith.mulf %290, %294 : vector<2x8x8xf32>
    "tpu.trace_start"() <{level = 10 : i32, message = "bnm,bmd->bnd"}> : () -> ()
    %cst_119 = arith.constant dense<0.000000e+00> : vector<2x8x8xf32>
    %296 = tpu.matmul %295, %282, %cst_119 {dimension_numbers = #tpu.dot_dimension_numbers<[2], [1], [1], [2], [0, 0, 0, 1, 1, 2], [0], [0]>} : vector<2x8x8xf32>, vector<2x8x8xf32>, vector<2x8x8xf32> -> vector<2x8x8xf32>
    "tpu.trace_stop"() : () -> ()
    %297 = vector.shape_cast %296 : vector<2x8x8xf32> to vector<16x8xf32>
    %298 = tpu.concatenate %234, %255, %276, %297 in 1 : vector<16x8xf32>, vector<16x8xf32>, vector<16x8xf32>, vector<16x8xf32> -> vector<16x32xf32>
    %c1_120 = arith.constant 1 : index
    %c0_121 = arith.constant 0 : index
    %c0_122 = arith.constant 0 : index
    %299 = vector.load %arg6[%c1_120, %c0_121, %c0_122] : memref<2x32x32xf32, #tpu.memory_space<vmem>>, vector<1x32x32xf32>
    %300 = vector.shape_cast %299 : vector<1x32x32xf32> to vector<32x32xf32>
    %cst_123 = arith.constant dense<0.000000e+00> : vector<16x32xf32>
    %301 = tpu.matmul %298, %300, %cst_123 {dimension_numbers = #tpu.dot_dimension_numbers<[1], [0], [0], [1], [0, 0, 1, 1], [], []>} : vector<16x32xf32>, vector<32x32xf32>, vector<16x32xf32> -> vector<16x32xf32>
    %c1_124 = arith.constant 1 : index
    %c0_125 = arith.constant 0 : index
    %c0_126 = arith.constant 0 : index
    %302 = vector.load %arg7[%c1_124, %c0_125, %c0_126] : memref<2x1x32xf32, #tpu.memory_space<vmem>>, vector<1x1x32xf32>
    %303 = vector.shape_cast %302 : vector<1x1x32xf32> to vector<1x32xf32>
    %304 = vector.broadcast %303 : vector<1x32xf32> to vector<16x32xf32>
    %305 = arith.addf %301, %304 : vector<16x32xf32>
    %306 = arith.addf %305, %178 : vector<16x32xf32>
    %c1_127 = arith.constant 1 : index
    %c0_128 = arith.constant 0 : index
    %c0_129 = arith.constant 0 : index
    %307 = vector.load %arg8[%c1_127, %c0_128, %c0_129] : memref<2x1x32xf32, #tpu.memory_space<vmem>>, vector<1x1x32xf32>
    %308 = vector.shape_cast %307 : vector<1x1x32xf32> to vector<1x32xf32>
    %c1_130 = arith.constant 1 : index
    %c0_131 = arith.constant 0 : index
    %c0_132 = arith.constant 0 : index
    %309 = vector.load %arg9[%c1_130, %c0_131, %c0_132] : memref<2x1x32xf32, #tpu.memory_space<vmem>>, vector<1x1x32xf32>
    %310 = vector.shape_cast %309 : vector<1x1x32xf32> to vector<1x32xf32>
    %cst_133 = arith.constant dense<0.000000e+00> : vector<16xf32>
    %311 = vector.multi_reduction <add>, %306, %cst_133 [1] : vector<16x32xf32> to vector<16xf32>
    %312 = vector.shape_cast %311 : vector<16xf32> to vector<16x1xf32>
    %cst_134 = arith.constant 3.200000e+01 : f32
    %313 = vector.broadcast %cst_134 : f32 to vector<16x1xf32>
    %314 = arith.divf %312, %313 : vector<16x1xf32>
    %315 = vector.broadcast %314 : vector<16x1xf32> to vector<16x32xf32>
    %316 = arith.subf %306, %315 : vector<16x32xf32>
    %317 = arith.mulf %316, %316 : vector<16x32xf32>
    %cst_135 = arith.constant dense<0.000000e+00> : vector<16xf32>
    %318 = vector.multi_reduction <add>, %317, %cst_135 [1] : vector<16x32xf32> to vector<16xf32>
    %319 = vector.shape_cast %318 : vector<16xf32> to vector<16x1xf32>
    %cst_136 = arith.constant 3.200000e+01 : f32
    %320 = vector.broadcast %cst_136 : f32 to vector<16x1xf32>
    %321 = arith.divf %319, %320 : vector<16x1xf32>
    %322 = vector.broadcast %314 : vector<16x1xf32> to vector<16x32xf32>
    %323 = arith.subf %306, %322 : vector<16x32xf32>
    %cst_137 = arith.constant 9.99999974E-6 : f32
    %324 = vector.broadcast %cst_137 : f32 to vector<16x1xf32>
    %325 = arith.addf %321, %324 : vector<16x1xf32>
    %326 = math.rsqrt %325 : vector<16x1xf32>
    %327 = vector.broadcast %326 : vector<16x1xf32> to vector<16x32xf32>
    %328 = arith.mulf %323, %327 : vector<16x32xf32>
    %329 = vector.broadcast %308 : vector<1x32xf32> to vector<16x32xf32>
    %330 = arith.mulf %328, %329 : vector<16x32xf32>
    %331 = vector.broadcast %310 : vector<1x32xf32> to vector<16x32xf32>
    %332 = arith.addf %330, %331 : vector<16x32xf32>
    %c1_138 = arith.constant 1 : index
    %c0_139 = arith.constant 0 : index
    %c0_140 = arith.constant 0 : index
    %333 = vector.load %arg10[%c1_138, %c0_139, %c0_140] : memref<2x32x64xf32, #tpu.memory_space<vmem>>, vector<1x32x64xf32>
    %334 = vector.shape_cast %333 : vector<1x32x64xf32> to vector<32x64xf32>
    %cst_141 = arith.constant dense<0.000000e+00> : vector<16x64xf32>
    %335 = tpu.matmul %332, %334, %cst_141 {dimension_numbers = #tpu.dot_dimension_numbers<[1], [0], [0], [1], [0, 0, 1, 1], [], []>} : vector<16x32xf32>, vector<32x64xf32>, vector<16x64xf32> -> vector<16x64xf32>
    %c1_142 = arith.constant 1 : index
    %c0_143 = arith.constant 0 : index
    %c0_144 = arith.constant 0 : index
    %336 = vector.load %arg11[%c1_142, %c0_143, %c0_144] : memref<2x1x64xf32, #tpu.memory_space<vmem>>, vector<1x1x64xf32>
    %337 = vector.shape_cast %336 : vector<1x1x64xf32> to vector<1x64xf32>
    %338 = vector.broadcast %337 : vector<1x64xf32> to vector<16x64xf32>
    %339 = arith.addf %335, %338 : vector<16x64xf32>
    %cst_145 = arith.constant 5.000000e-01 : f32
    %340 = vector.broadcast %cst_145 : f32 to vector<16x64xf32>
    %341 = arith.mulf %340, %339 : vector<16x64xf32>
    %cst_146 = arith.constant 2.000000e+00 : f32
    %342 = math.sqrt %cst_146 : f32
    %343 = vector.broadcast %342 : f32 to vector<16x64xf32>
    %344 = arith.divf %339, %343 : vector<16x64xf32>
    %345 = math.erf %344 : vector<16x64xf32>
    %cst_147 = arith.constant 1.000000e+00 : f32
    %346 = vector.broadcast %cst_147 : f32 to vector<16x64xf32>
    %347 = arith.addf %346, %345 : vector<16x64xf32>
    %348 = arith.mulf %341, %347 : vector<16x64xf32>
    %c1_148 = arith.constant 1 : index
    %c0_149 = arith.constant 0 : index
    %c0_150 = arith.constant 0 : index
    %349 = vector.load %arg12[%c1_148, %c0_149, %c0_150] : memref<2x64x32xf32, #tpu.memory_space<vmem>>, vector<1x64x32xf32>
    %350 = vector.shape_cast %349 : vector<1x64x32xf32> to vector<64x32xf32>
    %cst_151 = arith.constant dense<0.000000e+00> : vector<16x32xf32>
    %351 = tpu.matmul %348, %350, %cst_151 {dimension_numbers = #tpu.dot_dimension_numbers<[1], [0], [0], [1], [0, 0, 1, 1], [], []>} : vector<16x64xf32>, vector<64x32xf32>, vector<16x32xf32> -> vector<16x32xf32>
    %c1_152 = arith.constant 1 : index
    %c0_153 = arith.constant 0 : index
    %c0_154 = arith.constant 0 : index
    %352 = vector.load %arg13[%c1_152, %c0_153, %c0_154] : memref<2x1x32xf32, #tpu.memory_space<vmem>>, vector<1x1x32xf32>
    %353 = vector.shape_cast %352 : vector<1x1x32xf32> to vector<1x32xf32>
    %354 = vector.broadcast %353 : vector<1x32xf32> to vector<16x32xf32>
    %355 = arith.addf %351, %354 : vector<16x32xf32>
    %356 = arith.addf %355, %306 : vector<16x32xf32>
    %c0_155 = arith.constant 0 : index
    %c0_156 = arith.constant 0 : index
    %357 = vector.load %arg14[%c0_155, %c0_156] : memref<16x32xf32, #tpu.memory_space<vmem>>, vector<16x32xf32>
    tpu.vector_store %arg14[%c0_155, %c0_156], %356 {strides = array<i32>} : memref<16x32xf32, #tpu.memory_space<vmem>>, vector<16x32xf32>,
    return
  }
}

</mosaic_0001>

<llo_original>
// kernel: transformer_forward.1
$region0: #{transformer_forward.1}
  #allocation0 [shape = 'u32[]', space=smem, size = 0x4, offset = 0x4, fixed_abs, tag = 'smem constant byte address 0x4 - core index']
  #allocation1 [shape = 'u32[144,128]{1,0:T(1,128)}', space=vmem, size = 0x12000, scoped, tag = 'internal scratch']
  %s0 = inlined_call_operand.hbm [shape: f32[16,32], index: 0, kind: input, shape index: {}]
  %s1 = inlined_call_operand.vmem [shape: f32[2,1,32], index: 1, kind: input, shape index: {}]
  %s2 = inlined_call_operand.hbm [shape: f32[2,1,32], index: 2, kind: input, shape index: {}]
  %s3 = inlined_call_operand.vmem [shape: f32[2,32,32], index: 3, kind: input, shape index: {}]
  %s4 = inlined_call_operand.vmem [shape: f32[2,32,32], index: 4, kind: input, shape index: {}]
  %s5 = inlined_call_operand.vmem [shape: f32[2,32,32], index: 5, kind: input, shape index: {}]
  %s6 = inlined_call_operand.hbm [shape: f32[2,32,32], index: 6, kind: input, shape index: {}]
  %s7 = inlined_call_operand.vmem [shape: f32[2,1,32], index: 7, kind: input, shape index: {}]
  %s8 = inlined_call_operand.vmem [shape: f32[2,1,32], index: 8, kind: input, shape index: {}]
  %s9 = inlined_call_operand.vmem [shape: f32[2,1,32], index: 9, kind: input, shape index: {}]
  %s10 = inlined_call_operand.hbm [shape: f32[2,32,64], index: 10, kind: input, shape index: {}]
  %s11 = inlined_call_operand.hbm [shape: f32[2,1,64], index: 11, kind: input, shape index: {}]
  %s12 = inlined_call_operand.vmem [shape: f32[2,64,32], index: 12, kind: input, shape index: {}]
  %s13 = inlined_call_operand.hbm [shape: f32[2,1,32], index: 13, kind: input, shape index: {}]
  %s14 = inlined_call_operand.hbm [shape: f32[16,32], index: 14, kind: output, shape index: {}]
  %s15 = sld [smem:[#allocation0]]
  $region90: #{transformer_forward.1} parent=0
    _
  %s17 = ssub.s32 1, %s15
  %s18 = scalar_select 0, %s17, %s15
  $region1: #{transformer_forward.1} parent=0
    #allocation2 [shape = 'u8[8192]{0}', space=vmem, size = 0x2000, scoped, tag = 'input window, operand 0, single buffered']
    #allocation3 [shape = 's32[1]{0}', space=sflag, size = 0x4, scoped, tag = 'scoped memory for transformer_forward.1']
    #allocation4 [shape = 's32[1]{0}', space=sflag, size = 0x4, scoped, tag = 'scoped memory for transformer_forward.1']
    #allocation5 [shape = 'u8[1024]{0}', space=vmem, size = 0x400, scoped, tag = 'input window, operand 2, single buffered']
    #allocation6 [shape = 's32[1]{0}', space=sflag, size = 0x4, scoped, tag = 'scoped memory for transformer_forward.1']
    #allocation7 [shape = 'u8[32768]{0}', space=vmem, size = 0x8000, scoped, tag = 'input window, operand 6, single buffered']
    #allocation8 [shape = 'u8[32768]{0}', space=vmem, size = 0x8000, scoped, tag = 'input window, operand 10, single buffered']
    #allocation9 [shape = 's32[1]{0}', space=sflag, size = 0x4, scoped, tag = 'scoped memory for transformer_forward.1']
    #allocation10 [shape = 'u8[1024]{0}', space=vmem, size = 0x400, scoped, tag = 'input window, operand 11, single buffered']
    #allocation11 [shape = 'u8[1024]{0}', space=vmem, size = 0x400, scoped, tag = 'input window, operand 13, single buffered']
    #allocation12 [shape = 's32[1]{0}', space=sflag, size = 0x4, scoped, tag = 'scoped memory for transformer_forward.1']
    #allocation13 [shape = 'u8[8192]{0}', space=vmem, size = 0x2000, scoped, tag = 'output window, operand 0, single buffered']
    %19 = vsyncpa [#allocation3], 0
    %20 = vsyncpa [#allocation6], 0
    %21 = vsyncpa [#allocation9], 0
    %22 = vsyncpa [#allocation12], 0
    %23 = vsyncpa [#allocation4], 0
    // Predicated region
    $region2: #{transformer_forward.1} parent=1 // pred_check
      _
    $region3: #{transformer_forward.1} parent=1 // pred_check_branch
      %25 = sbr.rel (0) target = $region5
    $region4: #{transformer_forward.1} parent=1 // pred_region
      %s27 = ssub.s32 256, 256
      %28 = vsyncadd [#allocation3], %s27
      %s29 = sshll.u32 [#allocation2], 4
      %s30 = int_to_ptr.vmem [resolvable:$true] %s29
      %35 = dma.hbm_to_vmem [thread:$0]  %s0, 256, %s30, [#allocation3], 128, 128, 8
    $region5: #{transformer_forward.1} parent=1 // pred_fallthru
      _
    // Predicated region
    $region6: #{transformer_forward.1} parent=1 // pred_check
      _
    $region7: #{transformer_forward.1} parent=1 // pred_check_branch
      %37 = sbr.rel (0) target = $region9
    $region8: #{transformer_forward.1} parent=1 // pred_region
      _
    $region9: #{transformer_forward.1} parent=1 // pred_fallthru
      _
    // Predicated region
    $region10: #{transformer_forward.1} parent=1 // pred_check
      _
    $region11: #{transformer_forward.1} parent=1 // pred_check_branch
      %39 = sbr.rel (0) target = $region13
    $region12: #{transformer_forward.1} parent=1 // pred_region
      %s41 = ssub.s32 32, 32
      %42 = vsyncadd [#allocation6], %s41
      %s43 = sshll.u32 [#allocation5], 4
      %s44 = int_to_ptr.vmem [resolvable:$true] %s43
      %49 = dma.hbm_to_vmem [thread:$0]  %s2, 32, %s44, [#allocation6], 16, 16, 1
    $region13: #{transformer_forward.1} parent=1 // pred_fallthru
      _
    // Predicated region
    $region14: #{transformer_forward.1} parent=1 // pred_check
      _
    $region15: #{transformer_forward.1} parent=1 // pred_check_branch
      %51 = sbr.rel (0) target = $region17
    $region16: #{transformer_forward.1} parent=1 // pred_region
      _
    $region17: #{transformer_forward.1} parent=1 // pred_fallthru
      _
    // Predicated region
    $region18: #{transformer_forward.1} parent=1 // pred_check
      _
    $region19: #{transformer_forward.1} parent=1 // pred_check_branch
      %53 = sbr.rel (0) target = $region21
    $region20: #{transformer_forward.1} parent=1 // pred_region
      _
    $region21: #{transformer_forward.1} parent=1 // pred_fallthru
      _
    // Predicated region
    $region22: #{transformer_forward.1} parent=1 // pred_check
      _
    $region23: #{transformer_forward.1} parent=1 // pred_check_branch
      %55 = sbr.rel (0) target = $region25
    $region24: #{transformer_forward.1} parent=1 // pred_region
      _
    $region25: #{transformer_forward.1} parent=1 // pred_fallthru
      _
    // Predicated region
    $region26: #{transformer_forward.1} parent=1 // pred_check
      _
    $region27: #{transformer_forward.1} parent=1 // pred_check_branch
      %57 = sbr.rel (0) target = $region29
    $region28: #{transformer_forward.1} parent=1 // pred_region
      %s59 = ssub.s32 1024, 1024
      %60 = vsyncadd [#allocation6], %s59
      %s61 = sshll.u32 [#allocation7], 4
      %s62 = int_to_ptr.vmem [resolvable:$true] %s61
      %67 = dma.hbm_to_vmem [thread:$0]  %s6, 1024, %s62, [#allocation6], 128, 128, 8
    $region29: #{transformer_forward.1} parent=1 // pred_fallthru
      _
    // Predicated region
    $region30: #{transformer_forward.1} parent=1 // pred_check
      _
    $region31: #{transformer_forward.1} parent=1 // pred_check_branch
      %69 = sbr.rel (0) target = $region33
    $region32: #{transformer_forward.1} parent=1 // pred_region
      _
    $region33: #{transformer_forward.1} parent=1 // pred_fallthru
      _
    // Predicated region
    $region34: #{transformer_forward.1} parent=1 // pred_check
      _
    $region35: #{transformer_forward.1} parent=1 // pred_check_branch
      %71 = sbr.rel (0) target = $region37
    $region36: #{transformer_forward.1} parent=1 // pred_region
      _
    $region37: #{transformer_forward.1} parent=1 // pred_fallthru
      _
    // Predicated region
    $region38: #{transformer_forward.1} parent=1 // pred_check
      _
    $region39: #{transformer_forward.1} parent=1 // pred_check_branch
      %73 = sbr.rel (0) target = $region41
    $region40: #{transformer_forward.1} parent=1 // pred_region
      _
    $region41: #{transformer_forward.1} parent=1 // pred_fallthru
      _
    // Predicated region
    $region42: #{transformer_forward.1} parent=1 // pred_check
      _
    $region43: #{transformer_forward.1} parent=1 // pred_check_branch
      %75 = sbr.rel (0) target = $region45
    $region44: #{transformer_forward.1} parent=1 // pred_region
      %s77 = ssub.s32 1024, 1024
      %78 = vsyncadd [#allocation9], %s77
      %s79 = sshll.u32 [#allocation8], 4
      %s80 = int_to_ptr.vmem [resolvable:$true] %s79
      %85 = dma.hbm_to_vmem [thread:$0]  %s10, 1024, %s80, [#allocation9], 128, 128, 8
    $region45: #{transformer_forward.1} parent=1 // pred_fallthru
      _
    // Predicated region
    $region46: #{transformer_forward.1} parent=1 // pred_check
      _
    $region47: #{transformer_forward.1} parent=1 // pred_check_branch
      %87 = sbr.rel (0) target = $region49
    $region48: #{transformer_forward.1} parent=1 // pred_region
      %s89 = ssub.s32 32, 32
      %90 = vsyncadd [#allocation9], %s89
      %s91 = sshll.u32 [#allocation10], 4
      %s92 = int_to_ptr.vmem [resolvable:$true] %s91
      %97 = dma.hbm_to_vmem [thread:$0]  %s11, 32, %s92, [#allocation9], 16, 16, 1
    $region49: #{transformer_forward.1} parent=1 // pred_fallthru
      _
    // Predicated region
    $region50: #{transformer_forward.1} parent=1 // pred_check
      _
    $region51: #{transformer_forward.1} parent=1 // pred_check_branch
      %99 = sbr.rel (0) target = $region53
    $region52: #{transformer_forward.1} parent=1 // pred_region
      _
    $region53: #{transformer_forward.1} parent=1 // pred_fallthru
      _
    // Predicated region
    $region54: #{transformer_forward.1} parent=1 // pred_check
      _
    $region55: #{transformer_forward.1} parent=1 // pred_check_branch
      %101 = sbr.rel (0) target = $region57
    $region56: #{transformer_forward.1} parent=1 // pred_region
      %s103 = ssub.s32 32, 32
      %104 = vsyncadd [#allocation12], %s103
      %s105 = sshll.u32 [#allocation11], 4
      %s106 = int_to_ptr.vmem [resolvable:$true] %s105
      %111 = dma.hbm_to_vmem [thread:$0]  %s13, 32, %s106, [#allocation12], 16, 16, 1
    $region57: #{transformer_forward.1} parent=1 // pred_fallthru
      _
    // Predicated region
    $region58: #{transformer_forward.1} parent=1 // pred_check
      _
    $region59: #{transformer_forward.1} parent=1 // pred_check_branch
      %113 = sbr.rel (0) target = $region61
    $region60: #{transformer_forward.1} parent=1 // pred_region
      %114 = dma.done [#allocation3], 256
    $region61: #{transformer_forward.1} parent=1 // pred_fallthru
      _
    // Predicated region
    $region62: #{transformer_forward.1} parent=1 // pred_check
      _
    $region63: #{transformer_forward.1} parent=1 // pred_check_branch
      %116 = sbr.rel (0) target = $region65
    $region64: #{transformer_forward.1} parent=1 // pred_region
      %117 = dma.done [#allocation6], 32
    $region65: #{transformer_forward.1} parent=1 // pred_fallthru
      _
    // Predicated region
    $region66: #{transformer_forward.1} parent=1 // pred_check
      _
    $region67: #{transformer_forward.1} parent=1 // pred_check_branch
      %119 = sbr.rel (0) target = $region69
    $region68: #{transformer_forward.1} parent=1 // pred_region
      %120 = dma.done [#allocation6], 1024
    $region69: #{transformer_forward.1} parent=1 // pred_fallthru
      _
    // Predicated region
    $region70: #{transformer_forward.1} parent=1 // pred_check
      _
    $region71: #{transformer_forward.1} parent=1 // pred_check_branch
      %122 = sbr.rel (0) target = $region73
    $region72: #{transformer_forward.1} parent=1 // pred_region
      %123 = dma.done [#allocation9], 1024
    $region73: #{transformer_forward.1} parent=1 // pred_fallthru
      _
    // Predicated region
    $region74: #{transformer_forward.1} parent=1 // pred_check
      _
    $region75: #{transformer_forward.1} parent=1 // pred_check_branch
      %125 = sbr.rel (0) target = $region77
    $region76: #{transformer_forward.1} parent=1 // pred_region
      %126 = dma.done [#allocation9], 32
    $region77: #{transformer_forward.1} parent=1 // pred_fallthru
      _
    // Predicated region
    $region78: #{transformer_forward.1} parent=1 // pred_check
      _
    $region79: #{transformer_forward.1} parent=1 // pred_check_branch
      %128 = sbr.rel (0) target = $region81
    $region80: #{transformer_forward.1} parent=1 // pred_region
      %129 = dma.done [#allocation12], 32
    $region81: #{transformer_forward.1} parent=1 // pred_fallthru
      _
    %v130 = vld [vmem:[#allocation2] sm:$0xff]
    %v131 = vld [vmem:[#allocation2 + $0x8] sm:$0xff]
    %v132 = vld [vmem:[%s1] sm:$0x1]
    %v133 = vld [vmem:[#allocation5] sm:$0x1]
    %vm134 = vcmask 261120
    %v135 = vsel %vm134, %v130, 0.0
    %136 = vadd.xlane.f32.xlu0 %v135
    %v137 = vpop.xlane.xlu0 %136
    %v138 = vsel %vm134, %v131, 0.0
    %139 = vadd.xlane.f32.xlu0 %v138
    %v140 = vpop.xlane.xlu0 %139
    %v141 = vrcp.pop 32.0
    %v142 = vmul.f32 %v137, %v141
    %v143 = vmul.f32 %v140, %v141
    %v144 = vsub.f32 %v130, %v142
    %v145 = vsub.f32 %v131, %v143
    %v146 = vmul.f32 %v144, %v144
    %v147 = vmul.f32 %v145, %v145
    %v148 = vsel %vm134, %v146, 0.0
    %149 = vadd.xlane.f32.xlu0 %v148
    %v150 = vpop.xlane.xlu0 %149
    %v151 = vsel %vm134, %v147, 0.0
    %152 = vadd.xlane.f32.xlu0 %v151
    %v153 = vpop.xlane.xlu0 %152
    %v154 = vmul.f32 %v150, %v141
    %v155 = vmul.f32 %v153, %v141
    %v156 = vadd.f32 %v154, 1e-05
    %v157 = vadd.f32 %v155, 1e-05
    %v158 = vrsqrt.pop %v156
    %v159 = vrsqrt.pop %v157
    %v160 = vmul.f32 %v144, %v158
    %v161 = vmul.f32 %v145, %v159
    %v163 = vlaneseq
    %v164 = vshrl.u32 %v163, 7
    %v165 = vsub.s32 0, %v164
    %v166 = vrot.slane %v132, %v165
    %v168 = vmul.f32 %v160, %v166
    %v169 = vmul.f32 %v161, %v166
    %v171 = vlaneseq
    %v172 = vshrl.u32 %v171, 7
    %v173 = vsub.s32 0, %v172
    %v174 = vrot.slane %v133, %v173
    %v176 = vadd.f32 %v168, %v174
    %v177 = vadd.f32 %v169, %v174
    %v178 = vld [vmem:[%s3] sm:$0xff]
    %v179 = vld [vmem:[%s3 + $0x8] sm:$0xff]
    %v180 = vld [vmem:[%s3 + $0x10] sm:$0xff]
    %v181 = vld [vmem:[%s3 + $0x18] sm:$0xff]
    %v183 = vsel %vm134, %v176, 0
    %v186 = vsel %vm134, %v177, 0
    %188 = vmatprep.subr.mxu0 0.0
    %189 = vmatpush1.msra.mxu0 0.0
    %190 = vmatprep.subr.mxu0 0.0
    %191 = vmatpush1.msra.mxu0 0.0
    %192 = vmatprep.subr.mxu0 0.0
    %193 = vmatpush1.msra.mxu0 0.0
    %194 = vmatprep.subr.mxu0 0.0
    %195 = vmatpush1.msra.mxu0 0.0
    %196 = vmatprep.subr.mxu0 0.0
    %197 = vmatpush1.msra.mxu0 0.0
    %198 = vmatprep.subr.mxu0 0.0
    %199 = vmatpush1.msra.mxu0 0.0
    %200 = vmatprep.subr.mxu0 0.0
    %201 = vmatpush1.msra.mxu0 0.0
    %202 = vmatprep.subr.mxu0 0.0
    %203 = vmatpush1.msra.mxu0 0.0
    %204 = vmatprep.subr.mxu0 0.0
    %205 = vmatpush1.msra.mxu0 0.0
    %206 = vmatprep.subr.mxu0 0.0
    %207 = vmatpush1.msra.mxu0 0.0
    %208 = vmatprep.subr.mxu0 0.0
    %209 = vmatpush1.msra.mxu0 0.0
    %210 = vmatprep.subr.mxu0 0.0
    %211 = vmatpush1.msra.mxu0 0.0
    %212 = vmatprep.subr.mxu0 0.0
    %213 = vmatpush1.msra.mxu0 %v181
    %214 = vmatprep.subr.mxu0 0.0
    %215 = vmatpush1.msra.mxu0 %v180
    %216 = vmatprep.subr.mxu0 0.0
    %217 = vmatpush1.msra.mxu0 %v179
    %218 = vmatprep.subr.mxu0 0.0
    %219 = vmatpush1.msra.mxu0 %v178
    %220 = vmatprep.subr.mxu0 0.0
    %221 = vmatpush2.msra.mxu0 0.0
    %222 = vmatprep.subr.mxu0 0.0
    %223 = vmatpush2.msra.mxu0 0.0
    %224 = vmatprep.subr.mxu0 0.0
    %225 = vmatpush2.msra.mxu0 0.0
    %226 = vmatprep.subr.mxu0 0.0
    %227 = vmatpush2.msra.mxu0 0.0
    %228 = vmatprep.subr.mxu0 0.0
    %229 = vmatpush2.msra.mxu0 0.0
    %230 = vmatprep.subr.mxu0 0.0
    %231 = vmatpush2.msra.mxu0 0.0
    %232 = vmatprep.subr.mxu0 0.0
    %233 = vmatpush2.msra.mxu0 0.0
    %234 = vmatprep.subr.mxu0 0.0
    %235 = vmatpush2.msra.mxu0 0.0
    %236 = vmatprep.subr.mxu0 0.0
    %237 = vmatpush2.msra.mxu0 0.0
    %238 = vmatprep.subr.mxu0 0.0
    %239 = vmatpush2.msra.mxu0 0.0
    %240 = vmatprep.subr.mxu0 0.0
    %241 = vmatpush2.msra.mxu0 0.0
    %242 = vmatprep.subr.mxu0 0.0
    %243 = vmatpush2.msra.mxu0 0.0
    %244 = vmatprep.subr.mxu0 0.0
    %245 = vmatpush2.msra.mxu0 0.0
    %246 = vmatprep.subr.mxu0 0.0
    %247 = vmatpush2.msra.mxu0 0.0
    %248 = vmatprep.subr.mxu0 0.0
    %249 = vmatpush2.msra.mxu0 0.0
    %250 = vmatprep.subr.mxu0 0.0
    %251 = vmatpush2.msra.mxu0 0.0
    %252 = vmatprep.mubr.f32.mxu0 0.0
    %253 = vmatmul.mubr.f32.gmra.mxu0 %v183
    %v254 = vpop.f32.mrf.mxu0
    %v255 = vadd.f32 0.0, %v254
    %v256 = vpop.f32.mrf.mxu0
    %257 = vmatprep.mubr.f32.mxu0 0.0
    %258 = vmatmul.mubr.f32.gmra.mxu0 %v186
    %v259 = vpop.f32.mrf.mxu0
    %v260 = vadd.f32 0.0, %v259
    %v261 = vpop.f32.mrf.mxu0
    %262 = vdwg.mxu0
    %v263 = vld [vmem:[%s4] sm:$0xff]
    %v264 = vld [vmem:[%s4 + $0x8] sm:$0xff]
    %v265 = vld [vmem:[%s4 + $0x10] sm:$0xff]
    %v266 = vld [vmem:[%s4 + $0x18] sm:$0xff]
    %267 = vmatprep.subr.mxu0 0.0
    %268 = vmatpush1.msra.mxu0 0.0
    %269 = vmatprep.subr.mxu0 0.0
    %270 = vmatpush1.msra.mxu0 0.0
    %271 = vmatprep.subr.mxu0 0.0
    %272 = vmatpush1.msra.mxu0 0.0
    %273 = vmatprep.subr.mxu0 0.0
    %274 = vmatpush1.msra.mxu0 0.0
    %275 = vmatprep.subr.mxu0 0.0
    %276 = vmatpush1.msra.mxu0 0.0
    %277 = vmatprep.subr.mxu0 0.0
    %278 = vmatpush1.msra.mxu0 0.0
    %279 = vmatprep.subr.mxu0 0.0
    %280 = vmatpush1.msra.mxu0 0.0
    %281 = vmatprep.subr.mxu0 0.0
    %282 = vmatpush1.msra.mxu0 0.0
    %283 = vmatprep.subr.mxu0 0.0
    %284 = vmatpush1.msra.mxu0 0.0
    %285 = vmatprep.subr.mxu0 0.0
    %286 = vmatpush1.msra.mxu0 0.0
    %287 = vmatprep.subr.mxu0 0.0
    %288 = vmatpush1.msra.mxu0 0.0
    %289 = vmatprep.subr.mxu0 0.0
    %290 = vmatpush1.msra.mxu0 0.0
    %291 = vmatprep.subr.mxu0 0.0
    %292 = vmatpush1.msra.mxu0 %v266
    %293 = vmatprep.subr.mxu0 0.0
    %294 = vmatpush1.msra.mxu0 %v265
    %295 = vmatprep.subr.mxu0 0.0
    %296 = vmatpush1.msra.mxu0 %v264
    %297 = vmatprep.subr.mxu0 0.0
    %298 = vmatpush1.msra.mxu0 %v263
    %299 = vmatprep.subr.mxu0 0.0
    %300 = vmatpush2.msra.mxu0 0.0
    %301 = vmatprep.subr.mxu0 0.0
    %302 = vmatpush2.msra.mxu0 0.0
    %303 = vmatprep.subr.mxu0 0.0
    %304 = vmatpush2.msra.mxu0 0.0
    %305 = vmatprep.subr.mxu0 0.0
    %306 = vmatpush2.msra.mxu0 0.0
    %307 = vmatprep.subr.mxu0 0.0
    %308 = vmatpush2.msra.mxu0 0.0
    %309 = vmatprep.subr.mxu0 0.0
    %310 = vmatpush2.msra.mxu0 0.0
    %311 = vmatprep.subr.mxu0 0.0
    %312 = vmatpush2.msra.mxu0 0.0
    %313 = vmatprep.subr.mxu0 0.0
    %314 = vmatpush2.msra.mxu0 0.0
    %315 = vmatprep.subr.mxu0 0.0
    %316 = vmatpush2.msra.mxu0 0.0
    %317 = vmatprep.subr.mxu0 0.0
    %318 = vmatpush2.msra.mxu0 0.0
    %319 = vmatprep.subr.mxu0 0.0
    %320 = vmatpush2.msra.mxu0 0.0
    %321 = vmatprep.subr.mxu0 0.0
    %322 = vmatpush2.msra.mxu0 0.0
    %323 = vmatprep.subr.mxu0 0.0
    %324 = vmatpush2.msra.mxu0 0.0
    %325 = vmatprep.subr.mxu0 0.0
    %326 = vmatpush2.msra.mxu0 0.0
    %327 = vmatprep.subr.mxu0 0.0
    %328 = vmatpush2.msra.mxu0 0.0
    %329 = vmatprep.subr.mxu0 0.0
    %330 = vmatpush2.msra.mxu0 0.0
    %331 = vmatprep.mubr.f32.mxu0 0.0
    %332 = vmatmul.mubr.f32.gmra.mxu0 %v183
    %v333 = vpop.f32.mrf.mxu0
    %v334 = vadd.f32 0.0, %v333
    %v335 = vpop.f32.mrf.mxu0
    %336 = vmatprep.mubr.f32.mxu0 0.0
    %337 = vmatmul.mubr.f32.gmra.mxu0 %v186
    %v338 = vpop.f32.mrf.mxu0
    %v339 = vadd.f32 0.0, %v338
    %v340 = vpop.f32.mrf.mxu0
    %341 = vdwg.mxu0
    %v342 = vld [vmem:[%s5] sm:$0xff]
    %v343 = vld [vmem:[%s5 + $0x8] sm:$0xff]
    %v344 = vld [vmem:[%s5 + $0x10] sm:$0xff]
    %v345 = vld [vmem:[%s5 + $0x18] sm:$0xff]
    %346 = vmatprep.subr.mxu0 0.0
    %347 = vmatpush1.msra.mxu0 0.0
    %348 = vmatprep.subr.mxu0 0.0
    %349 = vmatpush1.msra.mxu0 0.0
    %350 = vmatprep.subr.mxu0 0.0
    %351 = vmatpush1.msra.mxu0 0.0
    %352 = vmatprep.subr.mxu0 0.0
    %353 = vmatpush1.msra.mxu0 0.0
    %354 = vmatprep.subr.mxu0 0.0
    %355 = vmatpush1.msra.mxu0 0.0
    %356 = vmatprep.subr.mxu0 0.0
    %357 = vmatpush1.msra.mxu0 0.0
    %358 = vmatprep.subr.mxu0 0.0
    %359 = vmatpush1.msra.mxu0 0.0
    %360 = vmatprep.subr.mxu0 0.0
    %361 = vmatpush1.msra.mxu0 0.0
    %362 = vmatprep.subr.mxu0 0.0
    %363 = vmatpush1.msra.mxu0 0.0
    %364 = vmatprep.subr.mxu0 0.0
    %365 = vmatpush1.msra.mxu0 0.0
    %366 = vmatprep.subr.mxu0 0.0
    %367 = vmatpush1.msra.mxu0 0.0
    %368 = vmatprep.subr.mxu0 0.0
    %369 = vmatpush1.msra.mxu0 0.0
    %370 = vmatprep.subr.mxu0 0.0
    %371 = vmatpush1.msra.mxu0 %v345
    %372 = vmatprep.subr.mxu0 0.0
    %373 = vmatpush1.msra.mxu0 %v344
    %374 = vmatprep.subr.mxu0 0.0
    %375 = vmatpush1.msra.mxu0 %v343
    %376 = vmatprep.subr.mxu0 0.0
    %377 = vmatpush1.msra.mxu0 %v342
    %378 = vmatprep.subr.mxu0 0.0
    %379 = vmatpush2.msra.mxu0 0.0
    %380 = vmatprep.subr.mxu0 0.0
    %381 = vmatpush2.msra.mxu0 0.0
    %382 = vmatprep.subr.mxu0 0.0
    %383 = vmatpush2.msra.mxu0 0.0
    %384 = vmatprep.subr.mxu0 0.0
    %385 = vmatpush2.msra.mxu0 0.0
    %386 = vmatprep.subr.mxu0 0.0
    %387 = vmatpush2.msra.mxu0 0.0
    %388 = vmatprep.subr.mxu0 0.0
    %389 = vmatpush2.msra.mxu0 0.0
    %390 = vmatprep.subr.mxu0 0.0
    %391 = vmatpush2.msra.mxu0 0.0
    %392 = vmatprep.subr.mxu0 0.0
    %393 = vmatpush2.msra.mxu0 0.0
    %394 = vmatprep.subr.mxu0 0.0
    %395 = vmatpush2.msra.mxu0 0.0
    %396 = vmatprep.subr.mxu0 0.0
    %397 = vmatpush2.msra.mxu0 0.0
    %398 = vmatprep.subr.mxu0 0.0
    %399 = vmatpush2.msra.mxu0 0.0
    %400 = vmatprep.subr.mxu0 0.0
    %401 = vmatpush2.msra.mxu0 0.0
    %402 = vmatprep.subr.mxu0 0.0
    %403 = vmatpush2.msra.mxu0 0.0
    %404 = vmatprep.subr.mxu0 0.0
    %405 = vmatpush2.msra.mxu0 0.0
    %406 = vmatprep.subr.mxu0 0.0
    %407 = vmatpush2.msra.mxu0 0.0
    %408 = vmatprep.subr.mxu0 0.0
    %409 = vmatpush2.msra.mxu0 0.0
    %410 = vmatprep.mubr.f32.mxu0 0.0
    %411 = vmatmul.mubr.f32.gmra.mxu0 %v183
    %v412 = vpop.f32.mrf.mxu0
    %v413 = vadd.f32 0.0, %v412
    %v414 = vpop.f32.mrf.mxu0
    %415 = vmatprep.mubr.f32.mxu0 0.0
    %416 = vmatmul.mubr.f32.gmra.mxu0 %v186
    %v417 = vpop.f32.mrf.mxu0
    %v418 = vadd.f32 0.0, %v417
    %v419 = vpop.f32.mrf.mxu0
    %420 = vdwg.mxu0
    %vm421 = vcmask 64512
    %v423 = vsel %vm421, %v255, 0
    %v426 = vsel %vm421, %v334, 0
    %428 = vmatprep.subr.mxu0 0.0
    %429 = vmatpush1.xpose.msra.mxu0 0.0
    %430 = vmatprep.subr.mxu0 0.0
    %431 = vmatpush1.xpose.msra.mxu0 0.0
    %432 = vmatprep.subr.mxu0 0.0
    %433 = vmatpush1.xpose.msra.mxu0 0.0
    %434 = vmatprep.subr.mxu0 0.0
    %435 = vmatpush1.xpose.msra.mxu0 0.0
    %436 = vmatprep.subr.mxu0 0.0
    %437 = vmatpush1.xpose.msra.mxu0 0.0
    %438 = vmatprep.subr.mxu0 0.0
    %439 = vmatpush1.xpose.msra.mxu0 0.0
    %440 = vmatprep.subr.mxu0 0.0
    %441 = vmatpush1.xpose.msra.mxu0 0.0
    %442 = vmatprep.subr.mxu0 0.0
    %443 = vmatpush1.xpose.msra.mxu0 0.0
    %444 = vmatprep.subr.mxu0 0.0
    %445 = vmatpush1.xpose.msra.mxu0 0.0
    %446 = vmatprep.subr.mxu0 0.0
    %447 = vmatpush1.xpose.msra.mxu0 0.0
    %448 = vmatprep.subr.mxu0 0.0
    %449 = vmatpush1.xpose.msra.mxu0 0.0
    %450 = vmatprep.subr.mxu0 0.0
    %451 = vmatpush1.xpose.msra.mxu0 0.0
    %452 = vmatprep.subr.mxu0 0.0
    %453 = vmatpush1.xpose.msra.mxu0 0.0
    %454 = vmatprep.subr.mxu0 0.0
    %455 = vmatpush1.xpose.msra.mxu0 0.0
    %456 = vmatprep.subr.mxu0 0.0
    %457 = vmatpush1.xpose.msra.mxu0 0.0
    %458 = vmatprep.subr.mxu0 0.0
    %459 = vmatpush1.xpose.msra.mxu0 %v426
    %460 = vmatprep.subr.mxu0 0.0
    %461 = vmatpush2.xpose.msra.mxu0 0.0
    %462 = vmatprep.subr.mxu0 0.0
    %463 = vmatpush2.xpose.msra.mxu0 0.0
    %464 = vmatprep.subr.mxu0 0.0
    %465 = vmatpush2.xpose.msra.mxu0 0.0
    %466 = vmatprep.subr.mxu0 0.0
    %467 = vmatpush2.xpose.msra.mxu0 0.0
    %468 = vmatprep.subr.mxu0 0.0
    %469 = vmatpush2.xpose.msra.mxu0 0.0
    %470 = vmatprep.subr.mxu0 0.0
    %471 = vmatpush2.xpose.msra.mxu0 0.0
    %472 = vmatprep.subr.mxu0 0.0
    %473 = vmatpush2.xpose.msra.mxu0 0.0
    %474 = vmatprep.subr.mxu0 0.0
    %475 = vmatpush2.xpose.msra.mxu0 0.0
    %476 = vmatprep.subr.mxu0 0.0
    %477 = vmatpush2.xpose.msra.mxu0 0.0
    %478 = vmatprep.subr.mxu0 0.0
    %479 = vmatpush2.xpose.msra.mxu0 0.0
    %480 = vmatprep.subr.mxu0 0.0
    %481 = vmatpush2.xpose.msra.mxu0 0.0
    %482 = vmatprep.subr.mxu0 0.0
    %483 = vmatpush2.xpose.msra.mxu0 0.0
    %484 = vmatprep.subr.mxu0 0.0
    %485 = vmatpush2.xpose.msra.mxu0 0.0
    %486 = vmatprep.subr.mxu0 0.0
    %487 = vmatpush2.xpose.msra.mxu0 0.0
    %488 = vmatprep.subr.mxu0 0.0
    %489 = vmatpush2.xpose.msra.mxu0 0.0
    %490 = vmatprep.subr.mxu0 0.0
    %491 = vmatpush2.xpose.msra.mxu0 0.0
    %492 = vmatprep.mubr.f32.mxu0 0.0
    %493 = vmatmul.mubr.f32.gmra.mxu0 %v423
    %v494 = vpop.f32.mrf.mxu0
    %v495 = vadd.f32 0.0, %v494
    %v496 = vpop.f32.mrf.mxu0
    %497 = vdwg.mxu0
    %v499 = vsel %vm421, %v260, 0
    %v502 = vsel %vm421, %v339, 0
    %504 = vmatprep.subr.mxu0 0.0
    %505 = vmatpush1.xpose.msra.mxu0 0.0
    %506 = vmatprep.subr.mxu0 0.0
    %507 = vmatpush1.xpose.msra.mxu0 0.0
    %508 = vmatprep.subr.mxu0 0.0
    %509 = vmatpush1.xpose.msra.mxu0 0.0
    %510 = vmatprep.subr.mxu0 0.0
    %511 = vmatpush1.xpose.msra.mxu0 0.0
    %512 = vmatprep.subr.mxu0 0.0
    %513 = vmatpush1.xpose.msra.mxu0 0.0
    %514 = vmatprep.subr.mxu0 0.0
    %515 = vmatpush1.xpose.msra.mxu0 0.0
    %516 = vmatprep.subr.mxu0 0.0
    %517 = vmatpush1.xpose.msra.mxu0 0.0
    %518 = vmatprep.subr.mxu0 0.0
    %519 = vmatpush1.xpose.msra.mxu0 0.0
    %520 = vmatprep.subr.mxu0 0.0
    %521 = vmatpush1.xpose.msra.mxu0 0.0
    %522 = vmatprep.subr.mxu0 0.0
    %523 = vmatpush1.xpose.msra.mxu0 0.0
    %524 = vmatprep.subr.mxu0 0.0
    %525 = vmatpush1.xpose.msra.mxu0 0.0
    %526 = vmatprep.subr.mxu0 0.0
    %527 = vmatpush1.xpose.msra.mxu0 0.0
    %528 = vmatprep.subr.mxu0 0.0
    %529 = vmatpush1.xpose.msra.mxu0 0.0
    %530 = vmatprep.subr.mxu0 0.0
    %531 = vmatpush1.xpose.msra.mxu0 0.0
    %532 = vmatprep.subr.mxu0 0.0
    %533 = vmatpush1.xpose.msra.mxu0 0.0
    %534 = vmatprep.subr.mxu0 0.0
    %535 = vmatpush1.xpose.msra.mxu0 %v502
    %536 = vmatprep.subr.mxu0 0.0
    %537 = vmatpush2.xpose.msra.mxu0 0.0
    %538 = vmatprep.subr.mxu0 0.0
    %539 = vmatpush2.xpose.msra.mxu0 0.0
    %540 = vmatprep.subr.mxu0 0.0
    %541 = vmatpush2.xpose.msra.mxu0 0.0
    %542 = vmatprep.subr.mxu0 0.0
    %543 = vmatpush2.xpose.msra.mxu0 0.0
    %544 = vmatprep.subr.mxu0 0.0
    %545 = vmatpush2.xpose.msra.mxu0 0.0
    %546 = vmatprep.subr.mxu0 0.0
    %547 = vmatpush2.xpose.msra.mxu0 0.0
    %548 = vmatprep.subr.mxu0 0.0
    %549 = vmatpush2.xpose.msra.mxu0 0.0
    %550 = vmatprep.subr.mxu0 0.0
    %551 = vmatpush2.xpose.msra.mxu0 0.0
    %552 = vmatprep.subr.mxu0 0.0
    %553 = vmatpush2.xpose.msra.mxu0 0.0
    %554 = vmatprep.subr.mxu0 0.0
    %555 = vmatpush2.xpose.msra.mxu0 0.0
    %556 = vmatprep.subr.mxu0 0.0
    %557 = vmatpush2.xpose.msra.mxu0 0.0
    %558 = vmatprep.subr.mxu0 0.0
    %559 = vmatpush2.xpose.msra.mxu0 0.0
    %560 = vmatprep.subr.mxu0 0.0
    %561 = vmatpush2.xpose.msra.mxu0 0.0
    %562 = vmatprep.subr.mxu0 0.0
    %563 = vmatpush2.xpose.msra.mxu0 0.0
    %564 = vmatprep.subr.mxu0 0.0
    %565 = vmatpush2.xpose.msra.mxu0 0.0
    %566 = vmatprep.subr.mxu0 0.0
    %567 = vmatpush2.xpose.msra.mxu0 0.0
    %568 = vmatprep.mubr.f32.mxu0 0.0
    %569 = vmatmul.mubr.f32.gmra.mxu0 %v499
    %v570 = vpop.f32.mrf.mxu0
    %v571 = vadd.f32 0.0, %v570
    %v572 = vpop.f32.mrf.mxu0
    %573 = vdwg.mxu0
    %v574 = vmul.f32 %v495, 0.35355338
    %v575 = vmul.f32 %v571, 0.35355338
    %v576 = vsel %vm421, %v574, -inf
    %577 = vmax.xlane.f32.xlu0 %v576
    %v578 = vpop.xlane.xlu0 %577
    %v579 = vsel %vm421, %v575, -inf
    %580 = vmax.xlane.f32.xlu0 %v579
    %v581 = vpop.xlane.xlu0 %580
    %v582 = vsub.f32 %v574, %v578
    %v583 = vsub.f32 %v575, %v581
    %v584 = vmul.f32 %v582, 1.442695
    %v585 = vpow.pop %v584
    %v586 = vmul.f32 %v583, 1.442695
    %v587 = vpow.pop %v586
    %v588 = vsel %vm421, %v585, 0.0
    %589 = vadd.xlane.f32.xlu0 %v588
    %v590 = vpop.xlane.xlu0 %589
    %v591 = vsel %vm421, %v587, 0.0
    %592 = vadd.xlane.f32.xlu0 %v591
    %v593 = vpop.xlane.xlu0 %592
    %v594 = vrcp.pop %v590
    %v595 = vrcp.pop %v593
    %v596 = vmul.f32 %v585, %v594
    %v597 = vmul.f32 %v587, %v595
    %v599 = vsel %vm421, %v596, 0
    %601 = vmatprep.subr.mxu0 0.0
    %602 = vmatpush1.msra.mxu0 0.0
    %603 = vmatprep.subr.mxu0 0.0
    %604 = vmatpush1.msra.mxu0 0.0
    %605 = vmatprep.subr.mxu0 0.0
    %606 = vmatpush1.msra.mxu0 0.0
    %607 = vmatprep.subr.mxu0 0.0
    %608 = vmatpush1.msra.mxu0 0.0
    %609 = vmatprep.subr.mxu0 0.0
    %610 = vmatpush1.msra.mxu0 0.0
    %611 = vmatprep.subr.mxu0 0.0
    %612 = vmatpush1.msra.mxu0 0.0
    %613 = vmatprep.subr.mxu0 0.0
    %614 = vmatpush1.msra.mxu0 0.0
    %615 = vmatprep.subr.mxu0 0.0
    %616 = vmatpush1.msra.mxu0 0.0
    %617 = vmatprep.subr.mxu0 0.0
    %618 = vmatpush1.msra.mxu0 0.0
    %619 = vmatprep.subr.mxu0 0.0
    %620 = vmatpush1.msra.mxu0 0.0
    %621 = vmatprep.subr.mxu0 0.0
    %622 = vmatpush1.msra.mxu0 0.0
    %623 = vmatprep.subr.mxu0 0.0
    %624 = vmatpush1.msra.mxu0 0.0
    %625 = vmatprep.subr.mxu0 0.0
    %626 = vmatpush1.msra.mxu0 0.0
    %627 = vmatprep.subr.mxu0 0.0
    %628 = vmatpush1.msra.mxu0 0.0
    %629 = vmatprep.subr.mxu0 0.0
    %630 = vmatpush1.msra.mxu0 0.0
    %631 = vmatprep.subr.mxu0 0.0
    %632 = vmatpush1.msra.mxu0 %v413
    %633 = vmatprep.subr.mxu0 0.0
    %634 = vmatpush2.msra.mxu0 0.0
    %635 = vmatprep.subr.mxu0 0.0
    %636 = vmatpush2.msra.mxu0 0.0
    %637 = vmatprep.subr.mxu0 0.0
    %638 = vmatpush2.msra.mxu0 0.0
    %639 = vmatprep.subr.mxu0 0.0
    %640 = vmatpush2.msra.mxu0 0.0
    %641 = vmatprep.subr.mxu0 0.0
    %642 = vmatpush2.msra.mxu0 0.0
    %643 = vmatprep.subr.mxu0 0.0
    %644 = vmatpush2.msra.mxu0 0.0
    %645 = vmatprep.subr.mxu0 0.0
    %646 = vmatpush2.msra.mxu0 0.0
    %647 = vmatprep.subr.mxu0 0.0
    %648 = vmatpush2.msra.mxu0 0.0
    %649 = vmatprep.subr.mxu0 0.0
    %650 = vmatpush2.msra.mxu0 0.0
    %651 = vmatprep.subr.mxu0 0.0
    %652 = vmatpush2.msra.mxu0 0.0
    %653 = vmatprep.subr.mxu0 0.0
    %654 = vmatpush2.msra.mxu0 0.0
    %655 = vmatprep.subr.mxu0 0.0
    %656 = vmatpush2.msra.mxu0 0.0
    %657 = vmatprep.subr.mxu0 0.0
    %658 = vmatpush2.msra.mxu0 0.0
    %659 = vmatprep.subr.mxu0 0.0
    %660 = vmatpush2.msra.mxu0 0.0
    %661 = vmatprep.subr.mxu0 0.0
    %662 = vmatpush2.msra.mxu0 0.0
    %663 = vmatprep.subr.mxu0 0.0
    %664 = vmatpush2.msra.mxu0 0.0
    %665 = vmatprep.mubr.f32.mxu0 0.0
    %666 = vmatmul.mubr.f32.gmra.mxu0 %v599
    %v667 = vpop.f32.mrf.mxu0
    %v668 = vadd.f32 0.0, %v667
    %v669 = vpop.f32.mrf.mxu0
    %670 = vdwg.mxu0
    %v672 = vsel %vm421, %v597, 0
    %674 = vmatprep.subr.mxu0 0.0
    %675 = vmatpush1.msra.mxu0 0.0
    %676 = vmatprep.subr.mxu0 0.0
    %677 = vmatpush1.msra.mxu0 0.0
    %678 = vmatprep.subr.mxu0 0.0
    %679 = vmatpush1.msra.mxu0 0.0
    %680 = vmatprep.subr.mxu0 0.0
    %681 = vmatpush1.msra.mxu0 0.0
    %682 = vmatprep.subr.mxu0 0.0
    %683 = vmatpush1.msra.mxu0 0.0
    %684 = vmatprep.subr.mxu0 0.0
    %685 = vmatpush1.msra.mxu0 0.0
    %686 = vmatprep.subr.mxu0 0.0
    %687 = vmatpush1.msra.mxu0 0.0
    %688 = vmatprep.subr.mxu0 0.0
    %689 = vmatpush1.msra.mxu0 0.0
    %690 = vmatprep.subr.mxu0 0.0
    %691 = vmatpush1.msra.mxu0 0.0
    %692 = vmatprep.subr.mxu0 0.0
    %693 = vmatpush1.msra.mxu0 0.0
    %694 = vmatprep.subr.mxu0 0.0
    %695 = vmatpush1.msra.mxu0 0.0
    %696 = vmatprep.subr.mxu0 0.0
    %697 = vmatpush1.msra.mxu0 0.0
    %698 = vmatprep.subr.mxu0 0.0
    %699 = vmatpush1.msra.mxu0 0.0
    %700 = vmatprep.subr.mxu0 0.0
    %701 = vmatpush1.msra.mxu0 0.0
    %702 = vmatprep.subr.mxu0 0.0
    %703 = vmatpush1.msra.mxu0 0.0
    %704 = vmatprep.subr.mxu0 0.0
    %705 = vmatpush1.msra.mxu0 %v418
    %706 = vmatprep.subr.mxu0 0.0
    %707 = vmatpush2.msra.mxu0 0.0
    %708 = vmatprep.subr.mxu0 0.0
    %709 = vmatpush2.msra.mxu0 0.0
    %710 = vmatprep.subr.mxu0 0.0
    %711 = vmatpush2.msra.mxu0 0.0
    %712 = vmatprep.subr.mxu0 0.0
    %713 = vmatpush2.msra.mxu0 0.0
    %714 = vmatprep.subr.mxu0 0.0
    %715 = vmatpush2.msra.mxu0 0.0
    %716 = vmatprep.subr.mxu0 0.0
    %717 = vmatpush2.msra.mxu0 0.0
    %718 = vmatprep.subr.mxu0 0.0
    %719 = vmatpush2.msra.mxu0 0.0
    %720 = vmatprep.subr.mxu0 0.0
    %721 = vmatpush2.msra.mxu0 0.0
    %722 = vmatprep.subr.mxu0 0.0
    %723 = vmatpush2.msra.mxu0 0.0
    %724 = vmatprep.subr.mxu0 0.0
    %725 = vmatpush2.msra.mxu0 0.0
    %726 = vmatprep.subr.mxu0 0.0
    %727 = vmatpush2.msra.mxu0 0.0
    %728 = vmatprep.subr.mxu0 0.0
    %729 = vmatpush2.msra.mxu0 0.0
    %730 = vmatprep.subr.mxu0 0.0
    %731 = vmatpush2.msra.mxu0 0.0
    %732 = vmatprep.subr.mxu0 0.0
    %733 = vmatpush2.msra.mxu0 0.0
    %734 = vmatprep.subr.mxu0 0.0
    %735 = vmatpush2.msra.mxu0 0.0
    %736 = vmatprep.subr.mxu0 0.0
    %737 = vmatpush2.msra.mxu0 0.0
    %738 = vmatprep.mubr.f32.mxu0 0.0
    %739 = vmatmul.mubr.f32.gmra.mxu0 %v672
    %v740 = vpop.f32.mrf.mxu0
    %v741 = vadd.f32 0.0, %v740
    %v742 = vpop.f32.mrf.mxu0
    %743 = vdwg.mxu0
    %744 = vrot.lane.b32.xlu0 %v255, 120
    %v745 = vpop.permute.xlu0 %744
    %746 = vrot.lane.b32.xlu0 %v334, 120
    %v747 = vpop.permute.xlu0 %746
    %v748 = vsel %vm421, %v745, 0
    %v750 = vsel %vm421, %v747, 0
    %752 = vmatprep.subr.mxu0 0.0
    %753 = vmatpush1.xpose.msra.mxu0 0.0
    %754 = vmatprep.subr.mxu0 0.0
    %755 = vmatpush1.xpose.msra.mxu0 0.0
    %756 = vmatprep.subr.mxu0 0.0
    %757 = vmatpush1.xpose.msra.mxu0 0.0
    %758 = vmatprep.subr.mxu0 0.0
    %759 = vmatpush1.xpose.msra.mxu0 0.0
    %760 = vmatprep.subr.mxu0 0.0
    %761 = vmatpush1.xpose.msra.mxu0 0.0
    %762 = vmatprep.subr.mxu0 0.0
    %763 = vmatpush1.xpose.msra.mxu0 0.0
    %764 = vmatprep.subr.mxu0 0.0
    %765 = vmatpush1.xpose.msra.mxu0 0.0
    %766 = vmatprep.subr.mxu0 0.0
    %767 = vmatpush1.xpose.msra.mxu0 0.0
    %768 = vmatprep.subr.mxu0 0.0
    %769 = vmatpush1.xpose.msra.mxu0 0.0
    %770 = vmatprep.subr.mxu0 0.0
    %771 = vmatpush1.xpose.msra.mxu0 0.0
    %772 = vmatprep.subr.mxu0 0.0
    %773 = vmatpush1.xpose.msra.mxu0 0.0
    %774 = vmatprep.subr.mxu0 0.0
    %775 = vmatpush1.xpose.msra.mxu0 0.0
    %776 = vmatprep.subr.mxu0 0.0
    %777 = vmatpush1.xpose.msra.mxu0 0.0
    %778 = vmatprep.subr.mxu0 0.0
    %779 = vmatpush1.xpose.msra.mxu0 0.0
    %780 = vmatprep.subr.mxu0 0.0
    %781 = vmatpush1.xpose.msra.mxu0 0.0
    %782 = vmatprep.subr.mxu0 0.0
    %783 = vmatpush1.xpose.msra.mxu0 %v750
    %784 = vmatprep.subr.mxu0 0.0
    %785 = vmatpush2.xpose.msra.mxu0 0.0
    %786 = vmatprep.subr.mxu0 0.0
    %787 = vmatpush2.xpose.msra.mxu0 0.0
    %788 = vmatprep.subr.mxu0 0.0
    %789 = vmatpush2.xpose.msra.mxu0 0.0
    %790 = vmatprep.subr.mxu0 0.0
    %791 = vmatpush2.xpose.msra.mxu0 0.0
    %792 = vmatprep.subr.mxu0 0.0
    %793 = vmatpush2.xpose.msra.mxu0 0.0
    %794 = vmatprep.subr.mxu0 0.0
    %795 = vmatpush2.xpose.msra.mxu0 0.0
    %796 = vmatprep.subr.mxu0 0.0
    %797 = vmatpush2.xpose.msra.mxu0 0.0
    %798 = vmatprep.subr.mxu0 0.0
    %799 = vmatpush2.xpose.msra.mxu0 0.0
    %800 = vmatprep.subr.mxu0 0.0
    %801 = vmatpush2.xpose.msra.mxu0 0.0
    %802 = vmatprep.subr.mxu0 0.0
    %803 = vmatpush2.xpose.msra.mxu0 0.0
    %804 = vmatprep.subr.mxu0 0.0
    %805 = vmatpush2.xpose.msra.mxu0 0.0
    %806 = vmatprep.subr.mxu0 0.0
    %807 = vmatpush2.xpose.msra.mxu0 0.0
    %808 = vmatprep.subr.mxu0 0.0
    %809 = vmatpush2.xpose.msra.mxu0 0.0
    %810 = vmatprep.subr.mxu0 0.0
    %811 = vmatpush2.xpose.msra.mxu0 0.0
    %812 = vmatprep.subr.mxu0 0.0
    %813 = vmatpush2.xpose.msra.mxu0 0.0
    %814 = vmatprep.subr.mxu0 0.0
    %815 = vmatpush2.xpose.msra.mxu0 0.0
    %816 = vmatprep.mubr.f32.mxu0 0.0
    %817 = vmatmul.mubr.f32.gmra.mxu0 %v748
    %v818 = vpop.f32.mrf.mxu0
    %v819 = vadd.f32 0.0, %v818
    %v820 = vpop.f32.mrf.mxu0
    %821 = vdwg.mxu0
    %822 = vrot.lane.b32.xlu0 %v260, 120
    %v823 = vpop.permute.xlu0 %822
    %824 = vrot.lane.b32.xlu0 %v339, 120
    %v825 = vpop.permute.xlu0 %824
    %v826 = vsel %vm421, %v823, 0
    %v828 = vsel %vm421, %v825, 0
    %830 = vmatprep.subr.mxu0 0.0
    %831 = vmatpush1.xpose.msra.mxu0 0.0
    %832 = vmatprep.subr.mxu0 0.0
    %833 = vmatpush1.xpose.msra.mxu0 0.0
    %834 = vmatprep.subr.mxu0 0.0
    %835 = vmatpush1.xpose.msra.mxu0 0.0
    %836 = vmatprep.subr.mxu0 0.0
    %837 = vmatpush1.xpose.msra.mxu0 0.0
    %838 = vmatprep.subr.mxu0 0.0
    %839 = vmatpush1.xpose.msra.mxu0 0.0
    %840 = vmatprep.subr.mxu0 0.0
    %841 = vmatpush1.xpose.msra.mxu0 0.0
    %842 = vmatprep.subr.mxu0 0.0
    %843 = vmatpush1.xpose.msra.mxu0 0.0
    %844 = vmatprep.subr.mxu0 0.0
    %845 = vmatpush1.xpose.msra.mxu0 0.0
    %846 = vmatprep.subr.mxu0 0.0
    %847 = vmatpush1.xpose.msra.mxu0 0.0
    %848 = vmatprep.subr.mxu0 0.0
    %849 = vmatpush1.xpose.msra.mxu0 0.0
    %850 = vmatprep.subr.mxu0 0.0
    %851 = vmatpush1.xpose.msra.mxu0 0.0
    %852 = vmatprep.subr.mxu0 0.0
    %853 = vmatpush1.xpose.msra.mxu0 0.0
    %854 = vmatprep.subr.mxu0 0.0
    %855 = vmatpush1.xpose.msra.mxu0 0.0
    %856 = vmatprep.subr.mxu0 0.0
    %857 = vmatpush1.xpose.msra.mxu0 0.0
    %858 = vmatprep.subr.mxu0 0.0
    %859 = vmatpush1.xpose.msra.mxu0 0.0
    %860 = vmatprep.subr.mxu0 0.0
    %861 = vmatpush1.xpose.msra.mxu0 %v828
    %862 = vmatprep.subr.mxu0 0.0
    %863 = vmatpush2.xpose.msra.mxu0 0.0
    %864 = vmatprep.subr.mxu0 0.0
    %865 = vmatpush2.xpose.msra.mxu0 0.0
    %866 = vmatprep.subr.mxu0 0.0
    %867 = vmatpush2.xpose.msra.mxu0 0.0
    %868 = vmatprep.subr.mxu0 0.0
    %869 = vmatpush2.xpose.msra.mxu0 0.0
    %870 = vmatprep.subr.mxu0 0.0
    %871 = vmatpush2.xpose.msra.mxu0 0.0
    %872 = vmatprep.subr.mxu0 0.0
    %873 = vmatpush2.xpose.msra.mxu0 0.0
    %874 = vmatprep.subr.mxu0 0.0
    %875 = vmatpush2.xpose.msra.mxu0 0.0
    %876 = vmatprep.subr.mxu0 0.0
    %877 = vmatpush2.xpose.msra.mxu0 0.0
    %878 = vmatprep.subr.mxu0 0.0
    %879 = vmatpush2.xpose.msra.mxu0 0.0
    %880 = vmatprep.subr.mxu0 0.0
    %881 = vmatpush2.xpose.msra.mxu0 0.0
    %882 = vmatprep.subr.mxu0 0.0
    %883 = vmatpush2.xpose.msra.mxu0 0.0
    %884 = vmatprep.subr.mxu0 0.0
    %885 = vmatpush2.xpose.msra.mxu0 0.0
    %886 = vmatprep.subr.mxu0 0.0
    %887 = vmatpush2.xpose.msra.mxu0 0.0
    %888 = vmatprep.subr.mxu0 0.0
    %889 = vmatpush2.xpose.msra.mxu0 0.0
    %890 = vmatprep.subr.mxu0 0.0
    %891 = vmatpush2.xpose.msra.mxu0 0.0
    %892 = vmatprep.subr.mxu0 0.0
    %893 = vmatpush2.xpose.msra.mxu0 0.0
    %894 = vmatprep.mubr.f32.mxu0 0.0
    %895 = vmatmul.mubr.f32.gmra.mxu0 %v826
    %v896 = vpop.f32.mrf.mxu0
    %v897 = vadd.f32 0.0, %v896
    %v898 = vpop.f32.mrf.mxu0
    %899 = vdwg.mxu0
    %v900 = vmul.f32 %v819, 0.35355338
    %v901 = vmul.f32 %v897, 0.35355338
    %v902 = vsel %vm421, %v900, -inf
    %903 = vmax.xlane.f32.xlu0 %v902
    %v904 = vpop.xlane.xlu0 %903
    %v905 = vsel %vm421, %v901, -inf
    %906 = vmax.xlane.f32.xlu0 %v905
    %v907 = vpop.xlane.xlu0 %906
    %v908 = vsub.f32 %v900, %v904
    %v909 = vsub.f32 %v901, %v907
    %v910 = vmul.f32 %v908, 1.442695
    %v911 = vpow.pop %v910
    %v912 = vmul.f32 %v909, 1.442695
    %v913 = vpow.pop %v912
    %v914 = vsel %vm421, %v911, 0.0
    %915 = vadd.xlane.f32.xlu0 %v914
    %v916 = vpop.xlane.xlu0 %915
    %v917 = vsel %vm421, %v913, 0.0
    %918 = vadd.xlane.f32.xlu0 %v917
    %v919 = vpop.xlane.xlu0 %918
    %v920 = vrcp.pop %v916
    %v921 = vrcp.pop %v919
    %v922 = vmul.f32 %v911, %v920
    %v923 = vmul.f32 %v913, %v921
    %925 = vrot.lane.b32.xlu0 %v413, 120
    %v926 = vpop.permute.xlu0 %925
    %v929 = vsel %vm421, %v922, 0
    %931 = vmatprep.subr.mxu0 0.0
    %932 = vmatpush1.msra.mxu0 0.0
    %933 = vmatprep.subr.mxu0 0.0
    %934 = vmatpush1.msra.mxu0 0.0
    %935 = vmatprep.subr.mxu0 0.0
    %936 = vmatpush1.msra.mxu0 0.0
    %937 = vmatprep.subr.mxu0 0.0
    %938 = vmatpush1.msra.mxu0 0.0
    %939 = vmatprep.subr.mxu0 0.0
    %940 = vmatpush1.msra.mxu0 0.0
    %941 = vmatprep.subr.mxu0 0.0
    %942 = vmatpush1.msra.mxu0 0.0
    %943 = vmatprep.subr.mxu0 0.0
    %944 = vmatpush1.msra.mxu0 0.0
    %945 = vmatprep.subr.mxu0 0.0
    %946 = vmatpush1.msra.mxu0 0.0
    %947 = vmatprep.subr.mxu0 0.0
    %948 = vmatpush1.msra.mxu0 0.0
    %949 = vmatprep.subr.mxu0 0.0
    %950 = vmatpush1.msra.mxu0 0.0
    %951 = vmatprep.subr.mxu0 0.0
    %952 = vmatpush1.msra.mxu0 0.0
    %953 = vmatprep.subr.mxu0 0.0
    %954 = vmatpush1.msra.mxu0 0.0
    %955 = vmatprep.subr.mxu0 0.0
    %956 = vmatpush1.msra.mxu0 0.0
    %957 = vmatprep.subr.mxu0 0.0
    %958 = vmatpush1.msra.mxu0 0.0
    %959 = vmatprep.subr.mxu0 0.0
    %960 = vmatpush1.msra.mxu0 0.0
    %961 = vmatprep.subr.mxu0 0.0
    %962 = vmatpush1.msra.mxu0 %v926
    %963 = vmatprep.subr.mxu0 0.0
    %964 = vmatpush2.msra.mxu0 0.0
    %965 = vmatprep.subr.mxu0 0.0
    %966 = vmatpush2.msra.mxu0 0.0
    %967 = vmatprep.subr.mxu0 0.0
    %968 = vmatpush2.msra.mxu0 0.0
    %969 = vmatprep.subr.mxu0 0.0
    %970 = vmatpush2.msra.mxu0 0.0
    %971 = vmatprep.subr.mxu0 0.0
    %972 = vmatpush2.msra.mxu0 0.0
    %973 = vmatprep.subr.mxu0 0.0
    %974 = vmatpush2.msra.mxu0 0.0
    %975 = vmatprep.subr.mxu0 0.0
    %976 = vmatpush2.msra.mxu0 0.0
    %977 = vmatprep.subr.mxu0 0.0
    %978 = vmatpush2.msra.mxu0 0.0
    %979 = vmatprep.subr.mxu0 0.0
    %980 = vmatpush2.msra.mxu0 0.0
    %981 = vmatprep.subr.mxu0 0.0
    %982 = vmatpush2.msra.mxu0 0.0
    %983 = vmatprep.subr.mxu0 0.0
    %984 = vmatpush2.msra.mxu0 0.0
    %985 = vmatprep.subr.mxu0 0.0
    %986 = vmatpush2.msra.mxu0 0.0
    %987 = vmatprep.subr.mxu0 0.0
    %988 = vmatpush2.msra.mxu0 0.0
    %989 = vmatprep.subr.mxu0 0.0
    %990 = vmatpush2.msra.mxu0 0.0
    %991 = vmatprep.subr.mxu0 0.0
    %992 = vmatpush2.msra.mxu0 0.0
    %993 = vmatprep.subr.mxu0 0.0
    %994 = vmatpush2.msra.mxu0 0.0
    %995 = vmatprep.mubr.f32.mxu0 0.0
    %996 = vmatmul.mubr.f32.gmra.mxu0 %v929
    %v997 = vpop.f32.mrf.mxu0
    %v998 = vadd.f32 0.0, %v997
    %v999 = vpop.f32.mrf.mxu0
    %1000 = vdwg.mxu0
    %1002 = vrot.lane.b32.xlu0 %v418, 120
    %v1003 = vpop.permute.xlu0 %1002
    %v1006 = vsel %vm421, %v923, 0
    %1008 = vmatprep.subr.mxu0 0.0
    %1009 = vmatpush1.msra.mxu0 0.0
    %1010 = vmatprep.subr.mxu0 0.0
    %1011 = vmatpush1.msra.mxu0 0.0
    %1012 = vmatprep.subr.mxu0 0.0
    %1013 = vmatpush1.msra.mxu0 0.0
    %1014 = vmatprep.subr.mxu0 0.0
    %1015 = vmatpush1.msra.mxu0 0.0
    %1016 = vmatprep.subr.mxu0 0.0
    %1017 = vmatpush1.msra.mxu0 0.0
    %1018 = vmatprep.subr.mxu0 0.0
    %1019 = vmatpush1.msra.mxu0 0.0
    %1020 = vmatprep.subr.mxu0 0.0
    %1021 = vmatpush1.msra.mxu0 0.0
    %1022 = vmatprep.subr.mxu0 0.0
    %1023 = vmatpush1.msra.mxu0 0.0
    %1024 = vmatprep.subr.mxu0 0.0
    %1025 = vmatpush1.msra.mxu0 0.0
    %1026 = vmatprep.subr.mxu0 0.0
    %1027 = vmatpush1.msra.mxu0 0.0
    %1028 = vmatprep.subr.mxu0 0.0
    %1029 = vmatpush1.msra.mxu0 0.0
    %1030 = vmatprep.subr.mxu0 0.0
    %1031 = vmatpush1.msra.mxu0 0.0
    %1032 = vmatprep.subr.mxu0 0.0
    %1033 = vmatpush1.msra.mxu0 0.0
    %1034 = vmatprep.subr.mxu0 0.0
    %1035 = vmatpush1.msra.mxu0 0.0
    %1036 = vmatprep.subr.mxu0 0.0
    %1037 = vmatpush1.msra.mxu0 0.0
    %1038 = vmatprep.subr.mxu0 0.0
    %1039 = vmatpush1.msra.mxu0 %v1003
    %1040 = vmatprep.subr.mxu0 0.0
    %1041 = vmatpush2.msra.mxu0 0.0
    %1042 = vmatprep.subr.mxu0 0.0
    %1043 = vmatpush2.msra.mxu0 0.0
    %1044 = vmatprep.subr.mxu0 0.0
    %1045 = vmatpush2.msra.mxu0 0.0
    %1046 = vmatprep.subr.mxu0 0.0
    %1047 = vmatpush2.msra.mxu0 0.0
    %1048 = vmatprep.subr.mxu0 0.0
    %1049 = vmatpush2.msra.mxu0 0.0
    %1050 = vmatprep.subr.mxu0 0.0
    %1051 = vmatpush2.msra.mxu0 0.0
    %1052 = vmatprep.subr.mxu0 0.0
    %1053 = vmatpush2.msra.mxu0 0.0
    %1054 = vmatprep.subr.mxu0 0.0
    %1055 = vmatpush2.msra.mxu0 0.0
    %1056 = vmatprep.subr.mxu0 0.0
    %1057 = vmatpush2.msra.mxu0 0.0
    %1058 = vmatprep.subr.mxu0 0.0
    %1059 = vmatpush2.msra.mxu0 0.0
    %1060 = vmatprep.subr.mxu0 0.0
    %1061 = vmatpush2.msra.mxu0 0.0
    %1062 = vmatprep.subr.mxu0 0.0
    %1063 = vmatpush2.msra.mxu0 0.0
    %1064 = vmatprep.subr.mxu0 0.0
    %1065 = vmatpush2.msra.mxu0 0.0
    %1066 = vmatprep.subr.mxu0 0.0
    %1067 = vmatpush2.msra.mxu0 0.0
    %1068 = vmatprep.subr.mxu0 0.0
    %1069 = vmatpush2.msra.mxu0 0.0
    %1070 = vmatprep.subr.mxu0 0.0
    %1071 = vmatpush2.msra.mxu0 0.0
    %1072 = vmatprep.mubr.f32.mxu0 0.0
    %1073 = vmatmul.mubr.f32.gmra.mxu0 %v1006
    %v1074 = vpop.f32.mrf.mxu0
    %v1075 = vadd.f32 0.0, %v1074
    %v1076 = vpop.f32.mrf.mxu0
    %1077 = vdwg.mxu0
    %1078 = vrot.lane.b32.xlu0 %v255, 112
    %v1079 = vpop.permute.xlu0 %1078
    %1080 = vrot.lane.b32.xlu0 %v334, 112
    %v1081 = vpop.permute.xlu0 %1080
    %v1082 = vsel %vm421, %v1079, 0
    %v1084 = vsel %vm421, %v1081, 0
    %1086 = vmatprep.subr.mxu0 0.0
    %1087 = vmatpush1.xpose.msra.mxu0 0.0
    %1088 = vmatprep.subr.mxu0 0.0
    %1089 = vmatpush1.xpose.msra.mxu0 0.0
    %1090 = vmatprep.subr.mxu0 0.0
    %1091 = vmatpush1.xpose.msra.mxu0 0.0
    %1092 = vmatprep.subr.mxu0 0.0
    %1093 = vmatpush1.xpose.msra.mxu0 0.0
    %1094 = vmatprep.subr.mxu0 0.0
    %1095 = vmatpush1.xpose.msra.mxu0 0.0
    %1096 = vmatprep.subr.mxu0 0.0
    %1097 = vmatpush1.xpose.msra.mxu0 0.0
    %1098 = vmatprep.subr.mxu0 0.0
    %1099 = vmatpush1.xpose.msra.mxu0 0.0
    %1100 = vmatprep.subr.mxu0 0.0
    %1101 = vmatpush1.xpose.msra.mxu0 0.0
    %1102 = vmatprep.subr.mxu0 0.0
    %1103 = vmatpush1.xpose.msra.mxu0 0.0
    %1104 = vmatprep.subr.mxu0 0.0
    %1105 = vmatpush1.xpose.msra.mxu0 0.0
    %1106 = vmatprep.subr.mxu0 0.0
    %1107 = vmatpush1.xpose.msra.mxu0 0.0
    %1108 = vmatprep.subr.mxu0 0.0
    %1109 = vmatpush1.xpose.msra.mxu0 0.0
    %1110 = vmatprep.subr.mxu0 0.0
    %1111 = vmatpush1.xpose.msra.mxu0 0.0
    %1112 = vmatprep.subr.mxu0 0.0
    %1113 = vmatpush1.xpose.msra.mxu0 0.0
    %1114 = vmatprep.subr.mxu0 0.0
    %1115 = vmatpush1.xpose.msra.mxu0 0.0
    %1116 = vmatprep.subr.mxu0 0.0
    %1117 = vmatpush1.xpose.msra.mxu0 %v1084
    %1118 = vmatprep.subr.mxu0 0.0
    %1119 = vmatpush2.xpose.msra.mxu0 0.0
    %1120 = vmatprep.subr.mxu0 0.0
    %1121 = vmatpush2.xpose.msra.mxu0 0.0
    %1122 = vmatprep.subr.mxu0 0.0
    %1123 = vmatpush2.xpose.msra.mxu0 0.0
    %1124 = vmatprep.subr.mxu0 0.0
    %1125 = vmatpush2.xpose.msra.mxu0 0.0
    %1126 = vmatprep.subr.mxu0 0.0
    %1127 = vmatpush2.xpose.msra.mxu0 0.0
    %1128 = vmatprep.subr.mxu0 0.0
    %1129 = vmatpush2.xpose.msra.mxu0 0.0
    %1130 = vmatprep.subr.mxu0 0.0
    %1131 = vmatpush2.xpose.msra.mxu0 0.0
    %1132 = vmatprep.subr.mxu0 0.0
    %1133 = vmatpush2.xpose.msra.mxu0 0.0
    %1134 = vmatprep.subr.mxu0 0.0
    %1135 = vmatpush2.xpose.msra.mxu0 0.0
    %1136 = vmatprep.subr.mxu0 0.0
    %1137 = vmatpush2.xpose.msra.mxu0 0.0
    %1138 = vmatprep.subr.mxu0 0.0
    %1139 = vmatpush2.xpose.msra.mxu0 0.0
    %1140 = vmatprep.subr.mxu0 0.0
    %1141 = vmatpush2.xpose.msra.mxu0 0.0
    %1142 = vmatprep.subr.mxu0 0.0
    %1143 = vmatpush2.xpose.msra.mxu0 0.0
    %1144 = vmatprep.subr.mxu0 0.0
    %1145 = vmatpush2.xpose.msra.mxu0 0.0
    %1146 = vmatprep.subr.mxu0 0.0
    %1147 = vmatpush2.xpose.msra.mxu0 0.0
    %1148 = vmatprep.subr.mxu0 0.0
    %1149 = vmatpush2.xpose.msra.mxu0 0.0
    %1150 = vmatprep.mubr.f32.mxu0 0.0
    %1151 = vmatmul.mubr.f32.gmra.mxu0 %v1082
    %v1152 = vpop.f32.mrf.mxu0
    %v1153 = vadd.f32 0.0, %v1152
    %v1154 = vpop.f32.mrf.mxu0
    %1155 = vdwg.mxu0
    %1156 = vrot.lane.b32.xlu0 %v260, 112
    %v1157 = vpop.permute.xlu0 %1156
    %1158 = vrot.lane.b32.xlu0 %v339, 112
    %v1159 = vpop.permute.xlu0 %1158
    %v1160 = vsel %vm421, %v1157, 0
    %v1162 = vsel %vm421, %v1159, 0
    %1164 = vmatprep.subr.mxu0 0.0
    %1165 = vmatpush1.xpose.msra.mxu0 0.0
    %1166 = vmatprep.subr.mxu0 0.0
    %1167 = vmatpush1.xpose.msra.mxu0 0.0
    %1168 = vmatprep.subr.mxu0 0.0
    %1169 = vmatpush1.xpose.msra.mxu0 0.0
    %1170 = vmatprep.subr.mxu0 0.0
    %1171 = vmatpush1.xpose.msra.mxu0 0.0
    %1172 = vmatprep.subr.mxu0 0.0
    %1173 = vmatpush1.xpose.msra.mxu0 0.0
    %1174 = vmatprep.subr.mxu0 0.0
    %1175 = vmatpush1.xpose.msra.mxu0 0.0
    %1176 = vmatprep.subr.mxu0 0.0
    %1177 = vmatpush1.xpose.msra.mxu0 0.0
    %1178 = vmatprep.subr.mxu0 0.0
    %1179 = vmatpush1.xpose.msra.mxu0 0.0
    %1180 = vmatprep.subr.mxu0 0.0
    %1181 = vmatpush1.xpose.msra.mxu0 0.0
    %1182 = vmatprep.subr.mxu0 0.0
    %1183 = vmatpush1.xpose.msra.mxu0 0.0
    %1184 = vmatprep.subr.mxu0 0.0
    %1185 = vmatpush1.xpose.msra.mxu0 0.0
    %1186 = vmatprep.subr.mxu0 0.0
    %1187 = vmatpush1.xpose.msra.mxu0 0.0
    %1188 = vmatprep.subr.mxu0 0.0
    %1189 = vmatpush1.xpose.msra.mxu0 0.0
    %1190 = vmatprep.subr.mxu0 0.0
    %1191 = vmatpush1.xpose.msra.mxu0 0.0
    %1192 = vmatprep.subr.mxu0 0.0
    %1193 = vmatpush1.xpose.msra.mxu0 0.0
    %1194 = vmatprep.subr.mxu0 0.0
    %1195 = vmatpush1.xpose.msra.mxu0 %v1162
    %1196 = vmatprep.subr.mxu0 0.0
    %1197 = vmatpush2.xpose.msra.mxu0 0.0
    %1198 = vmatprep.subr.mxu0 0.0
    %1199 = vmatpush2.xpose.msra.mxu0 0.0
    %1200 = vmatprep.subr.mxu0 0.0
    %1201 = vmatpush2.xpose.msra.mxu0 0.0
    %1202 = vmatprep.subr.mxu0 0.0
    %1203 = vmatpush2.xpose.msra.mxu0 0.0
    %1204 = vmatprep.subr.mxu0 0.0
    %1205 = vmatpush2.xpose.msra.mxu0 0.0
    %1206 = vmatprep.subr.mxu0 0.0
    %1207 = vmatpush2.xpose.msra.mxu0 0.0
    %1208 = vmatprep.subr.mxu0 0.0
    %1209 = vmatpush2.xpose.msra.mxu0 0.0
    %1210 = vmatprep.subr.mxu0 0.0
    %1211 = vmatpush2.xpose.msra.mxu0 0.0
    %1212 = vmatprep.subr.mxu0 0.0
    %1213 = vmatpush2.xpose.msra.mxu0 0.0
    %1214 = vmatprep.subr.mxu0 0.0
    %1215 = vmatpush2.xpose.msra.mxu0 0.0
    %1216 = vmatprep.subr.mxu0 0.0
    %1217 = vmatpush2.xpose.msra.mxu0 0.0
    %1218 = vmatprep.subr.mxu0 0.0
    %1219 = vmatpush2.xpose.msra.mxu0 0.0
    %1220 = vmatprep.subr.mxu0 0.0
    %1221 = vmatpush2.xpose.msra.mxu0 0.0
    %1222 = vmatprep.subr.mxu0 0.0
    %1223 = vmatpush2.xpose.msra.mxu0 0.0
    %1224 = vmatprep.subr.mxu0 0.0
    %1225 = vmatpush2.xpose.msra.mxu0 0.0
    %1226 = vmatprep.subr.mxu0 0.0
    %1227 = vmatpush2.xpose.msra.mxu0 0.0
    %1228 = vmatprep.mubr.f32.mxu0 0.0
    %1229 = vmatmul.mubr.f32.gmra.mxu0 %v1160
    %v1230 = vpop.f32.mrf.mxu0
    %v1231 = vadd.f32 0.0, %v1230
    %v1232 = vpop.f32.mrf.mxu0
    %1233 = vdwg.mxu0
    %v1234 = vmul.f32 %v1153, 0.35355338
    %v1235 = vmul.f32 %v1231, 0.35355338
    %v1236 = vsel %vm421, %v1234, -inf
    %1237 = vmax.xlane.f32.xlu0 %v1236
    %v1238 = vpop.xlane.xlu0 %1237
    %v1239 = vsel %vm421, %v1235, -inf
    %1240 = vmax.xlane.f32.xlu0 %v1239
    %v1241 = vpop.xlane.xlu0 %1240
    %v1242 = vsub.f32 %v1234, %v1238
    %v1243 = vsub.f32 %v1235, %v1241
    %v1244 = vmul.f32 %v1242, 1.442695
    %v1245 = vpow.pop %v1244
    %v1246 = vmul.f32 %v1243, 1.442695
    %v1247 = vpow.pop %v1246
    %v1248 = vsel %vm421, %v1245, 0.0
    %1249 = vadd.xlane.f32.xlu0 %v1248
    %v1250 = vpop.xlane.xlu0 %1249
    %v1251 = vsel %vm421, %v1247, 0.0
    %1252 = vadd.xlane.f32.xlu0 %v1251
    %v1253 = vpop.xlane.xlu0 %1252
    %v1254 = vrcp.pop %v1250
    %v1255 = vrcp.pop %v1253
    %v1256 = vmul.f32 %v1245, %v1254
    %v1257 = vmul.f32 %v1247, %v1255
    %1258 = vrot.lane.b32.xlu0 %v413, 112
    %v1259 = vpop.permute.xlu0 %1258
    %v1262 = vsel %vm421, %v1256, 0
    %1264 = vmatprep.subr.mxu0 0.0
    %1265 = vmatpush1.msra.mxu0 0.0
    %1266 = vmatprep.subr.mxu0 0.0
    %1267 = vmatpush1.msra.mxu0 0.0
    %1268 = vmatprep.subr.mxu0 0.0
    %1269 = vmatpush1.msra.mxu0 0.0
    %1270 = vmatprep.subr.mxu0 0.0
    %1271 = vmatpush1.msra.mxu0 0.0
    %1272 = vmatprep.subr.mxu0 0.0
    %1273 = vmatpush1.msra.mxu0 0.0
    %1274 = vmatprep.subr.mxu0 0.0
    %1275 = vmatpush1.msra.mxu0 0.0
    %1276 = vmatprep.subr.mxu0 0.0
    %1277 = vmatpush1.msra.mxu0 0.0
    %1278 = vmatprep.subr.mxu0 0.0
    %1279 = vmatpush1.msra.mxu0 0.0
    %1280 = vmatprep.subr.mxu0 0.0
    %1281 = vmatpush1.msra.mxu0 0.0
    %1282 = vmatprep.subr.mxu0 0.0
    %1283 = vmatpush1.msra.mxu0 0.0
    %1284 = vmatprep.subr.mxu0 0.0
    %1285 = vmatpush1.msra.mxu0 0.0
    %1286 = vmatprep.subr.mxu0 0.0
    %1287 = vmatpush1.msra.mxu0 0.0
    %1288 = vmatprep.subr.mxu0 0.0
    %1289 = vmatpush1.msra.mxu0 0.0
    %1290 = vmatprep.subr.mxu0 0.0
    %1291 = vmatpush1.msra.mxu0 0.0
    %1292 = vmatprep.subr.mxu0 0.0
    %1293 = vmatpush1.msra.mxu0 0.0
    %1294 = vmatprep.subr.mxu0 0.0
    %1295 = vmatpush1.msra.mxu0 %v1259
    %1296 = vmatprep.subr.mxu0 0.0
    %1297 = vmatpush2.msra.mxu0 0.0
    %1298 = vmatprep.subr.mxu0 0.0
    %1299 = vmatpush2.msra.mxu0 0.0
    %1300 = vmatprep.subr.mxu0 0.0
    %1301 = vmatpush2.msra.mxu0 0.0
    %1302 = vmatprep.subr.mxu0 0.0
    %1303 = vmatpush2.msra.mxu0 0.0
    %1304 = vmatprep.subr.mxu0 0.0
    %1305 = vmatpush2.msra.mxu0 0.0
    %1306 = vmatprep.subr.mxu0 0.0
    %1307 = vmatpush2.msra.mxu0 0.0
    %1308 = vmatprep.subr.mxu0 0.0
    %1309 = vmatpush2.msra.mxu0 0.0
    %1310 = vmatprep.subr.mxu0 0.0
    %1311 = vmatpush2.msra.mxu0 0.0
    %1312 = vmatprep.subr.mxu0 0.0
    %1313 = vmatpush2.msra.mxu0 0.0
    %1314 = vmatprep.subr.mxu0 0.0
    %1315 = vmatpush2.msra.mxu0 0.0
    %1316 = vmatprep.subr.mxu0 0.0
    %1317 = vmatpush2.msra.mxu0 0.0
    %1318 = vmatprep.subr.mxu0 0.0
    %1319 = vmatpush2.msra.mxu0 0.0
    %1320 = vmatprep.subr.mxu0 0.0
    %1321 = vmatpush2.msra.mxu0 0.0
    %1322 = vmatprep.subr.mxu0 0.0
    %1323 = vmatpush2.msra.mxu0 0.0
    %1324 = vmatprep.subr.mxu0 0.0
    %1325 = vmatpush2.msra.mxu0 0.0
    %1326 = vmatprep.subr.mxu0 0.0
    %1327 = vmatpush2.msra.mxu0 0.0
    %1328 = vmatprep.mubr.f32.mxu0 0.0
    %1329 = vmatmul.mubr.f32.gmra.mxu0 %v1262
    %v1330 = vpop.f32.mrf.mxu0
    %v1331 = vadd.f32 0.0, %v1330
    %v1332 = vpop.f32.mrf.mxu0
    %1333 = vdwg.mxu0
    %1334 = vrot.lane.b32.xlu0 %v418, 112
    %v1335 = vpop.permute.xlu0 %1334
    %v1338 = vsel %vm421, %v1257, 0
    %1340 = vmatprep.subr.mxu0 0.0
    %1341 = vmatpush1.msra.mxu0 0.0
    %1342 = vmatprep.subr.mxu0 0.0
    %1343 = vmatpush1.msra.mxu0 0.0
    %1344 = vmatprep.subr.mxu0 0.0
    %1345 = vmatpush1.msra.mxu0 0.0
    %1346 = vmatprep.subr.mxu0 0.0
    %1347 = vmatpush1.msra.mxu0 0.0
    %1348 = vmatprep.subr.mxu0 0.0
    %1349 = vmatpush1.msra.mxu0 0.0
    %1350 = vmatprep.subr.mxu0 0.0
    %1351 = vmatpush1.msra.mxu0 0.0
    %1352 = vmatprep.subr.mxu0 0.0
    %1353 = vmatpush1.msra.mxu0 0.0
    %1354 = vmatprep.subr.mxu0 0.0
    %1355 = vmatpush1.msra.mxu0 0.0
    %1356 = vmatprep.subr.mxu0 0.0
    %1357 = vmatpush1.msra.mxu0 0.0
    %1358 = vmatprep.subr.mxu0 0.0
    %1359 = vmatpush1.msra.mxu0 0.0
    %1360 = vmatprep.subr.mxu0 0.0
    %1361 = vmatpush1.msra.mxu0 0.0
    %1362 = vmatprep.subr.mxu0 0.0
    %1363 = vmatpush1.msra.mxu0 0.0
    %1364 = vmatprep.subr.mxu0 0.0
    %1365 = vmatpush1.msra.mxu0 0.0
    %1366 = vmatprep.subr.mxu0 0.0
    %1367 = vmatpush1.msra.mxu0 0.0
    %1368 = vmatprep.subr.mxu0 0.0
    %1369 = vmatpush1.msra.mxu0 0.0
    %1370 = vmatprep.subr.mxu0 0.0
    %1371 = vmatpush1.msra.mxu0 %v1335
    %1372 = vmatprep.subr.mxu0 0.0
    %1373 = vmatpush2.msra.mxu0 0.0
    %1374 = vmatprep.subr.mxu0 0.0
    %1375 = vmatpush2.msra.mxu0 0.0
    %1376 = vmatprep.subr.mxu0 0.0
    %1377 = vmatpush2.msra.mxu0 0.0
    %1378 = vmatprep.subr.mxu0 0.0
    %1379 = vmatpush2.msra.mxu0 0.0
    %1380 = vmatprep.subr.mxu0 0.0
    %1381 = vmatpush2.msra.mxu0 0.0
    %1382 = vmatprep.subr.mxu0 0.0
    %1383 = vmatpush2.msra.mxu0 0.0
    %1384 = vmatprep.subr.mxu0 0.0
    %1385 = vmatpush2.msra.mxu0 0.0
    %1386 = vmatprep.subr.mxu0 0.0
    %1387 = vmatpush2.msra.mxu0 0.0
    %1388 = vmatprep.subr.mxu0 0.0
    %1389 = vmatpush2.msra.mxu0 0.0
    %1390 = vmatprep.subr.mxu0 0.0
    %1391 = vmatpush2.msra.mxu0 0.0
    %1392 = vmatprep.subr.mxu0 0.0
    %1393 = vmatpush2.msra.mxu0 0.0
    %1394 = vmatprep.subr.mxu0 0.0
    %1395 = vmatpush2.msra.mxu0 0.0
    %1396 = vmatprep.subr.mxu0 0.0
    %1397 = vmatpush2.msra.mxu0 0.0
    %1398 = vmatprep.subr.mxu0 0.0
    %1399 = vmatpush2.msra.mxu0 0.0
    %1400 = vmatprep.subr.mxu0 0.0
    %1401 = vmatpush2.msra.mxu0 0.0
    %1402 = vmatprep.subr.mxu0 0.0
    %1403 = vmatpush2.msra.mxu0 0.0
    %1404 = vmatprep.mubr.f32.mxu0 0.0
    %1405 = vmatmul.mubr.f32.gmra.mxu0 %v1338
    %v1406 = vpop.f32.mrf.mxu0
    %v1407 = vadd.f32 0.0, %v1406
    %v1408 = vpop.f32.mrf.mxu0
    %1409 = vdwg.mxu0
    %1410 = vrot.lane.b32.xlu0 %v255, 104
    %v1411 = vpop.permute.xlu0 %1410
    %1412 = vrot.lane.b32.xlu0 %v334, 104
    %v1413 = vpop.permute.xlu0 %1412
    %v1414 = vsel %vm421, %v1411, 0
    %v1416 = vsel %vm421, %v1413, 0
    %1418 = vmatprep.subr.mxu0 0.0
    %1419 = vmatpush1.xpose.msra.mxu0 0.0
    %1420 = vmatprep.subr.mxu0 0.0
    %1421 = vmatpush1.xpose.msra.mxu0 0.0
    %1422 = vmatprep.subr.mxu0 0.0
    %1423 = vmatpush1.xpose.msra.mxu0 0.0
    %1424 = vmatprep.subr.mxu0 0.0
    %1425 = vmatpush1.xpose.msra.mxu0 0.0
    %1426 = vmatprep.subr.mxu0 0.0
    %1427 = vmatpush1.xpose.msra.mxu0 0.0
    %1428 = vmatprep.subr.mxu0 0.0
    %1429 = vmatpush1.xpose.msra.mxu0 0.0
    %1430 = vmatprep.subr.mxu0 0.0
    %1431 = vmatpush1.xpose.msra.mxu0 0.0
    %1432 = vmatprep.subr.mxu0 0.0
    %1433 = vmatpush1.xpose.msra.mxu0 0.0
    %1434 = vmatprep.subr.mxu0 0.0
    %1435 = vmatpush1.xpose.msra.mxu0 0.0
    %1436 = vmatprep.subr.mxu0 0.0
    %1437 = vmatpush1.xpose.msra.mxu0 0.0
    %1438 = vmatprep.subr.mxu0 0.0
    %1439 = vmatpush1.xpose.msra.mxu0 0.0
    %1440 = vmatprep.subr.mxu0 0.0
    %1441 = vmatpush1.xpose.msra.mxu0 0.0
    %1442 = vmatprep.subr.mxu0 0.0
    %1443 = vmatpush1.xpose.msra.mxu0 0.0
    %1444 = vmatprep.subr.mxu0 0.0
    %1445 = vmatpush1.xpose.msra.mxu0 0.0
    %1446 = vmatprep.subr.mxu0 0.0
    %1447 = vmatpush1.xpose.msra.mxu0 0.0
    %1448 = vmatprep.subr.mxu0 0.0
    %1449 = vmatpush1.xpose.msra.mxu0 %v1416
    %1450 = vmatprep.subr.mxu0 0.0
    %1451 = vmatpush2.xpose.msra.mxu0 0.0
    %1452 = vmatprep.subr.mxu0 0.0
    %1453 = vmatpush2.xpose.msra.mxu0 0.0
    %1454 = vmatprep.subr.mxu0 0.0
    %1455 = vmatpush2.xpose.msra.mxu0 0.0
    %1456 = vmatprep.subr.mxu0 0.0
    %1457 = vmatpush2.xpose.msra.mxu0 0.0
    %1458 = vmatprep.subr.mxu0 0.0
    %1459 = vmatpush2.xpose.msra.mxu0 0.0
    %1460 = vmatprep.subr.mxu0 0.0
    %1461 = vmatpush2.xpose.msra.mxu0 0.0
    %1462 = vmatprep.subr.mxu0 0.0
    %1463 = vmatpush2.xpose.msra.mxu0 0.0
    %1464 = vmatprep.subr.mxu0 0.0
    %1465 = vmatpush2.xpose.msra.mxu0 0.0
    %1466 = vmatprep.subr.mxu0 0.0
    %1467 = vmatpush2.xpose.msra.mxu0 0.0
    %1468 = vmatprep.subr.mxu0 0.0
    %1469 = vmatpush2.xpose.msra.mxu0 0.0
    %1470 = vmatprep.subr.mxu0 0.0
    %1471 = vmatpush2.xpose.msra.mxu0 0.0
    %1472 = vmatprep.subr.mxu0 0.0
    %1473 = vmatpush2.xpose.msra.mxu0 0.0
    %1474 = vmatprep.subr.mxu0 0.0
    %1475 = vmatpush2.xpose.msra.mxu0 0.0
    %1476 = vmatprep.subr.mxu0 0.0
    %1477 = vmatpush2.xpose.msra.mxu0 0.0
    %1478 = vmatprep.subr.mxu0 0.0
    %1479 = vmatpush2.xpose.msra.mxu0 0.0
    %1480 = vmatprep.subr.mxu0 0.0
    %1481 = vmatpush2.xpose.msra.mxu0 0.0
    %1482 = vmatprep.mubr.f32.mxu0 0.0
    %1483 = vmatmul.mubr.f32.gmra.mxu0 %v1414
    %v1484 = vpop.f32.mrf.mxu0
    %v1485 = vadd.f32 0.0, %v1484
    %v1486 = vpop.f32.mrf.mxu0
    %1487 = vdwg.mxu0
    %1488 = vrot.lane.b32.xlu0 %v260, 104
    %v1489 = vpop.permute.xlu0 %1488
    %1490 = vrot.lane.b32.xlu0 %v339, 104
    %v1491 = vpop.permute.xlu0 %1490
    %v1492 = vsel %vm421, %v1489, 0
    %v1494 = vsel %vm421, %v1491, 0
    %1496 = vmatprep.subr.mxu0 0.0
    %1497 = vmatpush1.xpose.msra.mxu0 0.0
    %1498 = vmatprep.subr.mxu0 0.0
    %1499 = vmatpush1.xpose.msra.mxu0 0.0
    %1500 = vmatprep.subr.mxu0 0.0
    %1501 = vmatpush1.xpose.msra.mxu0 0.0
    %1502 = vmatprep.subr.mxu0 0.0
    %1503 = vmatpush1.xpose.msra.mxu0 0.0
    %1504 = vmatprep.subr.mxu0 0.0
    %1505 = vmatpush1.xpose.msra.mxu0 0.0
    %1506 = vmatprep.subr.mxu0 0.0
    %1507 = vmatpush1.xpose.msra.mxu0 0.0
    %1508 = vmatprep.subr.mxu0 0.0
    %1509 = vmatpush1.xpose.msra.mxu0 0.0
    %1510 = vmatprep.subr.mxu0 0.0
    %1511 = vmatpush1.xpose.msra.mxu0 0.0
    %1512 = vmatprep.subr.mxu0 0.0
    %1513 = vmatpush1.xpose.msra.mxu0 0.0
    %1514 = vmatprep.subr.mxu0 0.0
    %1515 = vmatpush1.xpose.msra.mxu0 0.0
    %1516 = vmatprep.subr.mxu0 0.0
    %1517 = vmatpush1.xpose.msra.mxu0 0.0
    %1518 = vmatprep.subr.mxu0 0.0
    %1519 = vmatpush1.xpose.msra.mxu0 0.0
    %1520 = vmatprep.subr.mxu0 0.0
    %1521 = vmatpush1.xpose.msra.mxu0 0.0
    %1522 = vmatprep.subr.mxu0 0.0
    %1523 = vmatpush1.xpose.msra.mxu0 0.0
    %1524 = vmatprep.subr.mxu0 0.0
    %1525 = vmatpush1.xpose.msra.mxu0 0.0
    %1526 = vmatprep.subr.mxu0 0.0
    %1527 = vmatpush1.xpose.msra.mxu0 %v1494
    %1528 = vmatprep.subr.mxu0 0.0
    %1529 = vmatpush2.xpose.msra.mxu0 0.0
    %1530 = vmatprep.subr.mxu0 0.0
    %1531 = vmatpush2.xpose.msra.mxu0 0.0
    %1532 = vmatprep.subr.mxu0 0.0
    %1533 = vmatpush2.xpose.msra.mxu0 0.0
    %1534 = vmatprep.subr.mxu0 0.0
    %1535 = vmatpush2.xpose.msra.mxu0 0.0
    %1536 = vmatprep.subr.mxu0 0.0
    %1537 = vmatpush2.xpose.msra.mxu0 0.0
    %1538 = vmatprep.subr.mxu0 0.0
    %1539 = vmatpush2.xpose.msra.mxu0 0.0
    %1540 = vmatprep.subr.mxu0 0.0
    %1541 = vmatpush2.xpose.msra.mxu0 0.0
    %1542 = vmatprep.subr.mxu0 0.0
    %1543 = vmatpush2.xpose.msra.mxu0 0.0
    %1544 = vmatprep.subr.mxu0 0.0
    %1545 = vmatpush2.xpose.msra.mxu0 0.0
    %1546 = vmatprep.subr.mxu0 0.0
    %1547 = vmatpush2.xpose.msra.mxu0 0.0
    %1548 = vmatprep.subr.mxu0 0.0
    %1549 = vmatpush2.xpose.msra.mxu0 0.0
    %1550 = vmatprep.subr.mxu0 0.0
    %1551 = vmatpush2.xpose.msra.mxu0 0.0
    %1552 = vmatprep.subr.mxu0 0.0
    %1553 = vmatpush2.xpose.msra.mxu0 0.0
    %1554 = vmatprep.subr.mxu0 0.0
    %1555 = vmatpush2.xpose.msra.mxu0 0.0
    %1556 = vmatprep.subr.mxu0 0.0
    %1557 = vmatpush2.xpose.msra.mxu0 0.0
    %1558 = vmatprep.subr.mxu0 0.0
    %1559 = vmatpush2.xpose.msra.mxu0 0.0
    %1560 = vmatprep.mubr.f32.mxu0 0.0
    %1561 = vmatmul.mubr.f32.gmra.mxu0 %v1492
    %v1562 = vpop.f32.mrf.mxu0
    %v1563 = vadd.f32 0.0, %v1562
    %v1564 = vpop.f32.mrf.mxu0
    %1565 = vdwg.mxu0
    %v1566 = vmul.f32 %v1485, 0.35355338
    %v1567 = vmul.f32 %v1563, 0.35355338
    %v1568 = vsel %vm421, %v1566, -inf
    %1569 = vmax.xlane.f32.xlu0 %v1568
    %v1570 = vpop.xlane.xlu0 %1569
    %v1571 = vsel %vm421, %v1567, -inf
    %1572 = vmax.xlane.f32.xlu0 %v1571
    %v1573 = vpop.xlane.xlu0 %1572
    %v1574 = vsub.f32 %v1566, %v1570
    %v1575 = vsub.f32 %v1567, %v1573
    %v1576 = vmul.f32 %v1574, 1.442695
    %v1577 = vpow.pop %v1576
    %v1578 = vmul.f32 %v1575, 1.442695
    %v1579 = vpow.pop %v1578
    %v1580 = vsel %vm421, %v1577, 0.0
    %1581 = vadd.xlane.f32.xlu0 %v1580
    %v1582 = vpop.xlane.xlu0 %1581
    %v1583 = vsel %vm421, %v1579, 0.0
    %1584 = vadd.xlane.f32.xlu0 %v1583
    %v1585 = vpop.xlane.xlu0 %1584
    %v1586 = vrcp.pop %v1582
    %v1587 = vrcp.pop %v1585
    %v1588 = vmul.f32 %v1577, %v1586
    %v1589 = vmul.f32 %v1579, %v1587
    %1590 = vrot.lane.b32.xlu0 %v413, 104
    %v1591 = vpop.permute.xlu0 %1590
    %v1594 = vsel %vm421, %v1588, 0
    %1596 = vmatprep.subr.mxu0 0.0
    %1597 = vmatpush1.msra.mxu0 0.0
    %1598 = vmatprep.subr.mxu0 0.0
    %1599 = vmatpush1.msra.mxu0 0.0
    %1600 = vmatprep.subr.mxu0 0.0
    %1601 = vmatpush1.msra.mxu0 0.0
    %1602 = vmatprep.subr.mxu0 0.0
    %1603 = vmatpush1.msra.mxu0 0.0
    %1604 = vmatprep.subr.mxu0 0.0
    %1605 = vmatpush1.msra.mxu0 0.0
    %1606 = vmatprep.subr.mxu0 0.0
    %1607 = vmatpush1.msra.mxu0 0.0
    %1608 = vmatprep.subr.mxu0 0.0
    %1609 = vmatpush1.msra.mxu0 0.0
    %1610 = vmatprep.subr.mxu0 0.0
    %1611 = vmatpush1.msra.mxu0 0.0
    %1612 = vmatprep.subr.mxu0 0.0
    %1613 = vmatpush1.msra.mxu0 0.0
    %1614 = vmatprep.subr.mxu0 0.0
    %1615 = vmatpush1.msra.mxu0 0.0
    %1616 = vmatprep.subr.mxu0 0.0
    %1617 = vmatpush1.msra.mxu0 0.0
    %1618 = vmatprep.subr.mxu0 0.0
    %1619 = vmatpush1.msra.mxu0 0.0
    %1620 = vmatprep.subr.mxu0 0.0
    %1621 = vmatpush1.msra.mxu0 0.0
    %1622 = vmatprep.subr.mxu0 0.0
    %1623 = vmatpush1.msra.mxu0 0.0
    %1624 = vmatprep.subr.mxu0 0.0
    %1625 = vmatpush1.msra.mxu0 0.0
    %1626 = vmatprep.subr.mxu0 0.0
    %1627 = vmatpush1.msra.mxu0 %v1591
    %1628 = vmatprep.subr.mxu0 0.0
    %1629 = vmatpush2.msra.mxu0 0.0
    %1630 = vmatprep.subr.mxu0 0.0
    %1631 = vmatpush2.msra.mxu0 0.0
    %1632 = vmatprep.subr.mxu0 0.0
    %1633 = vmatpush2.msra.mxu0 0.0
    %1634 = vmatprep.subr.mxu0 0.0
    %1635 = vmatpush2.msra.mxu0 0.0
    %1636 = vmatprep.subr.mxu0 0.0
    %1637 = vmatpush2.msra.mxu0 0.0
    %1638 = vmatprep.subr.mxu0 0.0
    %1639 = vmatpush2.msra.mxu0 0.0
    %1640 = vmatprep.subr.mxu0 0.0
    %1641 = vmatpush2.msra.mxu0 0.0
    %1642 = vmatprep.subr.mxu0 0.0
    %1643 = vmatpush2.msra.mxu0 0.0
    %1644 = vmatprep.subr.mxu0 0.0
    %1645 = vmatpush2.msra.mxu0 0.0
    %1646 = vmatprep.subr.mxu0 0.0
    %1647 = vmatpush2.msra.mxu0 0.0
    %1648 = vmatprep.subr.mxu0 0.0
    %1649 = vmatpush2.msra.mxu0 0.0
    %1650 = vmatprep.subr.mxu0 0.0
    %1651 = vmatpush2.msra.mxu0 0.0
    %1652 = vmatprep.subr.mxu0 0.0
    %1653 = vmatpush2.msra.mxu0 0.0
    %1654 = vmatprep.subr.mxu0 0.0
    %1655 = vmatpush2.msra.mxu0 0.0
    %1656 = vmatprep.subr.mxu0 0.0
    %1657 = vmatpush2.msra.mxu0 0.0
    %1658 = vmatprep.subr.mxu0 0.0
    %1659 = vmatpush2.msra.mxu0 0.0
    %1660 = vmatprep.mubr.f32.mxu0 0.0
    %1661 = vmatmul.mubr.f32.gmra.mxu0 %v1594
    %v1662 = vpop.f32.mrf.mxu0
    %v1663 = vadd.f32 0.0, %v1662
    %v1664 = vpop.f32.mrf.mxu0
    %1665 = vdwg.mxu0
    %1666 = vrot.lane.b32.xlu0 %v418, 104
    %v1667 = vpop.permute.xlu0 %1666
    %v1670 = vsel %vm421, %v1589, 0
    %1672 = vmatprep.subr.mxu0 0.0
    %1673 = vmatpush1.msra.mxu0 0.0
    %1674 = vmatprep.subr.mxu0 0.0
    %1675 = vmatpush1.msra.mxu0 0.0
    %1676 = vmatprep.subr.mxu0 0.0
    %1677 = vmatpush1.msra.mxu0 0.0
    %1678 = vmatprep.subr.mxu0 0.0
    %1679 = vmatpush1.msra.mxu0 0.0
    %1680 = vmatprep.subr.mxu0 0.0
    %1681 = vmatpush1.msra.mxu0 0.0
    %1682 = vmatprep.subr.mxu0 0.0
    %1683 = vmatpush1.msra.mxu0 0.0
    %1684 = vmatprep.subr.mxu0 0.0
    %1685 = vmatpush1.msra.mxu0 0.0
    %1686 = vmatprep.subr.mxu0 0.0
    %1687 = vmatpush1.msra.mxu0 0.0
    %1688 = vmatprep.subr.mxu0 0.0
    %1689 = vmatpush1.msra.mxu0 0.0
    %1690 = vmatprep.subr.mxu0 0.0
    %1691 = vmatpush1.msra.mxu0 0.0
    %1692 = vmatprep.subr.mxu0 0.0
    %1693 = vmatpush1.msra.mxu0 0.0
    %1694 = vmatprep.subr.mxu0 0.0
    %1695 = vmatpush1.msra.mxu0 0.0
    %1696 = vmatprep.subr.mxu0 0.0
    %1697 = vmatpush1.msra.mxu0 0.0
    %1698 = vmatprep.subr.mxu0 0.0
    %1699 = vmatpush1.msra.mxu0 0.0
    %1700 = vmatprep.subr.mxu0 0.0
    %1701 = vmatpush1.msra.mxu0 0.0
    %1702 = vmatprep.subr.mxu0 0.0
    %1703 = vmatpush1.msra.mxu0 %v1667
    %1704 = vmatprep.subr.mxu0 0.0
    %1705 = vmatpush2.msra.mxu0 0.0
    %1706 = vmatprep.subr.mxu0 0.0
    %1707 = vmatpush2.msra.mxu0 0.0
    %1708 = vmatprep.subr.mxu0 0.0
    %1709 = vmatpush2.msra.mxu0 0.0
    %1710 = vmatprep.subr.mxu0 0.0
    %1711 = vmatpush2.msra.mxu0 0.0
    %1712 = vmatprep.subr.mxu0 0.0
    %1713 = vmatpush2.msra.mxu0 0.0
    %1714 = vmatprep.subr.mxu0 0.0
    %1715 = vmatpush2.msra.mxu0 0.0
    %1716 = vmatprep.subr.mxu0 0.0
    %1717 = vmatpush2.msra.mxu0 0.0
    %1718 = vmatprep.subr.mxu0 0.0
    %1719 = vmatpush2.msra.mxu0 0.0
    %1720 = vmatprep.subr.mxu0 0.0
    %1721 = vmatpush2.msra.mxu0 0.0
    %1722 = vmatprep.subr.mxu0 0.0
    %1723 = vmatpush2.msra.mxu0 0.0
    %1724 = vmatprep.subr.mxu0 0.0
    %1725 = vmatpush2.msra.mxu0 0.0
    %1726 = vmatprep.subr.mxu0 0.0
    %1727 = vmatpush2.msra.mxu0 0.0
    %1728 = vmatprep.subr.mxu0 0.0
    %1729 = vmatpush2.msra.mxu0 0.0
    %1730 = vmatprep.subr.mxu0 0.0
    %1731 = vmatpush2.msra.mxu0 0.0
    %1732 = vmatprep.subr.mxu0 0.0
    %1733 = vmatpush2.msra.mxu0 0.0
    %1734 = vmatprep.subr.mxu0 0.0
    %1735 = vmatpush2.msra.mxu0 0.0
    %1736 = vmatprep.mubr.f32.mxu0 0.0
    %1737 = vmatmul.mubr.f32.gmra.mxu0 %v1670
    %v1738 = vpop.f32.mrf.mxu0
    %v1739 = vadd.f32 0.0, %v1738
    %v1740 = vpop.f32.mrf.mxu0
    %1741 = vdwg.mxu0
    %1744 = vrot.lane.b32.xlu0 %v998, 8
    %v1745 = vpop.permute.xlu0 %1744
    %1746 = vrot.lane.b32.xlu0 %v1075, 8
    %v1747 = vpop.permute.xlu0 %1746
    %1752 = vrot.lane.b32.xlu0 %v1331, 16
    %v1753 = vpop.permute.xlu0 %1752
    %1754 = vrot.lane.b32.xlu0 %v1407, 16
    %v1755 = vpop.permute.xlu0 %1754
    %1760 = vrot.lane.b32.xlu0 %v1663, 24
    %v1761 = vpop.permute.xlu0 %1760
    %1762 = vrot.lane.b32.xlu0 %v1739, 24
    %v1763 = vpop.permute.xlu0 %1762
    %v1766 = vsel %vm421, %v668, %v1745
    %v1767 = vsel %vm421, %v741, %v1747
    %vm1768 = vcmask 130048
    %v1769 = vsel %vm1768, %v1766, %v1753
    %v1770 = vsel %vm1768, %v1767, %v1755
    %vm1771 = vcmask 195584
    %v1772 = vsel %vm1771, %v1769, %v1761
    %v1773 = vsel %vm1771, %v1770, %v1763
    %v1774 = vld [vmem:[#allocation7] sm:$0xff]
    %v1775 = vld [vmem:[#allocation7 + $0x8] sm:$0xff]
    %v1776 = vld [vmem:[#allocation7 + $0x10] sm:$0xff]
    %v1777 = vld [vmem:[#allocation7 + $0x18] sm:$0xff]
    %v1778 = vld [vmem:[%s7] sm:$0x1]
    %v1780 = vlaneseq
    %v1781 = vshrl.u32 %v1780, 7
    %v1782 = vsub.s32 0, %v1781
    %v1783 = vrot.slane %v1778, %v1782
    %v1786 = vsel %vm134, %v1772, 0
    %v1789 = vsel %vm134, %v1773, 0
    %1791 = vmatprep.subr.mxu0 0.0
    %1792 = vmatpush1.msra.mxu0 0.0
    %1793 = vmatprep.subr.mxu0 0.0
    %1794 = vmatpush1.msra.mxu0 0.0
    %1795 = vmatprep.subr.mxu0 0.0
    %1796 = vmatpush1.msra.mxu0 0.0
    %1797 = vmatprep.subr.mxu0 0.0
    %1798 = vmatpush1.msra.mxu0 0.0
    %1799 = vmatprep.subr.mxu0 0.0
    %1800 = vmatpush1.msra.mxu0 0.0
    %1801 = vmatprep.subr.mxu0 0.0
    %1802 = vmatpush1.msra.mxu0 0.0
    %1803 = vmatprep.subr.mxu0 0.0
    %1804 = vmatpush1.msra.mxu0 0.0
    %1805 = vmatprep.subr.mxu0 0.0
    %1806 = vmatpush1.msra.mxu0 0.0
    %1807 = vmatprep.subr.mxu0 0.0
    %1808 = vmatpush1.msra.mxu0 0.0
    %1809 = vmatprep.subr.mxu0 0.0
    %1810 = vmatpush1.msra.mxu0 0.0
    %1811 = vmatprep.subr.mxu0 0.0
    %1812 = vmatpush1.msra.mxu0 0.0
    %1813 = vmatprep.subr.mxu0 0.0
    %1814 = vmatpush1.msra.mxu0 0.0
    %1815 = vmatprep.subr.mxu0 0.0
    %1816 = vmatpush1.msra.mxu0 %v1777
    %1817 = vmatprep.subr.mxu0 0.0
    %1818 = vmatpush1.msra.mxu0 %v1776
    %1819 = vmatprep.subr.mxu0 0.0
    %1820 = vmatpush1.msra.mxu0 %v1775
    %1821 = vmatprep.subr.mxu0 0.0
    %1822 = vmatpush1.msra.mxu0 %v1774
    %1823 = vmatprep.subr.mxu0 0.0
    %1824 = vmatpush2.msra.mxu0 0.0
    %1825 = vmatprep.subr.mxu0 0.0
    %1826 = vmatpush2.msra.mxu0 0.0
    %1827 = vmatprep.subr.mxu0 0.0
    %1828 = vmatpush2.msra.mxu0 0.0
    %1829 = vmatprep.subr.mxu0 0.0
    %1830 = vmatpush2.msra.mxu0 0.0
    %1831 = vmatprep.subr.mxu0 0.0
    %1832 = vmatpush2.msra.mxu0 0.0
    %1833 = vmatprep.subr.mxu0 0.0
    %1834 = vmatpush2.msra.mxu0 0.0
    %1835 = vmatprep.subr.mxu0 0.0
    %1836 = vmatpush2.msra.mxu0 0.0
    %1837 = vmatprep.subr.mxu0 0.0
    %1838 = vmatpush2.msra.mxu0 0.0
    %1839 = vmatprep.subr.mxu0 0.0
    %1840 = vmatpush2.msra.mxu0 0.0
    %1841 = vmatprep.subr.mxu0 0.0
    %1842 = vmatpush2.msra.mxu0 0.0
    %1843 = vmatprep.subr.mxu0 0.0
    %1844 = vmatpush2.msra.mxu0 0.0
    %1845 = vmatprep.subr.mxu0 0.0
    %1846 = vmatpush2.msra.mxu0 0.0
    %1847 = vmatprep.subr.mxu0 0.0
    %1848 = vmatpush2.msra.mxu0 0.0
    %1849 = vmatprep.subr.mxu0 0.0
    %1850 = vmatpush2.msra.mxu0 0.0
    %1851 = vmatprep.subr.mxu0 0.0
    %1852 = vmatpush2.msra.mxu0 0.0
    %1853 = vmatprep.subr.mxu0 0.0
    %1854 = vmatpush2.msra.mxu0 0.0
    %1855 = vmatprep.mubr.f32.mxu0 0.0
    %1856 = vmatmul.mubr.f32.gmra.mxu0 %v1786
    %v1857 = vpop.f32.mrf.mxu0
    %v1858 = vadd.f32 %v1783, %v1857
    %v1859 = vpop.f32.mrf.mxu0
    %1860 = vmatprep.mubr.f32.mxu0 0.0
    %1861 = vmatmul.mubr.f32.gmra.mxu0 %v1789
    %v1862 = vpop.f32.mrf.mxu0
    %v1863 = vadd.f32 %v1783, %v1862
    %v1864 = vpop.f32.mrf.mxu0
    %1865 = vdwg.mxu0
    %v1866 = vadd.f32 %v1858, %v130
    %v1867 = vadd.f32 %v1863, %v131
    %v1868 = vld [vmem:[%s8] sm:$0x1]
    %v1869 = vld [vmem:[%s9] sm:$0x1]
    %v1870 = vsel %vm134, %v1866, 0.0
    %1871 = vadd.xlane.f32.xlu0 %v1870
    %v1872 = vpop.xlane.xlu0 %1871
    %v1873 = vsel %vm134, %v1867, 0.0
    %1874 = vadd.xlane.f32.xlu0 %v1873
    %v1875 = vpop.xlane.xlu0 %1874
    %v1876 = vmul.f32 %v1872, %v141
    %v1877 = vmul.f32 %v1875, %v141
    %v1878 = vsub.f32 %v1866, %v1876
    %v1879 = vsub.f32 %v1867, %v1877
    %v1880 = vmul.f32 %v1878, %v1878
    %v1881 = vmul.f32 %v1879, %v1879
    %v1882 = vsel %vm134, %v1880, 0.0
    %1883 = vadd.xlane.f32.xlu0 %v1882
    %v1884 = vpop.xlane.xlu0 %1883
    %v1885 = vsel %vm134, %v1881, 0.0
    %1886 = vadd.xlane.f32.xlu0 %v1885
    %v1887 = vpop.xlane.xlu0 %1886
    %v1888 = vmul.f32 %v1884, %v141
    %v1889 = vmul.f32 %v1887, %v141
    %v1890 = vadd.f32 %v1888, 1e-05
    %v1891 = vadd.f32 %v1889, 1e-05
    %v1892 = vrsqrt.pop %v1890
    %v1893 = vrsqrt.pop %v1891
    %v1894 = vmul.f32 %v1878, %v1892
    %v1895 = vmul.f32 %v1879, %v1893
    %v1897 = vlaneseq
    %v1898 = vshrl.u32 %v1897, 7
    %v1899 = vsub.s32 0, %v1898
    %v1900 = vrot.slane %v1868, %v1899
    %v1902 = vmul.f32 %v1894, %v1900
    %v1903 = vmul.f32 %v1895, %v1900
    %v1905 = vlaneseq
    %v1906 = vshrl.u32 %v1905, 7
    %v1907 = vsub.s32 0, %v1906
    %v1908 = vrot.slane %v1869, %v1907
    %v1910 = vadd.f32 %v1902, %v1908
    %v1911 = vadd.f32 %v1903, %v1908
    %v1912 = vld [vmem:[#allocation8] sm:$0xff]
    %v1913 = vld [vmem:[#allocation8 + $0x8] sm:$0xff]
    %v1914 = vld [vmem:[#allocation8 + $0x10] sm:$0xff]
    %v1915 = vld [vmem:[#allocation8 + $0x18] sm:$0xff]
    %v1916 = vld [vmem:[#allocation10] sm:$0x1]
    %v1918 = vlaneseq
    %v1919 = vshrl.u32 %v1918, 7
    %v1920 = vsub.s32 0, %v1919
    %v1921 = vrot.slane %v1916, %v1920
    %v1924 = vsel %vm134, %v1910, 0
    %v1927 = vsel %vm134, %v1911, 0
    %1929 = vmatprep.subr.mxu0 0.0
    %1930 = vmatpush1.msra.mxu0 0.0
    %1931 = vmatprep.subr.mxu0 0.0
    %1932 = vmatpush1.msra.mxu0 0.0
    %1933 = vmatprep.subr.mxu0 0.0
    %1934 = vmatpush1.msra.mxu0 0.0
    %1935 = vmatprep.subr.mxu0 0.0
    %1936 = vmatpush1.msra.mxu0 0.0
    %1937 = vmatprep.subr.mxu0 0.0
    %1938 = vmatpush1.msra.mxu0 0.0
    %1939 = vmatprep.subr.mxu0 0.0
    %1940 = vmatpush1.msra.mxu0 0.0
    %1941 = vmatprep.subr.mxu0 0.0
    %1942 = vmatpush1.msra.mxu0 0.0
    %1943 = vmatprep.subr.mxu0 0.0
    %1944 = vmatpush1.msra.mxu0 0.0
    %1945 = vmatprep.subr.mxu0 0.0
    %1946 = vmatpush1.msra.mxu0 0.0
    %1947 = vmatprep.subr.mxu0 0.0
    %1948 = vmatpush1.msra.mxu0 0.0
    %1949 = vmatprep.subr.mxu0 0.0
    %1950 = vmatpush1.msra.mxu0 0.0
    %1951 = vmatprep.subr.mxu0 0.0
    %1952 = vmatpush1.msra.mxu0 0.0
    %1953 = vmatprep.subr.mxu0 0.0
    %1954 = vmatpush1.msra.mxu0 %v1915
    %1955 = vmatprep.subr.mxu0 0.0
    %1956 = vmatpush1.msra.mxu0 %v1914
    %1957 = vmatprep.subr.mxu0 0.0
    %1958 = vmatpush1.msra.mxu0 %v1913
    %1959 = vmatprep.subr.mxu0 0.0
    %1960 = vmatpush1.msra.mxu0 %v1912
    %1961 = vmatprep.subr.mxu0 0.0
    %1962 = vmatpush2.msra.mxu0 0.0
    %1963 = vmatprep.subr.mxu0 0.0
    %1964 = vmatpush2.msra.mxu0 0.0
    %1965 = vmatprep.subr.mxu0 0.0
    %1966 = vmatpush2.msra.mxu0 0.0
    %1967 = vmatprep.subr.mxu0 0.0
    %1968 = vmatpush2.msra.mxu0 0.0
    %1969 = vmatprep.subr.mxu0 0.0
    %1970 = vmatpush2.msra.mxu0 0.0
    %1971 = vmatprep.subr.mxu0 0.0
    %1972 = vmatpush2.msra.mxu0 0.0
    %1973 = vmatprep.subr.mxu0 0.0
    %1974 = vmatpush2.msra.mxu0 0.0
    %1975 = vmatprep.subr.mxu0 0.0
    %1976 = vmatpush2.msra.mxu0 0.0
    %1977 = vmatprep.subr.mxu0 0.0
    %1978 = vmatpush2.msra.mxu0 0.0
    %1979 = vmatprep.subr.mxu0 0.0
    %1980 = vmatpush2.msra.mxu0 0.0
    %1981 = vmatprep.subr.mxu0 0.0
    %1982 = vmatpush2.msra.mxu0 0.0
    %1983 = vmatprep.subr.mxu0 0.0
    %1984 = vmatpush2.msra.mxu0 0.0
    %1985 = vmatprep.subr.mxu0 0.0
    %1986 = vmatpush2.msra.mxu0 0.0
    %1987 = vmatprep.subr.mxu0 0.0
    %1988 = vmatpush2.msra.mxu0 0.0
    %1989 = vmatprep.subr.mxu0 0.0
    %1990 = vmatpush2.msra.mxu0 0.0
    %1991 = vmatprep.subr.mxu0 0.0
    %1992 = vmatpush2.msra.mxu0 0.0
    %1993 = vmatprep.mubr.f32.mxu0 0.0
    %1994 = vmatmul.mubr.f32.gmra.mxu0 %v1924
    %v1995 = vpop.f32.mrf.mxu0
    %v1996 = vadd.f32 %v1921, %v1995
    %v1997 = vpop.f32.mrf.mxu0
    %1998 = vmatprep.mubr.f32.mxu0 0.0
    %1999 = vmatmul.mubr.f32.gmra.mxu0 %v1927
    %v2000 = vpop.f32.mrf.mxu0
    %v2001 = vadd.f32 %v1921, %v2000
    %v2002 = vpop.f32.mrf.mxu0
    %2003 = vdwg.mxu0
    %v2004 = vmul.f32 %v1996, 0.5
    %v2005 = vmul.f32 %v2001, 0.5
    %v2006 = vrcp.pop 1.4142135
    %v2007 = vmul.f32 %v1996, %v2006
    %v2008 = vmul.f32 %v2001, %v2006
    %v2009 = verf.f32.pop %v2007
    %v2010 = verf.f32.pop %v2008
    %v2011 = vadd.f32 %v2009, 1.0
    %v2012 = vadd.f32 %v2010, 1.0
    %v2013 = vmul.f32 %v2004, %v2011
    %v2014 = vmul.f32 %v2005, %v2012
    %v2015 = vld [vmem:[%s12] sm:$0xff]
    %v2016 = vld [vmem:[%s12 + $0x8] sm:$0xff]
    %v2017 = vld [vmem:[%s12 + $0x10] sm:$0xff]
    %v2018 = vld [vmem:[%s12 + $0x18] sm:$0xff]
    %v2019 = vld [vmem:[%s12 + $0x20] sm:$0xff]
    %v2020 = vld [vmem:[%s12 + $0x28] sm:$0xff]
    %v2021 = vld [vmem:[%s12 + $0x30] sm:$0xff]
    %v2022 = vld [vmem:[%s12 + $0x38] sm:$0xff]
    %v2023 = vld [vmem:[#allocation11] sm:$0x1]
    %v2025 = vlaneseq
    %v2026 = vshrl.u32 %v2025, 7
    %v2027 = vsub.s32 0, %v2026
    %v2028 = vrot.slane %v2023, %v2027
    %vm2030 = vcmask 523264
    %v2032 = vsel %vm2030, %v2013, 0
    %v2035 = vsel %vm2030, %v2014, 0
    %2037 = vmatprep.subr.mxu0 0.0
    %2038 = vmatpush1.msra.mxu0 0.0
    %2039 = vmatprep.subr.mxu0 0.0
    %2040 = vmatpush1.msra.mxu0 0.0
    %2041 = vmatprep.subr.mxu0 0.0
    %2042 = vmatpush1.msra.mxu0 0.0
    %2043 = vmatprep.subr.mxu0 0.0
    %2044 = vmatpush1.msra.mxu0 0.0
    %2045 = vmatprep.subr.mxu0 0.0
    %2046 = vmatpush1.msra.mxu0 0.0
    %2047 = vmatprep.subr.mxu0 0.0
    %2048 = vmatpush1.msra.mxu0 0.0
    %2049 = vmatprep.subr.mxu0 0.0
    %2050 = vmatpush1.msra.mxu0 0.0
    %2051 = vmatprep.subr.mxu0 0.0
    %2052 = vmatpush1.msra.mxu0 0.0
    %2053 = vmatprep.subr.mxu0 0.0
    %2054 = vmatpush1.msra.mxu0 %v2022
    %2055 = vmatprep.subr.mxu0 0.0
    %2056 = vmatpush1.msra.mxu0 %v2021
    %2057 = vmatprep.subr.mxu0 0.0
    %2058 = vmatpush1.msra.mxu0 %v2020
    %2059 = vmatprep.subr.mxu0 0.0
    %2060 = vmatpush1.msra.mxu0 %v2019
    %2061 = vmatprep.subr.mxu0 0.0
    %2062 = vmatpush1.msra.mxu0 %v2018
    %2063 = vmatprep.subr.mxu0 0.0
    %2064 = vmatpush1.msra.mxu0 %v2017
    %2065 = vmatprep.subr.mxu0 0.0
    %2066 = vmatpush1.msra.mxu0 %v2016
    %2067 = vmatprep.subr.mxu0 0.0
    %2068 = vmatpush1.msra.mxu0 %v2015
    %2069 = vmatprep.subr.mxu0 0.0
    %2070 = vmatpush2.msra.mxu0 0.0
    %2071 = vmatprep.subr.mxu0 0.0
    %2072 = vmatpush2.msra.mxu0 0.0
    %2073 = vmatprep.subr.mxu0 0.0
    %2074 = vmatpush2.msra.mxu0 0.0
    %2075 = vmatprep.subr.mxu0 0.0
    %2076 = vmatpush2.msra.mxu0 0.0
    %2077 = vmatprep.subr.mxu0 0.0
    %2078 = vmatpush2.msra.mxu0 0.0
    %2079 = vmatprep.subr.mxu0 0.0
    %2080 = vmatpush2.msra.mxu0 0.0
    %2081 = vmatprep.subr.mxu0 0.0
    %2082 = vmatpush2.msra.mxu0 0.0
    %2083 = vmatprep.subr.mxu0 0.0
    %2084 = vmatpush2.msra.mxu0 0.0
    %2085 = vmatprep.subr.mxu0 0.0
    %2086 = vmatpush2.msra.mxu0 0.0
    %2087 = vmatprep.subr.mxu0 0.0
    %2088 = vmatpush2.msra.mxu0 0.0
    %2089 = vmatprep.subr.mxu0 0.0
    %2090 = vmatpush2.msra.mxu0 0.0
    %2091 = vmatprep.subr.mxu0 0.0
    %2092 = vmatpush2.msra.mxu0 0.0
    %2093 = vmatprep.subr.mxu0 0.0
    %2094 = vmatpush2.msra.mxu0 0.0
    %2095 = vmatprep.subr.mxu0 0.0
    %2096 = vmatpush2.msra.mxu0 0.0
    %2097 = vmatprep.subr.mxu0 0.0
    %2098 = vmatpush2.msra.mxu0 0.0
    %2099 = vmatprep.subr.mxu0 0.0
    %2100 = vmatpush2.msra.mxu0 0.0
    %2101 = vmatprep.mubr.f32.mxu0 0.0
    %2102 = vmatmul.mubr.f32.gmra.mxu0 %v2032
    %v2103 = vpop.f32.mrf.mxu0
    %v2104 = vadd.f32 %v2028, %v2103
    %v2105 = vpop.f32.mrf.mxu0
    %2106 = vmatprep.mubr.f32.mxu0 0.0
    %2107 = vmatmul.mubr.f32.gmra.mxu0 %v2035
    %v2108 = vpop.f32.mrf.mxu0
    %v2109 = vadd.f32 %v2028, %v2108
    %v2110 = vpop.f32.mrf.mxu0
    %2111 = vdwg.mxu0
    %v2112 = vadd.f32 %v2104, %v1866
    %v2113 = vadd.f32 %v2109, %v1867
    %s2114 = scalar_lea.vmem %s1, 1
    %v2115 = vld [vmem:[%s2114] sm:$0x1]
    %s2116 = scalar_lea.vmem [#allocation5], 1
    %v2117 = vld [vmem:[%s2116] sm:$0x1]
    %v2118 = vsel %vm134, %v2112, 0.0
    %2119 = vadd.xlane.f32.xlu0 %v2118
    %v2120 = vpop.xlane.xlu0 %2119
    %v2121 = vsel %vm134, %v2113, 0.0
    %2122 = vadd.xlane.f32.xlu0 %v2121
    %v2123 = vpop.xlane.xlu0 %2122
    %v2124 = vmul.f32 %v2120, %v141
    %v2125 = vmul.f32 %v2123, %v141
    %v2126 = vsub.f32 %v2112, %v2124
    %v2127 = vsub.f32 %v2113, %v2125
    %v2128 = vmul.f32 %v2126, %v2126
    %v2129 = vmul.f32 %v2127, %v2127
    %v2130 = vsel %vm134, %v2128, 0.0
    %2131 = vadd.xlane.f32.xlu0 %v2130
    %v2132 = vpop.xlane.xlu0 %2131
    %v2133 = vsel %vm134, %v2129, 0.0
    %2134 = vadd.xlane.f32.xlu0 %v2133
    %v2135 = vpop.xlane.xlu0 %2134
    %v2136 = vmul.f32 %v2132, %v141
    %v2137 = vmul.f32 %v2135, %v141
    %v2138 = vadd.f32 %v2136, 1e-05
    %v2139 = vadd.f32 %v2137, 1e-05
    %v2140 = vrsqrt.pop %v2138
    %v2141 = vrsqrt.pop %v2139
    %v2142 = vmul.f32 %v2126, %v2140
    %v2143 = vmul.f32 %v2127, %v2141
    %v2145 = vlaneseq
    %v2146 = vshrl.u32 %v2145, 7
    %v2147 = vsub.s32 0, %v2146
    %v2148 = vrot.slane %v2115, %v2147
    %v2150 = vmul.f32 %v2142, %v2148
    %v2151 = vmul.f32 %v2143, %v2148
    %v2153 = vlaneseq
    %v2154 = vshrl.u32 %v2153, 7
    %v2155 = vsub.s32 0, %v2154
    %v2156 = vrot.slane %v2117, %v2155
    %v2158 = vadd.f32 %v2150, %v2156
    %v2159 = vadd.f32 %v2151, %v2156
    %s2160 = scalar_lea.vmem %s3, 32
    %v2161 = vld [vmem:[%s2160] sm:$0xff]
    %v2162 = vld [vmem:[%s2160 + $0x8] sm:$0xff]
    %v2163 = vld [vmem:[%s2160 + $0x10] sm:$0xff]
    %v2164 = vld [vmem:[%s2160 + $0x18] sm:$0xff]
    %v2166 = vsel %vm134, %v2158, 0
    %v2169 = vsel %vm134, %v2159, 0
    %2171 = vmatprep.subr.mxu0 0.0
    %2172 = vmatpush1.msra.mxu0 0.0
    %2173 = vmatprep.subr.mxu0 0.0
    %2174 = vmatpush1.msra.mxu0 0.0
    %2175 = vmatprep.subr.mxu0 0.0
    %2176 = vmatpush1.msra.mxu0 0.0
    %2177 = vmatprep.subr.mxu0 0.0
    %2178 = vmatpush1.msra.mxu0 0.0
    %2179 = vmatprep.subr.mxu0 0.0
    %2180 = vmatpush1.msra.mxu0 0.0
    %2181 = vmatprep.subr.mxu0 0.0
    %2182 = vmatpush1.msra.mxu0 0.0
    %2183 = vmatprep.subr.mxu0 0.0
    %2184 = vmatpush1.msra.mxu0 0.0
    %2185 = vmatprep.subr.mxu0 0.0
    %2186 = vmatpush1.msra.mxu0 0.0
    %2187 = vmatprep.subr.mxu0 0.0
    %2188 = vmatpush1.msra.mxu0 0.0
    %2189 = vmatprep.subr.mxu0 0.0
    %2190 = vmatpush1.msra.mxu0 0.0
    %2191 = vmatprep.subr.mxu0 0.0
    %2192 = vmatpush1.msra.mxu0 0.0
    %2193 = vmatprep.subr.mxu0 0.0
    %2194 = vmatpush1.msra.mxu0 0.0
    %2195 = vmatprep.subr.mxu0 0.0
    %2196 = vmatpush1.msra.mxu0 %v2164
    %2197 = vmatprep.subr.mxu0 0.0
    %2198 = vmatpush1.msra.mxu0 %v2163
    %2199 = vmatprep.subr.mxu0 0.0
    %2200 = vmatpush1.msra.mxu0 %v2162
    %2201 = vmatprep.subr.mxu0 0.0
    %2202 = vmatpush1.msra.mxu0 %v2161
    %2203 = vmatprep.subr.mxu0 0.0
    %2204 = vmatpush2.msra.mxu0 0.0
    %2205 = vmatprep.subr.mxu0 0.0
    %2206 = vmatpush2.msra.mxu0 0.0
    %2207 = vmatprep.subr.mxu0 0.0
    %2208 = vmatpush2.msra.mxu0 0.0
    %2209 = vmatprep.subr.mxu0 0.0
    %2210 = vmatpush2.msra.mxu0 0.0
    %2211 = vmatprep.subr.mxu0 0.0
    %2212 = vmatpush2.msra.mxu0 0.0
    %2213 = vmatprep.subr.mxu0 0.0
    %2214 = vmatpush2.msra.mxu0 0.0
    %2215 = vmatprep.subr.mxu0 0.0
    %2216 = vmatpush2.msra.mxu0 0.0
    %2217 = vmatprep.subr.mxu0 0.0
    %2218 = vmatpush2.msra.mxu0 0.0
    %2219 = vmatprep.subr.mxu0 0.0
    %2220 = vmatpush2.msra.mxu0 0.0
    %2221 = vmatprep.subr.mxu0 0.0
    %2222 = vmatpush2.msra.mxu0 0.0
    %2223 = vmatprep.subr.mxu0 0.0
    %2224 = vmatpush2.msra.mxu0 0.0
    %2225 = vmatprep.subr.mxu0 0.0
    %2226 = vmatpush2.msra.mxu0 0.0
    %2227 = vmatprep.subr.mxu0 0.0
    %2228 = vmatpush2.msra.mxu0 0.0
    %2229 = vmatprep.subr.mxu0 0.0
    %2230 = vmatpush2.msra.mxu0 0.0
    %2231 = vmatprep.subr.mxu0 0.0
    %2232 = vmatpush2.msra.mxu0 0.0
    %2233 = vmatprep.subr.mxu0 0.0
    %2234 = vmatpush2.msra.mxu0 0.0
    %2235 = vmatprep.mubr.f32.mxu0 0.0
    %2236 = vmatmul.mubr.f32.gmra.mxu0 %v2166
    %v2237 = vpop.f32.mrf.mxu0
    %v2238 = vadd.f32 0.0, %v2237
    %v2239 = vpop.f32.mrf.mxu0
    %2240 = vmatprep.mubr.f32.mxu0 0.0
    %2241 = vmatmul.mubr.f32.gmra.mxu0 %v2169
    %v2242 = vpop.f32.mrf.mxu0
    %v2243 = vadd.f32 0.0, %v2242
    %v2244 = vpop.f32.mrf.mxu0
    %2245 = vdwg.mxu0
    %s2246 = scalar_lea.vmem %s4, 32
    %v2247 = vld [vmem:[%s2246] sm:$0xff]
    %v2248 = vld [vmem:[%s2246 + $0x8] sm:$0xff]
    %v2249 = vld [vmem:[%s2246 + $0x10] sm:$0xff]
    %v2250 = vld [vmem:[%s2246 + $0x18] sm:$0xff]
    %2251 = vmatprep.subr.mxu0 0.0
    %2252 = vmatpush1.msra.mxu0 0.0
    %2253 = vmatprep.subr.mxu0 0.0
    %2254 = vmatpush1.msra.mxu0 0.0
    %2255 = vmatprep.subr.mxu0 0.0
    %2256 = vmatpush1.msra.mxu0 0.0
    %2257 = vmatprep.subr.mxu0 0.0
    %2258 = vmatpush1.msra.mxu0 0.0
    %2259 = vmatprep.subr.mxu0 0.0
    %2260 = vmatpush1.msra.mxu0 0.0
    %2261 = vmatprep.subr.mxu0 0.0
    %2262 = vmatpush1.msra.mxu0 0.0
    %2263 = vmatprep.subr.mxu0 0.0
    %2264 = vmatpush1.msra.mxu0 0.0
    %2265 = vmatprep.subr.mxu0 0.0
    %2266 = vmatpush1.msra.mxu0 0.0
    %2267 = vmatprep.subr.mxu0 0.0
    %2268 = vmatpush1.msra.mxu0 0.0
    %2269 = vmatprep.subr.mxu0 0.0
    %2270 = vmatpush1.msra.mxu0 0.0
    %2271 = vmatprep.subr.mxu0 0.0
    %2272 = vmatpush1.msra.mxu0 0.0
    %2273 = vmatprep.subr.mxu0 0.0
    %2274 = vmatpush1.msra.mxu0 0.0
    %2275 = vmatprep.subr.mxu0 0.0
    %2276 = vmatpush1.msra.mxu0 %v2250
    %2277 = vmatprep.subr.mxu0 0.0
    %2278 = vmatpush1.msra.mxu0 %v2249
    %2279 = vmatprep.subr.mxu0 0.0
    %2280 = vmatpush1.msra.mxu0 %v2248
    %2281 = vmatprep.subr.mxu0 0.0
    %2282 = vmatpush1.msra.mxu0 %v2247
    %2283 = vmatprep.subr.mxu0 0.0
    %2284 = vmatpush2.msra.mxu0 0.0
    %2285 = vmatprep.subr.mxu0 0.0
    %2286 = vmatpush2.msra.mxu0 0.0
    %2287 = vmatprep.subr.mxu0 0.0
    %2288 = vmatpush2.msra.mxu0 0.0
    %2289 = vmatprep.subr.mxu0 0.0
    %2290 = vmatpush2.msra.mxu0 0.0
    %2291 = vmatprep.subr.mxu0 0.0
    %2292 = vmatpush2.msra.mxu0 0.0
    %2293 = vmatprep.subr.mxu0 0.0
    %2294 = vmatpush2.msra.mxu0 0.0
    %2295 = vmatprep.subr.mxu0 0.0
    %2296 = vmatpush2.msra.mxu0 0.0
    %2297 = vmatprep.subr.mxu0 0.0
    %2298 = vmatpush2.msra.mxu0 0.0
    %2299 = vmatprep.subr.mxu0 0.0
    %2300 = vmatpush2.msra.mxu0 0.0
    %2301 = vmatprep.subr.mxu0 0.0
    %2302 = vmatpush2.msra.mxu0 0.0
    %2303 = vmatprep.subr.mxu0 0.0
    %2304 = vmatpush2.msra.mxu0 0.0
    %2305 = vmatprep.subr.mxu0 0.0
    %2306 = vmatpush2.msra.mxu0 0.0
    %2307 = vmatprep.subr.mxu0 0.0
    %2308 = vmatpush2.msra.mxu0 0.0
    %2309 = vmatprep.subr.mxu0 0.0
    %2310 = vmatpush2.msra.mxu0 0.0
    %2311 = vmatprep.subr.mxu0 0.0
    %2312 = vmatpush2.msra.mxu0 0.0
    %2313 = vmatprep.subr.mxu0 0.0
    %2314 = vmatpush2.msra.mxu0 0.0
    %2315 = vmatprep.mubr.f32.mxu0 0.0
    %2316 = vmatmul.mubr.f32.gmra.mxu0 %v2166
    %v2317 = vpop.f32.mrf.mxu0
    %v2318 = vadd.f32 0.0, %v2317
    %v2319 = vpop.f32.mrf.mxu0
    %2320 = vmatprep.mubr.f32.mxu0 0.0
    %2321 = vmatmul.mubr.f32.gmra.mxu0 %v2169
    %v2322 = vpop.f32.mrf.mxu0
    %v2323 = vadd.f32 0.0, %v2322
    %v2324 = vpop.f32.mrf.mxu0
    %2325 = vdwg.mxu0
    %s2326 = scalar_lea.vmem %s5, 32
    %v2327 = vld [vmem:[%s2326] sm:$0xff]
    %v2328 = vld [vmem:[%s2326 + $0x8] sm:$0xff]
    %v2329 = vld [vmem:[%s2326 + $0x10] sm:$0xff]
    %v2330 = vld [vmem:[%s2326 + $0x18] sm:$0xff]
    %2331 = vmatprep.subr.mxu0 0.0
    %2332 = vmatpush1.msra.mxu0 0.0
    %2333 = vmatprep.subr.mxu0 0.0
    %2334 = vmatpush1.msra.mxu0 0.0
    %2335 = vmatprep.subr.mxu0 0.0
    %2336 = vmatpush1.msra.mxu0 0.0
    %2337 = vmatprep.subr.mxu0 0.0
    %2338 = vmatpush1.msra.mxu0 0.0
    %2339 = vmatprep.subr.mxu0 0.0
    %2340 = vmatpush1.msra.mxu0 0.0
    %2341 = vmatprep.subr.mxu0 0.0
    %2342 = vmatpush1.msra.mxu0 0.0
    %2343 = vmatprep.subr.mxu0 0.0
    %2344 = vmatpush1.msra.mxu0 0.0
    %2345 = vmatprep.subr.mxu0 0.0
    %2346 = vmatpush1.msra.mxu0 0.0
    %2347 = vmatprep.subr.mxu0 0.0
    %2348 = vmatpush1.msra.mxu0 0.0
    %2349 = vmatprep.subr.mxu0 0.0
    %2350 = vmatpush1.msra.mxu0 0.0
    %2351 = vmatprep.subr.mxu0 0.0
    %2352 = vmatpush1.msra.mxu0 0.0
    %2353 = vmatprep.subr.mxu0 0.0
    %2354 = vmatpush1.msra.mxu0 0.0
    %2355 = vmatprep.subr.mxu0 0.0
    %2356 = vmatpush1.msra.mxu0 %v2330
    %2357 = vmatprep.subr.mxu0 0.0
    %2358 = vmatpush1.msra.mxu0 %v2329
    %2359 = vmatprep.subr.mxu0 0.0
    %2360 = vmatpush1.msra.mxu0 %v2328
    %2361 = vmatprep.subr.mxu0 0.0
    %2362 = vmatpush1.msra.mxu0 %v2327
    %2363 = vmatprep.subr.mxu0 0.0
    %2364 = vmatpush2.msra.mxu0 0.0
    %2365 = vmatprep.subr.mxu0 0.0
    %2366 = vmatpush2.msra.mxu0 0.0
    %2367 = vmatprep.subr.mxu0 0.0
    %2368 = vmatpush2.msra.mxu0 0.0
    %2369 = vmatprep.subr.mxu0 0.0
    %2370 = vmatpush2.msra.mxu0 0.0
    %2371 = vmatprep.subr.mxu0 0.0
    %2372 = vmatpush2.msra.mxu0 0.0
    %2373 = vmatprep.subr.mxu0 0.0
    %2374 = vmatpush2.msra.mxu0 0.0
    %2375 = vmatprep.subr.mxu0 0.0
    %2376 = vmatpush2.msra.mxu0 0.0
    %2377 = vmatprep.subr.mxu0 0.0
    %2378 = vmatpush2.msra.mxu0 0.0
    %2379 = vmatprep.subr.mxu0 0.0
    %2380 = vmatpush2.msra.mxu0 0.0
    %2381 = vmatprep.subr.mxu0 0.0
    %2382 = vmatpush2.msra.mxu0 0.0
    %2383 = vmatprep.subr.mxu0 0.0
    %2384 = vmatpush2.msra.mxu0 0.0
    %2385 = vmatprep.subr.mxu0 0.0
    %2386 = vmatpush2.msra.mxu0 0.0
    %2387 = vmatprep.subr.mxu0 0.0
    %2388 = vmatpush2.msra.mxu0 0.0
    %2389 = vmatprep.subr.mxu0 0.0
    %2390 = vmatpush2.msra.mxu0 0.0
    %2391 = vmatprep.subr.mxu0 0.0
    %2392 = vmatpush2.msra.mxu0 0.0
    %2393 = vmatprep.subr.mxu0 0.0
    %2394 = vmatpush2.msra.mxu0 0.0
    %2395 = vmatprep.mubr.f32.mxu0 0.0
    %2396 = vmatmul.mubr.f32.gmra.mxu0 %v2166
    %v2397 = vpop.f32.mrf.mxu0
    %v2398 = vadd.f32 0.0, %v2397
    %v2399 = vpop.f32.mrf.mxu0
    %2400 = vmatprep.mubr.f32.mxu0 0.0
    %2401 = vmatmul.mubr.f32.gmra.mxu0 %v2169
    %v2402 = vpop.f32.mrf.mxu0
    %v2403 = vadd.f32 0.0, %v2402
    %v2404 = vpop.f32.mrf.mxu0
    %2405 = vdwg.mxu0
    %v2407 = vsel %vm421, %v2238, 0
    %v2410 = vsel %vm421, %v2318, 0
    %2412 = vmatprep.subr.mxu0 0.0
    %2413 = vmatpush1.xpose.msra.mxu0 0.0
    %2414 = vmatprep.subr.mxu0 0.0
    %2415 = vmatpush1.xpose.msra.mxu0 0.0
    %2416 = vmatprep.subr.mxu0 0.0
    %2417 = vmatpush1.xpose.msra.mxu0 0.0
    %2418 = vmatprep.subr.mxu0 0.0
    %2419 = vmatpush1.xpose.msra.mxu0 0.0
    %2420 = vmatprep.subr.mxu0 0.0
    %2421 = vmatpush1.xpose.msra.mxu0 0.0
    %2422 = vmatprep.subr.mxu0 0.0
    %2423 = vmatpush1.xpose.msra.mxu0 0.0
    %2424 = vmatprep.subr.mxu0 0.0
    %2425 = vmatpush1.xpose.msra.mxu0 0.0
    %2426 = vmatprep.subr.mxu0 0.0
    %2427 = vmatpush1.xpose.msra.mxu0 0.0
    %2428 = vmatprep.subr.mxu0 0.0
    %2429 = vmatpush1.xpose.msra.mxu0 0.0
    %2430 = vmatprep.subr.mxu0 0.0
    %2431 = vmatpush1.xpose.msra.mxu0 0.0
    %2432 = vmatprep.subr.mxu0 0.0
    %2433 = vmatpush1.xpose.msra.mxu0 0.0
    %2434 = vmatprep.subr.mxu0 0.0
    %2435 = vmatpush1.xpose.msra.mxu0 0.0
    %2436 = vmatprep.subr.mxu0 0.0
    %2437 = vmatpush1.xpose.msra.mxu0 0.0
    %2438 = vmatprep.subr.mxu0 0.0
    %2439 = vmatpush1.xpose.msra.mxu0 0.0
    %2440 = vmatprep.subr.mxu0 0.0
    %2441 = vmatpush1.xpose.msra.mxu0 0.0
    %2442 = vmatprep.subr.mxu0 0.0
    %2443 = vmatpush1.xpose.msra.mxu0 %v2410
    %2444 = vmatprep.subr.mxu0 0.0
    %2445 = vmatpush2.xpose.msra.mxu0 0.0
    %2446 = vmatprep.subr.mxu0 0.0
    %2447 = vmatpush2.xpose.msra.mxu0 0.0
    %2448 = vmatprep.subr.mxu0 0.0
    %2449 = vmatpush2.xpose.msra.mxu0 0.0
    %2450 = vmatprep.subr.mxu0 0.0
    %2451 = vmatpush2.xpose.msra.mxu0 0.0
    %2452 = vmatprep.subr.mxu0 0.0
    %2453 = vmatpush2.xpose.msra.mxu0 0.0
    %2454 = vmatprep.subr.mxu0 0.0
    %2455 = vmatpush2.xpose.msra.mxu0 0.0
    %2456 = vmatprep.subr.mxu0 0.0
    %2457 = vmatpush2.xpose.msra.mxu0 0.0
    %2458 = vmatprep.subr.mxu0 0.0
    %2459 = vmatpush2.xpose.msra.mxu0 0.0
    %2460 = vmatprep.subr.mxu0 0.0
    %2461 = vmatpush2.xpose.msra.mxu0 0.0
    %2462 = vmatprep.subr.mxu0 0.0
    %2463 = vmatpush2.xpose.msra.mxu0 0.0
    %2464 = vmatprep.subr.mxu0 0.0
    %2465 = vmatpush2.xpose.msra.mxu0 0.0
    %2466 = vmatprep.subr.mxu0 0.0
    %2467 = vmatpush2.xpose.msra.mxu0 0.0
    %2468 = vmatprep.subr.mxu0 0.0
    %2469 = vmatpush2.xpose.msra.mxu0 0.0
    %2470 = vmatprep.subr.mxu0 0.0
    %2471 = vmatpush2.xpose.msra.mxu0 0.0
    %2472 = vmatprep.subr.mxu0 0.0
    %2473 = vmatpush2.xpose.msra.mxu0 0.0
    %2474 = vmatprep.subr.mxu0 0.0
    %2475 = vmatpush2.xpose.msra.mxu0 0.0
    %2476 = vmatprep.mubr.f32.mxu0 0.0
    %2477 = vmatmul.mubr.f32.gmra.mxu0 %v2407
    %v2478 = vpop.f32.mrf.mxu0
    %v2479 = vadd.f32 0.0, %v2478
    %v2480 = vpop.f32.mrf.mxu0
    %2481 = vdwg.mxu0
    %v2483 = vsel %vm421, %v2243, 0
    %v2486 = vsel %vm421, %v2323, 0
    %2488 = vmatprep.subr.mxu0 0.0
    %2489 = vmatpush1.xpose.msra.mxu0 0.0
    %2490 = vmatprep.subr.mxu0 0.0
    %2491 = vmatpush1.xpose.msra.mxu0 0.0
    %2492 = vmatprep.subr.mxu0 0.0
    %2493 = vmatpush1.xpose.msra.mxu0 0.0
    %2494 = vmatprep.subr.mxu0 0.0
    %2495 = vmatpush1.xpose.msra.mxu0 0.0
    %2496 = vmatprep.subr.mxu0 0.0
    %2497 = vmatpush1.xpose.msra.mxu0 0.0
    %2498 = vmatprep.subr.mxu0 0.0
    %2499 = vmatpush1.xpose.msra.mxu0 0.0
    %2500 = vmatprep.subr.mxu0 0.0
    %2501 = vmatpush1.xpose.msra.mxu0 0.0
    %2502 = vmatprep.subr.mxu0 0.0
    %2503 = vmatpush1.xpose.msra.mxu0 0.0
    %2504 = vmatprep.subr.mxu0 0.0
    %2505 = vmatpush1.xpose.msra.mxu0 0.0
    %2506 = vmatprep.subr.mxu0 0.0
    %2507 = vmatpush1.xpose.msra.mxu0 0.0
    %2508 = vmatprep.subr.mxu0 0.0
    %2509 = vmatpush1.xpose.msra.mxu0 0.0
    %2510 = vmatprep.subr.mxu0 0.0
    %2511 = vmatpush1.xpose.msra.mxu0 0.0
    %2512 = vmatprep.subr.mxu0 0.0
    %2513 = vmatpush1.xpose.msra.mxu0 0.0
    %2514 = vmatprep.subr.mxu0 0.0
    %2515 = vmatpush1.xpose.msra.mxu0 0.0
    %2516 = vmatprep.subr.mxu0 0.0
    %2517 = vmatpush1.xpose.msra.mxu0 0.0
    %2518 = vmatprep.subr.mxu0 0.0
    %2519 = vmatpush1.xpose.msra.mxu0 %v2486
    %2520 = vmatprep.subr.mxu0 0.0
    %2521 = vmatpush2.xpose.msra.mxu0 0.0
    %2522 = vmatprep.subr.mxu0 0.0
    %2523 = vmatpush2.xpose.msra.mxu0 0.0
    %2524 = vmatprep.subr.mxu0 0.0
    %2525 = vmatpush2.xpose.msra.mxu0 0.0
    %2526 = vmatprep.subr.mxu0 0.0
    %2527 = vmatpush2.xpose.msra.mxu0 0.0
    %2528 = vmatprep.subr.mxu0 0.0
    %2529 = vmatpush2.xpose.msra.mxu0 0.0
    %2530 = vmatprep.subr.mxu0 0.0
    %2531 = vmatpush2.xpose.msra.mxu0 0.0
    %2532 = vmatprep.subr.mxu0 0.0
    %2533 = vmatpush2.xpose.msra.mxu0 0.0
    %2534 = vmatprep.subr.mxu0 0.0
    %2535 = vmatpush2.xpose.msra.mxu0 0.0
    %2536 = vmatprep.subr.mxu0 0.0
    %2537 = vmatpush2.xpose.msra.mxu0 0.0
    %2538 = vmatprep.subr.mxu0 0.0
    %2539 = vmatpush2.xpose.msra.mxu0 0.0
    %2540 = vmatprep.subr.mxu0 0.0
    %2541 = vmatpush2.xpose.msra.mxu0 0.0
    %2542 = vmatprep.subr.mxu0 0.0
    %2543 = vmatpush2.xpose.msra.mxu0 0.0
    %2544 = vmatprep.subr.mxu0 0.0
    %2545 = vmatpush2.xpose.msra.mxu0 0.0
    %2546 = vmatprep.subr.mxu0 0.0
    %2547 = vmatpush2.xpose.msra.mxu0 0.0
    %2548 = vmatprep.subr.mxu0 0.0
    %2549 = vmatpush2.xpose.msra.mxu0 0.0
    %2550 = vmatprep.subr.mxu0 0.0
    %2551 = vmatpush2.xpose.msra.mxu0 0.0
    %2552 = vmatprep.mubr.f32.mxu0 0.0
    %2553 = vmatmul.mubr.f32.gmra.mxu0 %v2483
    %v2554 = vpop.f32.mrf.mxu0
    %v2555 = vadd.f32 0.0, %v2554
    %v2556 = vpop.f32.mrf.mxu0
    %2557 = vdwg.mxu0
    %v2558 = vmul.f32 %v2479, 0.35355338
    %v2559 = vmul.f32 %v2555, 0.35355338
    %v2560 = vsel %vm421, %v2558, -inf
    %2561 = vmax.xlane.f32.xlu0 %v2560
    %v2562 = vpop.xlane.xlu0 %2561
    %v2563 = vsel %vm421, %v2559, -inf
    %2564 = vmax.xlane.f32.xlu0 %v2563
    %v2565 = vpop.xlane.xlu0 %2564
    %v2566 = vsub.f32 %v2558, %v2562
    %v2567 = vsub.f32 %v2559, %v2565
    %v2568 = vmul.f32 %v2566, 1.442695
    %v2569 = vpow.pop %v2568
    %v2570 = vmul.f32 %v2567, 1.442695
    %v2571 = vpow.pop %v2570
    %v2572 = vsel %vm421, %v2569, 0.0
    %2573 = vadd.xlane.f32.xlu0 %v2572
    %v2574 = vpop.xlane.xlu0 %2573
    %v2575 = vsel %vm421, %v2571, 0.0
    %2576 = vadd.xlane.f32.xlu0 %v2575
    %v2577 = vpop.xlane.xlu0 %2576
    %v2578 = vrcp.pop %v2574
    %v2579 = vrcp.pop %v2577
    %v2580 = vmul.f32 %v2569, %v2578
    %v2581 = vmul.f32 %v2571, %v2579
    %v2583 = vsel %vm421, %v2580, 0
    %2585 = vmatprep.subr.mxu0 0.0
    %2586 = vmatpush1.msra.mxu0 0.0
    %2587 = vmatprep.subr.mxu0 0.0
    %2588 = vmatpush1.msra.mxu0 0.0
    %2589 = vmatprep.subr.mxu0 0.0
    %2590 = vmatpush1.msra.mxu0 0.0
    %2591 = vmatprep.subr.mxu0 0.0
    %2592 = vmatpush1.msra.mxu0 0.0
    %2593 = vmatprep.subr.mxu0 0.0
    %2594 = vmatpush1.msra.mxu0 0.0
    %2595 = vmatprep.subr.mxu0 0.0
    %2596 = vmatpush1.msra.mxu0 0.0
    %2597 = vmatprep.subr.mxu0 0.0
    %2598 = vmatpush1.msra.mxu0 0.0
    %2599 = vmatprep.subr.mxu0 0.0
    %2600 = vmatpush1.msra.mxu0 0.0
    %2601 = vmatprep.subr.mxu0 0.0
    %2602 = vmatpush1.msra.mxu0 0.0
    %2603 = vmatprep.subr.mxu0 0.0
    %2604 = vmatpush1.msra.mxu0 0.0
    %2605 = vmatprep.subr.mxu0 0.0
    %2606 = vmatpush1.msra.mxu0 0.0
    %2607 = vmatprep.subr.mxu0 0.0
    %2608 = vmatpush1.msra.mxu0 0.0
    %2609 = vmatprep.subr.mxu0 0.0
    %2610 = vmatpush1.msra.mxu0 0.0
    %2611 = vmatprep.subr.mxu0 0.0
    %2612 = vmatpush1.msra.mxu0 0.0
    %2613 = vmatprep.subr.mxu0 0.0
    %2614 = vmatpush1.msra.mxu0 0.0
    %2615 = vmatprep.subr.mxu0 0.0
    %2616 = vmatpush1.msra.mxu0 %v2398
    %2617 = vmatprep.subr.mxu0 0.0
    %2618 = vmatpush2.msra.mxu0 0.0
    %2619 = vmatprep.subr.mxu0 0.0
    %2620 = vmatpush2.msra.mxu0 0.0
    %2621 = vmatprep.subr.mxu0 0.0
    %2622 = vmatpush2.msra.mxu0 0.0
    %2623 = vmatprep.subr.mxu0 0.0
    %2624 = vmatpush2.msra.mxu0 0.0
    %2625 = vmatprep.subr.mxu0 0.0
    %2626 = vmatpush2.msra.mxu0 0.0
    %2627 = vmatprep.subr.mxu0 0.0
    %2628 = vmatpush2.msra.mxu0 0.0
    %2629 = vmatprep.subr.mxu0 0.0
    %2630 = vmatpush2.msra.mxu0 0.0
    %2631 = vmatprep.subr.mxu0 0.0
    %2632 = vmatpush2.msra.mxu0 0.0
    %2633 = vmatprep.subr.mxu0 0.0
    %2634 = vmatpush2.msra.mxu0 0.0
    %2635 = vmatprep.subr.mxu0 0.0
    %2636 = vmatpush2.msra.mxu0 0.0
    %2637 = vmatprep.subr.mxu0 0.0
    %2638 = vmatpush2.msra.mxu0 0.0
    %2639 = vmatprep.subr.mxu0 0.0
    %2640 = vmatpush2.msra.mxu0 0.0
    %2641 = vmatprep.subr.mxu0 0.0
    %2642 = vmatpush2.msra.mxu0 0.0
    %2643 = vmatprep.subr.mxu0 0.0
    %2644 = vmatpush2.msra.mxu0 0.0
    %2645 = vmatprep.subr.mxu0 0.0
    %2646 = vmatpush2.msra.mxu0 0.0
    %2647 = vmatprep.subr.mxu0 0.0
    %2648 = vmatpush2.msra.mxu0 0.0
    %2649 = vmatprep.mubr.f32.mxu0 0.0
    %2650 = vmatmul.mubr.f32.gmra.mxu0 %v2583
    %v2651 = vpop.f32.mrf.mxu0
    %v2652 = vadd.f32 0.0, %v2651
    %v2653 = vpop.f32.mrf.mxu0
    %2654 = vdwg.mxu0
    %v2656 = vsel %vm421, %v2581, 0
    %2658 = vmatprep.subr.mxu0 0.0
    %2659 = vmatpush1.msra.mxu0 0.0
    %2660 = vmatprep.subr.mxu0 0.0
    %2661 = vmatpush1.msra.mxu0 0.0
    %2662 = vmatprep.subr.mxu0 0.0
    %2663 = vmatpush1.msra.mxu0 0.0
    %2664 = vmatprep.subr.mxu0 0.0
    %2665 = vmatpush1.msra.mxu0 0.0
    %2666 = vmatprep.subr.mxu0 0.0
    %2667 = vmatpush1.msra.mxu0 0.0
    %2668 = vmatprep.subr.mxu0 0.0
    %2669 = vmatpush1.msra.mxu0 0.0
    %2670 = vmatprep.subr.mxu0 0.0
    %2671 = vmatpush1.msra.mxu0 0.0
    %2672 = vmatprep.subr.mxu0 0.0
    %2673 = vmatpush1.msra.mxu0 0.0
    %2674 = vmatprep.subr.mxu0 0.0
    %2675 = vmatpush1.msra.mxu0 0.0
    %2676 = vmatprep.subr.mxu0 0.0
    %2677 = vmatpush1.msra.mxu0 0.0
    %2678 = vmatprep.subr.mxu0 0.0
    %2679 = vmatpush1.msra.mxu0 0.0
    %2680 = vmatprep.subr.mxu0 0.0
    %2681 = vmatpush1.msra.mxu0 0.0
    %2682 = vmatprep.subr.mxu0 0.0
    %2683 = vmatpush1.msra.mxu0 0.0
    %2684 = vmatprep.subr.mxu0 0.0
    %2685 = vmatpush1.msra.mxu0 0.0
    %2686 = vmatprep.subr.mxu0 0.0
    %2687 = vmatpush1.msra.mxu0 0.0
    %2688 = vmatprep.subr.mxu0 0.0
    %2689 = vmatpush1.msra.mxu0 %v2403
    %2690 = vmatprep.subr.mxu0 0.0
    %2691 = vmatpush2.msra.mxu0 0.0
    %2692 = vmatprep.subr.mxu0 0.0
    %2693 = vmatpush2.msra.mxu0 0.0
    %2694 = vmatprep.subr.mxu0 0.0
    %2695 = vmatpush2.msra.mxu0 0.0
    %2696 = vmatprep.subr.mxu0 0.0
    %2697 = vmatpush2.msra.mxu0 0.0
    %2698 = vmatprep.subr.mxu0 0.0
    %2699 = vmatpush2.msra.mxu0 0.0
    %2700 = vmatprep.subr.mxu0 0.0
    %2701 = vmatpush2.msra.mxu0 0.0
    %2702 = vmatprep.subr.mxu0 0.0
    %2703 = vmatpush2.msra.mxu0 0.0
    %2704 = vmatprep.subr.mxu0 0.0
    %2705 = vmatpush2.msra.mxu0 0.0
    %2706 = vmatprep.subr.mxu0 0.0
    %2707 = vmatpush2.msra.mxu0 0.0
    %2708 = vmatprep.subr.mxu0 0.0
    %2709 = vmatpush2.msra.mxu0 0.0
    %2710 = vmatprep.subr.mxu0 0.0
    %2711 = vmatpush2.msra.mxu0 0.0
    %2712 = vmatprep.subr.mxu0 0.0
    %2713 = vmatpush2.msra.mxu0 0.0
    %2714 = vmatprep.subr.mxu0 0.0
    %2715 = vmatpush2.msra.mxu0 0.0
    %2716 = vmatprep.subr.mxu0 0.0
    %2717 = vmatpush2.msra.mxu0 0.0
    %2718 = vmatprep.subr.mxu0 0.0
    %2719 = vmatpush2.msra.mxu0 0.0
    %2720 = vmatprep.subr.mxu0 0.0
    %2721 = vmatpush2.msra.mxu0 0.0
    %2722 = vmatprep.mubr.f32.mxu0 0.0
    %2723 = vmatmul.mubr.f32.gmra.mxu0 %v2656
    %v2724 = vpop.f32.mrf.mxu0
    %v2725 = vadd.f32 0.0, %v2724
    %v2726 = vpop.f32.mrf.mxu0
    %2727 = vdwg.mxu0
    %2728 = vrot.lane.b32.xlu0 %v2238, 120
    %v2729 = vpop.permute.xlu0 %2728
    %2730 = vrot.lane.b32.xlu0 %v2318, 120
    %v2731 = vpop.permute.xlu0 %2730
    %v2732 = vsel %vm421, %v2729, 0
    %v2734 = vsel %vm421, %v2731, 0
    %2736 = vmatprep.subr.mxu0 0.0
    %2737 = vmatpush1.xpose.msra.mxu0 0.0
    %2738 = vmatprep.subr.mxu0 0.0
    %2739 = vmatpush1.xpose.msra.mxu0 0.0
    %2740 = vmatprep.subr.mxu0 0.0
    %2741 = vmatpush1.xpose.msra.mxu0 0.0
    %2742 = vmatprep.subr.mxu0 0.0
    %2743 = vmatpush1.xpose.msra.mxu0 0.0
    %2744 = vmatprep.subr.mxu0 0.0
    %2745 = vmatpush1.xpose.msra.mxu0 0.0
    %2746 = vmatprep.subr.mxu0 0.0
    %2747 = vmatpush1.xpose.msra.mxu0 0.0
    %2748 = vmatprep.subr.mxu0 0.0
    %2749 = vmatpush1.xpose.msra.mxu0 0.0
    %2750 = vmatprep.subr.mxu0 0.0
    %2751 = vmatpush1.xpose.msra.mxu0 0.0
    %2752 = vmatprep.subr.mxu0 0.0
    %2753 = vmatpush1.xpose.msra.mxu0 0.0
    %2754 = vmatprep.subr.mxu0 0.0
    %2755 = vmatpush1.xpose.msra.mxu0 0.0
    %2756 = vmatprep.subr.mxu0 0.0
    %2757 = vmatpush1.xpose.msra.mxu0 0.0
    %2758 = vmatprep.subr.mxu0 0.0
    %2759 = vmatpush1.xpose.msra.mxu0 0.0
    %2760 = vmatprep.subr.mxu0 0.0
    %2761 = vmatpush1.xpose.msra.mxu0 0.0
    %2762 = vmatprep.subr.mxu0 0.0
    %2763 = vmatpush1.xpose.msra.mxu0 0.0
    %2764 = vmatprep.subr.mxu0 0.0
    %2765 = vmatpush1.xpose.msra.mxu0 0.0
    %2766 = vmatprep.subr.mxu0 0.0
    %2767 = vmatpush1.xpose.msra.mxu0 %v2734
    %2768 = vmatprep.subr.mxu0 0.0
    %2769 = vmatpush2.xpose.msra.mxu0 0.0
    %2770 = vmatprep.subr.mxu0 0.0
    %2771 = vmatpush2.xpose.msra.mxu0 0.0
    %2772 = vmatprep.subr.mxu0 0.0
    %2773 = vmatpush2.xpose.msra.mxu0 0.0
    %2774 = vmatprep.subr.mxu0 0.0
    %2775 = vmatpush2.xpose.msra.mxu0 0.0
    %2776 = vmatprep.subr.mxu0 0.0
    %2777 = vmatpush2.xpose.msra.mxu0 0.0
    %2778 = vmatprep.subr.mxu0 0.0
    %2779 = vmatpush2.xpose.msra.mxu0 0.0
    %2780 = vmatprep.subr.mxu0 0.0
    %2781 = vmatpush2.xpose.msra.mxu0 0.0
    %2782 = vmatprep.subr.mxu0 0.0
    %2783 = vmatpush2.xpose.msra.mxu0 0.0
    %2784 = vmatprep.subr.mxu0 0.0
    %2785 = vmatpush2.xpose.msra.mxu0 0.0
    %2786 = vmatprep.subr.mxu0 0.0
    %2787 = vmatpush2.xpose.msra.mxu0 0.0
    %2788 = vmatprep.subr.mxu0 0.0
    %2789 = vmatpush2.xpose.msra.mxu0 0.0
    %2790 = vmatprep.subr.mxu0 0.0
    %2791 = vmatpush2.xpose.msra.mxu0 0.0
    %2792 = vmatprep.subr.mxu0 0.0
    %2793 = vmatpush2.xpose.msra.mxu0 0.0
    %2794 = vmatprep.subr.mxu0 0.0
    %2795 = vmatpush2.xpose.msra.mxu0 0.0
    %2796 = vmatprep.subr.mxu0 0.0
    %2797 = vmatpush2.xpose.msra.mxu0 0.0
    %2798 = vmatprep.subr.mxu0 0.0
    %2799 = vmatpush2.xpose.msra.mxu0 0.0
    %2800 = vmatprep.mubr.f32.mxu0 0.0
    %2801 = vmatmul.mubr.f32.gmra.mxu0 %v2732
    %v2802 = vpop.f32.mrf.mxu0
    %v2803 = vadd.f32 0.0, %v2802
    %v2804 = vpop.f32.mrf.mxu0
    %2805 = vdwg.mxu0
    %2806 = vrot.lane.b32.xlu0 %v2243, 120
    %v2807 = vpop.permute.xlu0 %2806
    %2808 = vrot.lane.b32.xlu0 %v2323, 120
    %v2809 = vpop.permute.xlu0 %2808
    %v2810 = vsel %vm421, %v2807, 0
    %v2812 = vsel %vm421, %v2809, 0
    %2814 = vmatprep.subr.mxu0 0.0
    %2815 = vmatpush1.xpose.msra.mxu0 0.0
    %2816 = vmatprep.subr.mxu0 0.0
    %2817 = vmatpush1.xpose.msra.mxu0 0.0
    %2818 = vmatprep.subr.mxu0 0.0
    %2819 = vmatpush1.xpose.msra.mxu0 0.0
    %2820 = vmatprep.subr.mxu0 0.0
    %2821 = vmatpush1.xpose.msra.mxu0 0.0
    %2822 = vmatprep.subr.mxu0 0.0
    %2823 = vmatpush1.xpose.msra.mxu0 0.0
    %2824 = vmatprep.subr.mxu0 0.0
    %2825 = vmatpush1.xpose.msra.mxu0 0.0
    %2826 = vmatprep.subr.mxu0 0.0
    %2827 = vmatpush1.xpose.msra.mxu0 0.0
    %2828 = vmatprep.subr.mxu0 0.0
    %2829 = vmatpush1.xpose.msra.mxu0 0.0
    %2830 = vmatprep.subr.mxu0 0.0
    %2831 = vmatpush1.xpose.msra.mxu0 0.0
    %2832 = vmatprep.subr.mxu0 0.0
    %2833 = vmatpush1.xpose.msra.mxu0 0.0
    %2834 = vmatprep.subr.mxu0 0.0
    %2835 = vmatpush1.xpose.msra.mxu0 0.0
    %2836 = vmatprep.subr.mxu0 0.0
    %2837 = vmatpush1.xpose.msra.mxu0 0.0
    %2838 = vmatprep.subr.mxu0 0.0
    %2839 = vmatpush1.xpose.msra.mxu0 0.0
    %2840 = vmatprep.subr.mxu0 0.0
    %2841 = vmatpush1.xpose.msra.mxu0 0.0
    %2842 = vmatprep.subr.mxu0 0.0
    %2843 = vmatpush1.xpose.msra.mxu0 0.0
    %2844 = vmatprep.subr.mxu0 0.0
    %2845 = vmatpush1.xpose.msra.mxu0 %v2812
    %2846 = vmatprep.subr.mxu0 0.0
    %2847 = vmatpush2.xpose.msra.mxu0 0.0
    %2848 = vmatprep.subr.mxu0 0.0
    %2849 = vmatpush2.xpose.msra.mxu0 0.0
    %2850 = vmatprep.subr.mxu0 0.0
    %2851 = vmatpush2.xpose.msra.mxu0 0.0
    %2852 = vmatprep.subr.mxu0 0.0
    %2853 = vmatpush2.xpose.msra.mxu0 0.0
    %2854 = vmatprep.subr.mxu0 0.0
    %2855 = vmatpush2.xpose.msra.mxu0 0.0
    %2856 = vmatprep.subr.mxu0 0.0
    %2857 = vmatpush2.xpose.msra.mxu0 0.0
    %2858 = vmatprep.subr.mxu0 0.0
    %2859 = vmatpush2.xpose.msra.mxu0 0.0
    %2860 = vmatprep.subr.mxu0 0.0
    %2861 = vmatpush2.xpose.msra.mxu0 0.0
    %2862 = vmatprep.subr.mxu0 0.0
    %2863 = vmatpush2.xpose.msra.mxu0 0.0
    %2864 = vmatprep.subr.mxu0 0.0
    %2865 = vmatpush2.xpose.msra.mxu0 0.0
    %2866 = vmatprep.subr.mxu0 0.0
    %2867 = vmatpush2.xpose.msra.mxu0 0.0
    %2868 = vmatprep.subr.mxu0 0.0
    %2869 = vmatpush2.xpose.msra.mxu0 0.0
    %2870 = vmatprep.subr.mxu0 0.0
    %2871 = vmatpush2.xpose.msra.mxu0 0.0
    %2872 = vmatprep.subr.mxu0 0.0
    %2873 = vmatpush2.xpose.msra.mxu0 0.0
    %2874 = vmatprep.subr.mxu0 0.0
    %2875 = vmatpush2.xpose.msra.mxu0 0.0
    %2876 = vmatprep.subr.mxu0 0.0
    %2877 = vmatpush2.xpose.msra.mxu0 0.0
    %2878 = vmatprep.mubr.f32.mxu0 0.0
    %2879 = vmatmul.mubr.f32.gmra.mxu0 %v2810
    %v2880 = vpop.f32.mrf.mxu0
    %v2881 = vadd.f32 0.0, %v2880
    %v2882 = vpop.f32.mrf.mxu0
    %2883 = vdwg.mxu0
    %v2884 = vmul.f32 %v2803, 0.35355338
    %v2885 = vmul.f32 %v2881, 0.35355338
    %v2886 = vsel %vm421, %v2884, -inf
    %2887 = vmax.xlane.f32.xlu0 %v2886
    %v2888 = vpop.xlane.xlu0 %2887
    %v2889 = vsel %vm421, %v2885, -inf
    %2890 = vmax.xlane.f32.xlu0 %v2889
    %v2891 = vpop.xlane.xlu0 %2890
    %v2892 = vsub.f32 %v2884, %v2888
    %v2893 = vsub.f32 %v2885, %v2891
    %v2894 = vmul.f32 %v2892, 1.442695
    %v2895 = vpow.pop %v2894
    %v2896 = vmul.f32 %v2893, 1.442695
    %v2897 = vpow.pop %v2896
    %v2898 = vsel %vm421, %v2895, 0.0
    %2899 = vadd.xlane.f32.xlu0 %v2898
    %v2900 = vpop.xlane.xlu0 %2899
    %v2901 = vsel %vm421, %v2897, 0.0
    %2902 = vadd.xlane.f32.xlu0 %v2901
    %v2903 = vpop.xlane.xlu0 %2902
    %v2904 = vrcp.pop %v2900
    %v2905 = vrcp.pop %v2903
    %v2906 = vmul.f32 %v2895, %v2904
    %v2907 = vmul.f32 %v2897, %v2905
    %2909 = vrot.lane.b32.xlu0 %v2398, 120
    %v2910 = vpop.permute.xlu0 %2909
    %v2913 = vsel %vm421, %v2906, 0
    %2915 = vmatprep.subr.mxu0 0.0
    %2916 = vmatpush1.msra.mxu0 0.0
    %2917 = vmatprep.subr.mxu0 0.0
    %2918 = vmatpush1.msra.mxu0 0.0
    %2919 = vmatprep.subr.mxu0 0.0
    %2920 = vmatpush1.msra.mxu0 0.0
    %2921 = vmatprep.subr.mxu0 0.0
    %2922 = vmatpush1.msra.mxu0 0.0
    %2923 = vmatprep.subr.mxu0 0.0
    %2924 = vmatpush1.msra.mxu0 0.0
    %2925 = vmatprep.subr.mxu0 0.0
    %2926 = vmatpush1.msra.mxu0 0.0
    %2927 = vmatprep.subr.mxu0 0.0
    %2928 = vmatpush1.msra.mxu0 0.0
    %2929 = vmatprep.subr.mxu0 0.0
    %2930 = vmatpush1.msra.mxu0 0.0
    %2931 = vmatprep.subr.mxu0 0.0
    %2932 = vmatpush1.msra.mxu0 0.0
    %2933 = vmatprep.subr.mxu0 0.0
    %2934 = vmatpush1.msra.mxu0 0.0
    %2935 = vmatprep.subr.mxu0 0.0
    %2936 = vmatpush1.msra.mxu0 0.0
    %2937 = vmatprep.subr.mxu0 0.0
    %2938 = vmatpush1.msra.mxu0 0.0
    %2939 = vmatprep.subr.mxu0 0.0
    %2940 = vmatpush1.msra.mxu0 0.0
    %2941 = vmatprep.subr.mxu0 0.0
    %2942 = vmatpush1.msra.mxu0 0.0
    %2943 = vmatprep.subr.mxu0 0.0
    %2944 = vmatpush1.msra.mxu0 0.0
    %2945 = vmatprep.subr.mxu0 0.0
    %2946 = vmatpush1.msra.mxu0 %v2910
    %2947 = vmatprep.subr.mxu0 0.0
    %2948 = vmatpush2.msra.mxu0 0.0
    %2949 = vmatprep.subr.mxu0 0.0
    %2950 = vmatpush2.msra.mxu0 0.0
    %2951 = vmatprep.subr.mxu0 0.0
    %2952 = vmatpush2.msra.mxu0 0.0
    %2953 = vmatprep.subr.mxu0 0.0
    %2954 = vmatpush2.msra.mxu0 0.0
    %2955 = vmatprep.subr.mxu0 0.0
    %2956 = vmatpush2.msra.mxu0 0.0
    %2957 = vmatprep.subr.mxu0 0.0
    %2958 = vmatpush2.msra.mxu0 0.0
    %2959 = vmatprep.subr.mxu0 0.0
    %2960 = vmatpush2.msra.mxu0 0.0
    %2961 = vmatprep.subr.mxu0 0.0
    %2962 = vmatpush2.msra.mxu0 0.0
    %2963 = vmatprep.subr.mxu0 0.0
    %2964 = vmatpush2.msra.mxu0 0.0
    %2965 = vmatprep.subr.mxu0 0.0
    %2966 = vmatpush2.msra.mxu0 0.0
    %2967 = vmatprep.subr.mxu0 0.0
    %2968 = vmatpush2.msra.mxu0 0.0
    %2969 = vmatprep.subr.mxu0 0.0
    %2970 = vmatpush2.msra.mxu0 0.0
    %2971 = vmatprep.subr.mxu0 0.0
    %2972 = vmatpush2.msra.mxu0 0.0
    %2973 = vmatprep.subr.mxu0 0.0
    %2974 = vmatpush2.msra.mxu0 0.0
    %2975 = vmatprep.subr.mxu0 0.0
    %2976 = vmatpush2.msra.mxu0 0.0
    %2977 = vmatprep.subr.mxu0 0.0
    %2978 = vmatpush2.msra.mxu0 0.0
    %2979 = vmatprep.mubr.f32.mxu0 0.0
    %2980 = vmatmul.mubr.f32.gmra.mxu0 %v2913
    %v2981 = vpop.f32.mrf.mxu0
    %v2982 = vadd.f32 0.0, %v2981
    %v2983 = vpop.f32.mrf.mxu0
    %2984 = vdwg.mxu0
    %2986 = vrot.lane.b32.xlu0 %v2403, 120
    %v2987 = vpop.permute.xlu0 %2986
    %v2990 = vsel %vm421, %v2907, 0
    %2992 = vmatprep.subr.mxu0 0.0
    %2993 = vmatpush1.msra.mxu0 0.0
    %2994 = vmatprep.subr.mxu0 0.0
    %2995 = vmatpush1.msra.mxu0 0.0
    %2996 = vmatprep.subr.mxu0 0.0
    %2997 = vmatpush1.msra.mxu0 0.0
    %2998 = vmatprep.subr.mxu0 0.0
    %2999 = vmatpush1.msra.mxu0 0.0
    %3000 = vmatprep.subr.mxu0 0.0
    %3001 = vmatpush1.msra.mxu0 0.0
    %3002 = vmatprep.subr.mxu0 0.0
    %3003 = vmatpush1.msra.mxu0 0.0
    %3004 = vmatprep.subr.mxu0 0.0
    %3005 = vmatpush1.msra.mxu0 0.0
    %3006 = vmatprep.subr.mxu0 0.0
    %3007 = vmatpush1.msra.mxu0 0.0
    %3008 = vmatprep.subr.mxu0 0.0
    %3009 = vmatpush1.msra.mxu0 0.0
    %3010 = vmatprep.subr.mxu0 0.0
    %3011 = vmatpush1.msra.mxu0 0.0
    %3012 = vmatprep.subr.mxu0 0.0
    %3013 = vmatpush1.msra.mxu0 0.0
    %3014 = vmatprep.subr.mxu0 0.0
    %3015 = vmatpush1.msra.mxu0 0.0
    %3016 = vmatprep.subr.mxu0 0.0
    %3017 = vmatpush1.msra.mxu0 0.0
    %3018 = vmatprep.subr.mxu0 0.0
    %3019 = vmatpush1.msra.mxu0 0.0
    %3020 = vmatprep.subr.mxu0 0.0
    %3021 = vmatpush1.msra.mxu0 0.0
    %3022 = vmatprep.subr.mxu0 0.0
    %3023 = vmatpush1.msra.mxu0 %v2987
    %3024 = vmatprep.subr.mxu0 0.0
    %3025 = vmatpush2.msra.mxu0 0.0
    %3026 = vmatprep.subr.mxu0 0.0
    %3027 = vmatpush2.msra.mxu0 0.0
    %3028 = vmatprep.subr.mxu0 0.0
    %3029 = vmatpush2.msra.mxu0 0.0
    %3030 = vmatprep.subr.mxu0 0.0
    %3031 = vmatpush2.msra.mxu0 0.0
    %3032 = vmatprep.subr.mxu0 0.0
    %3033 = vmatpush2.msra.mxu0 0.0
    %3034 = vmatprep.subr.mxu0 0.0
    %3035 = vmatpush2.msra.mxu0 0.0
    %3036 = vmatprep.subr.mxu0 0.0
    %3037 = vmatpush2.msra.mxu0 0.0
    %3038 = vmatprep.subr.mxu0 0.0
    %3039 = vmatpush2.msra.mxu0 0.0
    %3040 = vmatprep.subr.mxu0 0.0
    %3041 = vmatpush2.msra.mxu0 0.0
    %3042 = vmatprep.subr.mxu0 0.0
    %3043 = vmatpush2.msra.mxu0 0.0
    %3044 = vmatprep.subr.mxu0 0.0
    %3045 = vmatpush2.msra.mxu0 0.0
    %3046 = vmatprep.subr.mxu0 0.0
    %3047 = vmatpush2.msra.mxu0 0.0
    %3048 = vmatprep.subr.mxu0 0.0
    %3049 = vmatpush2.msra.mxu0 0.0
    %3050 = vmatprep.subr.mxu0 0.0
    %3051 = vmatpush2.msra.mxu0 0.0
    %3052 = vmatprep.subr.mxu0 0.0
    %3053 = vmatpush2.msra.mxu0 0.0
    %3054 = vmatprep.subr.mxu0 0.0
    %3055 = vmatpush2.msra.mxu0 0.0
    %3056 = vmatprep.mubr.f32.mxu0 0.0
    %3057 = vmatmul.mubr.f32.gmra.mxu0 %v2990
    %v3058 = vpop.f32.mrf.mxu0
    %v3059 = vadd.f32 0.0, %v3058
    %v3060 = vpop.f32.mrf.mxu0
    %3061 = vdwg.mxu0
    %3062 = vrot.lane.b32.xlu0 %v2238, 112
    %v3063 = vpop.permute.xlu0 %3062
    %3064 = vrot.lane.b32.xlu0 %v2318, 112
    %v3065 = vpop.permute.xlu0 %3064
    %v3066 = vsel %vm421, %v3063, 0
    %v3068 = vsel %vm421, %v3065, 0
    %3070 = vmatprep.subr.mxu0 0.0
    %3071 = vmatpush1.xpose.msra.mxu0 0.0
    %3072 = vmatprep.subr.mxu0 0.0
    %3073 = vmatpush1.xpose.msra.mxu0 0.0
    %3074 = vmatprep.subr.mxu0 0.0
    %3075 = vmatpush1.xpose.msra.mxu0 0.0
    %3076 = vmatprep.subr.mxu0 0.0
    %3077 = vmatpush1.xpose.msra.mxu0 0.0
    %3078 = vmatprep.subr.mxu0 0.0
    %3079 = vmatpush1.xpose.msra.mxu0 0.0
    %3080 = vmatprep.subr.mxu0 0.0
    %3081 = vmatpush1.xpose.msra.mxu0 0.0
    %3082 = vmatprep.subr.mxu0 0.0
    %3083 = vmatpush1.xpose.msra.mxu0 0.0
    %3084 = vmatprep.subr.mxu0 0.0
    %3085 = vmatpush1.xpose.msra.mxu0 0.0
    %3086 = vmatprep.subr.mxu0 0.0
    %3087 = vmatpush1.xpose.msra.mxu0 0.0
    %3088 = vmatprep.subr.mxu0 0.0
    %3089 = vmatpush1.xpose.msra.mxu0 0.0
    %3090 = vmatprep.subr.mxu0 0.0
    %3091 = vmatpush1.xpose.msra.mxu0 0.0
    %3092 = vmatprep.subr.mxu0 0.0
    %3093 = vmatpush1.xpose.msra.mxu0 0.0
    %3094 = vmatprep.subr.mxu0 0.0
    %3095 = vmatpush1.xpose.msra.mxu0 0.0
    %3096 = vmatprep.subr.mxu0 0.0
    %3097 = vmatpush1.xpose.msra.mxu0 0.0
    %3098 = vmatprep.subr.mxu0 0.0
    %3099 = vmatpush1.xpose.msra.mxu0 0.0
    %3100 = vmatprep.subr.mxu0 0.0
    %3101 = vmatpush1.xpose.msra.mxu0 %v3068
    %3102 = vmatprep.subr.mxu0 0.0
    %3103 = vmatpush2.xpose.msra.mxu0 0.0
    %3104 = vmatprep.subr.mxu0 0.0
    %3105 = vmatpush2.xpose.msra.mxu0 0.0
    %3106 = vmatprep.subr.mxu0 0.0
    %3107 = vmatpush2.xpose.msra.mxu0 0.0
    %3108 = vmatprep.subr.mxu0 0.0
    %3109 = vmatpush2.xpose.msra.mxu0 0.0
    %3110 = vmatprep.subr.mxu0 0.0
    %3111 = vmatpush2.xpose.msra.mxu0 0.0
    %3112 = vmatprep.subr.mxu0 0.0
    %3113 = vmatpush2.xpose.msra.mxu0 0.0
    %3114 = vmatprep.subr.mxu0 0.0
    %3115 = vmatpush2.xpose.msra.mxu0 0.0
    %3116 = vmatprep.subr.mxu0 0.0
    %3117 = vmatpush2.xpose.msra.mxu0 0.0
    %3118 = vmatprep.subr.mxu0 0.0
    %3119 = vmatpush2.xpose.msra.mxu0 0.0
    %3120 = vmatprep.subr.mxu0 0.0
    %3121 = vmatpush2.xpose.msra.mxu0 0.0
    %3122 = vmatprep.subr.mxu0 0.0
    %3123 = vmatpush2.xpose.msra.mxu0 0.0
    %3124 = vmatprep.subr.mxu0 0.0
    %3125 = vmatpush2.xpose.msra.mxu0 0.0
    %3126 = vmatprep.subr.mxu0 0.0
    %3127 = vmatpush2.xpose.msra.mxu0 0.0
    %3128 = vmatprep.subr.mxu0 0.0
    %3129 = vmatpush2.xpose.msra.mxu0 0.0
    %3130 = vmatprep.subr.mxu0 0.0
    %3131 = vmatpush2.xpose.msra.mxu0 0.0
    %3132 = vmatprep.subr.mxu0 0.0
    %3133 = vmatpush2.xpose.msra.mxu0 0.0
    %3134 = vmatprep.mubr.f32.mxu0 0.0
    %3135 = vmatmul.mubr.f32.gmra.mxu0 %v3066
    %v3136 = vpop.f32.mrf.mxu0
    %v3137 = vadd.f32 0.0, %v3136
    %v3138 = vpop.f32.mrf.mxu0
    %3139 = vdwg.mxu0
    %3140 = vrot.lane.b32.xlu0 %v2243, 112
    %v3141 = vpop.permute.xlu0 %3140
    %3142 = vrot.lane.b32.xlu0 %v2323, 112
    %v3143 = vpop.permute.xlu0 %3142
    %v3144 = vsel %vm421, %v3141, 0
    %v3146 = vsel %vm421, %v3143, 0
    %3148 = vmatprep.subr.mxu0 0.0
    %3149 = vmatpush1.xpose.msra.mxu0 0.0
    %3150 = vmatprep.subr.mxu0 0.0
    %3151 = vmatpush1.xpose.msra.mxu0 0.0
    %3152 = vmatprep.subr.mxu0 0.0
    %3153 = vmatpush1.xpose.msra.mxu0 0.0
    %3154 = vmatprep.subr.mxu0 0.0
    %3155 = vmatpush1.xpose.msra.mxu0 0.0
    %3156 = vmatprep.subr.mxu0 0.0
    %3157 = vmatpush1.xpose.msra.mxu0 0.0
    %3158 = vmatprep.subr.mxu0 0.0
    %3159 = vmatpush1.xpose.msra.mxu0 0.0
    %3160 = vmatprep.subr.mxu0 0.0
    %3161 = vmatpush1.xpose.msra.mxu0 0.0
    %3162 = vmatprep.subr.mxu0 0.0
    %3163 = vmatpush1.xpose.msra.mxu0 0.0
    %3164 = vmatprep.subr.mxu0 0.0
    %3165 = vmatpush1.xpose.msra.mxu0 0.0
    %3166 = vmatprep.subr.mxu0 0.0
    %3167 = vmatpush1.xpose.msra.mxu0 0.0
    %3168 = vmatprep.subr.mxu0 0.0
    %3169 = vmatpush1.xpose.msra.mxu0 0.0
    %3170 = vmatprep.subr.mxu0 0.0
    %3171 = vmatpush1.xpose.msra.mxu0 0.0
    %3172 = vmatprep.subr.mxu0 0.0
    %3173 = vmatpush1.xpose.msra.mxu0 0.0
    %3174 = vmatprep.subr.mxu0 0.0
    %3175 = vmatpush1.xpose.msra.mxu0 0.0
    %3176 = vmatprep.subr.mxu0 0.0
    %3177 = vmatpush1.xpose.msra.mxu0 0.0
    %3178 = vmatprep.subr.mxu0 0.0
    %3179 = vmatpush1.xpose.msra.mxu0 %v3146
    %3180 = vmatprep.subr.mxu0 0.0
    %3181 = vmatpush2.xpose.msra.mxu0 0.0
    %3182 = vmatprep.subr.mxu0 0.0
    %3183 = vmatpush2.xpose.msra.mxu0 0.0
    %3184 = vmatprep.subr.mxu0 0.0
    %3185 = vmatpush2.xpose.msra.mxu0 0.0
    %3186 = vmatprep.subr.mxu0 0.0
    %3187 = vmatpush2.xpose.msra.mxu0 0.0
    %3188 = vmatprep.subr.mxu0 0.0
    %3189 = vmatpush2.xpose.msra.mxu0 0.0
    %3190 = vmatprep.subr.mxu0 0.0
    %3191 = vmatpush2.xpose.msra.mxu0 0.0
    %3192 = vmatprep.subr.mxu0 0.0
    %3193 = vmatpush2.xpose.msra.mxu0 0.0
    %3194 = vmatprep.subr.mxu0 0.0
    %3195 = vmatpush2.xpose.msra.mxu0 0.0
    %3196 = vmatprep.subr.mxu0 0.0
    %3197 = vmatpush2.xpose.msra.mxu0 0.0
    %3198 = vmatprep.subr.mxu0 0.0
    %3199 = vmatpush2.xpose.msra.mxu0 0.0
    %3200 = vmatprep.subr.mxu0 0.0
    %3201 = vmatpush2.xpose.msra.mxu0 0.0
    %3202 = vmatprep.subr.mxu0 0.0
    %3203 = vmatpush2.xpose.msra.mxu0 0.0
    %3204 = vmatprep.subr.mxu0 0.0
    %3205 = vmatpush2.xpose.msra.mxu0 0.0
    %3206 = vmatprep.subr.mxu0 0.0
    %3207 = vmatpush2.xpose.msra.mxu0 0.0
    %3208 = vmatprep.subr.mxu0 0.0
    %3209 = vmatpush2.xpose.msra.mxu0 0.0
    %3210 = vmatprep.subr.mxu0 0.0
    %3211 = vmatpush2.xpose.msra.mxu0 0.0
    %3212 = vmatprep.mubr.f32.mxu0 0.0
    %3213 = vmatmul.mubr.f32.gmra.mxu0 %v3144
    %v3214 = vpop.f32.mrf.mxu0
    %v3215 = vadd.f32 0.0, %v3214
    %v3216 = vpop.f32.mrf.mxu0
    %3217 = vdwg.mxu0
    %v3218 = vmul.f32 %v3137, 0.35355338
    %v3219 = vmul.f32 %v3215, 0.35355338
    %v3220 = vsel %vm421, %v3218, -inf
    %3221 = vmax.xlane.f32.xlu0 %v3220
    %v3222 = vpop.xlane.xlu0 %3221
    %v3223 = vsel %vm421, %v3219, -inf
    %3224 = vmax.xlane.f32.xlu0 %v3223
    %v3225 = vpop.xlane.xlu0 %3224
    %v3226 = vsub.f32 %v3218, %v3222
    %v3227 = vsub.f32 %v3219, %v3225
    %v3228 = vmul.f32 %v3226, 1.442695
    %v3229 = vpow.pop %v3228
    %v3230 = vmul.f32 %v3227, 1.442695
    %v3231 = vpow.pop %v3230
    %v3232 = vsel %vm421, %v3229, 0.0
    %3233 = vadd.xlane.f32.xlu0 %v3232
    %v3234 = vpop.xlane.xlu0 %3233
    %v3235 = vsel %vm421, %v3231, 0.0
    %3236 = vadd.xlane.f32.xlu0 %v3235
    %v3237 = vpop.xlane.xlu0 %3236
    %v3238 = vrcp.pop %v3234
    %v3239 = vrcp.pop %v3237
    %v3240 = vmul.f32 %v3229, %v3238
    %v3241 = vmul.f32 %v3231, %v3239
    %3242 = vrot.lane.b32.xlu0 %v2398, 112
    %v3243 = vpop.permute.xlu0 %3242
    %v3246 = vsel %vm421, %v3240, 0
    %3248 = vmatprep.subr.mxu0 0.0
    %3249 = vmatpush1.msra.mxu0 0.0
    %3250 = vmatprep.subr.mxu0 0.0
    %3251 = vmatpush1.msra.mxu0 0.0
    %3252 = vmatprep.subr.mxu0 0.0
    %3253 = vmatpush1.msra.mxu0 0.0
    %3254 = vmatprep.subr.mxu0 0.0
    %3255 = vmatpush1.msra.mxu0 0.0
    %3256 = vmatprep.subr.mxu0 0.0
    %3257 = vmatpush1.msra.mxu0 0.0
    %3258 = vmatprep.subr.mxu0 0.0
    %3259 = vmatpush1.msra.mxu0 0.0
    %3260 = vmatprep.subr.mxu0 0.0
    %3261 = vmatpush1.msra.mxu0 0.0
    %3262 = vmatprep.subr.mxu0 0.0
    %3263 = vmatpush1.msra.mxu0 0.0
    %3264 = vmatprep.subr.mxu0 0.0
    %3265 = vmatpush1.msra.mxu0 0.0
    %3266 = vmatprep.subr.mxu0 0.0
    %3267 = vmatpush1.msra.mxu0 0.0
    %3268 = vmatprep.subr.mxu0 0.0
    %3269 = vmatpush1.msra.mxu0 0.0
    %3270 = vmatprep.subr.mxu0 0.0
    %3271 = vmatpush1.msra.mxu0 0.0
    %3272 = vmatprep.subr.mxu0 0.0
    %3273 = vmatpush1.msra.mxu0 0.0
    %3274 = vmatprep.subr.mxu0 0.0
    %3275 = vmatpush1.msra.mxu0 0.0
    %3276 = vmatprep.subr.mxu0 0.0
    %3277 = vmatpush1.msra.mxu0 0.0
    %3278 = vmatprep.subr.mxu0 0.0
    %3279 = vmatpush1.msra.mxu0 %v3243
    %3280 = vmatprep.subr.mxu0 0.0
    %3281 = vmatpush2.msra.mxu0 0.0
    %3282 = vmatprep.subr.mxu0 0.0
    %3283 = vmatpush2.msra.mxu0 0.0
    %3284 = vmatprep.subr.mxu0 0.0
    %3285 = vmatpush2.msra.mxu0 0.0
    %3286 = vmatprep.subr.mxu0 0.0
    %3287 = vmatpush2.msra.mxu0 0.0
    %3288 = vmatprep.subr.mxu0 0.0
    %3289 = vmatpush2.msra.mxu0 0.0
    %3290 = vmatprep.subr.mxu0 0.0
    %3291 = vmatpush2.msra.mxu0 0.0
    %3292 = vmatprep.subr.mxu0 0.0
    %3293 = vmatpush2.msra.mxu0 0.0
    %3294 = vmatprep.subr.mxu0 0.0
    %3295 = vmatpush2.msra.mxu0 0.0
    %3296 = vmatprep.subr.mxu0 0.0
    %3297 = vmatpush2.msra.mxu0 0.0
    %3298 = vmatprep.subr.mxu0 0.0
    %3299 = vmatpush2.msra.mxu0 0.0
    %3300 = vmatprep.subr.mxu0 0.0
    %3301 = vmatpush2.msra.mxu0 0.0
    %3302 = vmatprep.subr.mxu0 0.0
    %3303 = vmatpush2.msra.mxu0 0.0
    %3304 = vmatprep.subr.mxu0 0.0
    %3305 = vmatpush2.msra.mxu0 0.0
    %3306 = vmatprep.subr.mxu0 0.0
    %3307 = vmatpush2.msra.mxu0 0.0
    %3308 = vmatprep.subr.mxu0 0.0
    %3309 = vmatpush2.msra.mxu0 0.0
    %3310 = vmatprep.subr.mxu0 0.0
    %3311 = vmatpush2.msra.mxu0 0.0
    %3312 = vmatprep.mubr.f32.mxu0 0.0
    %3313 = vmatmul.mubr.f32.gmra.mxu0 %v3246
    %v3314 = vpop.f32.mrf.mxu0
    %v3315 = vadd.f32 0.0, %v3314
    %v3316 = vpop.f32.mrf.mxu0
    %3317 = vdwg.mxu0
    %3318 = vrot.lane.b32.xlu0 %v2403, 112
    %v3319 = vpop.permute.xlu0 %3318
    %v3322 = vsel %vm421, %v3241, 0
    %3324 = vmatprep.subr.mxu0 0.0
    %3325 = vmatpush1.msra.mxu0 0.0
    %3326 = vmatprep.subr.mxu0 0.0
    %3327 = vmatpush1.msra.mxu0 0.0
    %3328 = vmatprep.subr.mxu0 0.0
    %3329 = vmatpush1.msra.mxu0 0.0
    %3330 = vmatprep.subr.mxu0 0.0
    %3331 = vmatpush1.msra.mxu0 0.0
    %3332 = vmatprep.subr.mxu0 0.0
    %3333 = vmatpush1.msra.mxu0 0.0
    %3334 = vmatprep.subr.mxu0 0.0
    %3335 = vmatpush1.msra.mxu0 0.0
    %3336 = vmatprep.subr.mxu0 0.0
    %3337 = vmatpush1.msra.mxu0 0.0
    %3338 = vmatprep.subr.mxu0 0.0
    %3339 = vmatpush1.msra.mxu0 0.0
    %3340 = vmatprep.subr.mxu0 0.0
    %3341 = vmatpush1.msra.mxu0 0.0
    %3342 = vmatprep.subr.mxu0 0.0
    %3343 = vmatpush1.msra.mxu0 0.0
    %3344 = vmatprep.subr.mxu0 0.0
    %3345 = vmatpush1.msra.mxu0 0.0
    %3346 = vmatprep.subr.mxu0 0.0
    %3347 = vmatpush1.msra.mxu0 0.0
    %3348 = vmatprep.subr.mxu0 0.0
    %3349 = vmatpush1.msra.mxu0 0.0
    %3350 = vmatprep.subr.mxu0 0.0
    %3351 = vmatpush1.msra.mxu0 0.0
    %3352 = vmatprep.subr.mxu0 0.0
    %3353 = vmatpush1.msra.mxu0 0.0
    %3354 = vmatprep.subr.mxu0 0.0
    %3355 = vmatpush1.msra.mxu0 %v3319
    %3356 = vmatprep.subr.mxu0 0.0
    %3357 = vmatpush2.msra.mxu0 0.0
    %3358 = vmatprep.subr.mxu0 0.0
    %3359 = vmatpush2.msra.mxu0 0.0
    %3360 = vmatprep.subr.mxu0 0.0
    %3361 = vmatpush2.msra.mxu0 0.0
    %3362 = vmatprep.subr.mxu0 0.0
    %3363 = vmatpush2.msra.mxu0 0.0
    %3364 = vmatprep.subr.mxu0 0.0
    %3365 = vmatpush2.msra.mxu0 0.0
    %3366 = vmatprep.subr.mxu0 0.0
    %3367 = vmatpush2.msra.mxu0 0.0
    %3368 = vmatprep.subr.mxu0 0.0
    %3369 = vmatpush2.msra.mxu0 0.0
    %3370 = vmatprep.subr.mxu0 0.0
    %3371 = vmatpush2.msra.mxu0 0.0
    %3372 = vmatprep.subr.mxu0 0.0
    %3373 = vmatpush2.msra.mxu0 0.0
    %3374 = vmatprep.subr.mxu0 0.0
    %3375 = vmatpush2.msra.mxu0 0.0
    %3376 = vmatprep.subr.mxu0 0.0
    %3377 = vmatpush2.msra.mxu0 0.0
    %3378 = vmatprep.subr.mxu0 0.0
    %3379 = vmatpush2.msra.mxu0 0.0
    %3380 = vmatprep.subr.mxu0 0.0
    %3381 = vmatpush2.msra.mxu0 0.0
    %3382 = vmatprep.subr.mxu0 0.0
    %3383 = vmatpush2.msra.mxu0 0.0
    %3384 = vmatprep.subr.mxu0 0.0
    %3385 = vmatpush2.msra.mxu0 0.0
    %3386 = vmatprep.subr.mxu0 0.0
    %3387 = vmatpush2.msra.mxu0 0.0
    %3388 = vmatprep.mubr.f32.mxu0 0.0
    %3389 = vmatmul.mubr.f32.gmra.mxu0 %v3322
    %v3390 = vpop.f32.mrf.mxu0
    %v3391 = vadd.f32 0.0, %v3390
    %v3392 = vpop.f32.mrf.mxu0
    %3393 = vdwg.mxu0
    %3394 = vrot.lane.b32.xlu0 %v2238, 104
    %v3395 = vpop.permute.xlu0 %3394
    %3396 = vrot.lane.b32.xlu0 %v2318, 104
    %v3397 = vpop.permute.xlu0 %3396
    %v3398 = vsel %vm421, %v3395, 0
    %v3400 = vsel %vm421, %v3397, 0
    %3402 = vmatprep.subr.mxu0 0.0
    %3403 = vmatpush1.xpose.msra.mxu0 0.0
    %3404 = vmatprep.subr.mxu0 0.0
    %3405 = vmatpush1.xpose.msra.mxu0 0.0
    %3406 = vmatprep.subr.mxu0 0.0
    %3407 = vmatpush1.xpose.msra.mxu0 0.0
    %3408 = vmatprep.subr.mxu0 0.0
    %3409 = vmatpush1.xpose.msra.mxu0 0.0
    %3410 = vmatprep.subr.mxu0 0.0
    %3411 = vmatpush1.xpose.msra.mxu0 0.0
    %3412 = vmatprep.subr.mxu0 0.0
    %3413 = vmatpush1.xpose.msra.mxu0 0.0
    %3414 = vmatprep.subr.mxu0 0.0
    %3415 = vmatpush1.xpose.msra.mxu0 0.0
    %3416 = vmatprep.subr.mxu0 0.0
    %3417 = vmatpush1.xpose.msra.mxu0 0.0
    %3418 = vmatprep.subr.mxu0 0.0
    %3419 = vmatpush1.xpose.msra.mxu0 0.0
    %3420 = vmatprep.subr.mxu0 0.0
    %3421 = vmatpush1.xpose.msra.mxu0 0.0
    %3422 = vmatprep.subr.mxu0 0.0
    %3423 = vmatpush1.xpose.msra.mxu0 0.0
    %3424 = vmatprep.subr.mxu0 0.0
    %3425 = vmatpush1.xpose.msra.mxu0 0.0
    %3426 = vmatprep.subr.mxu0 0.0
    %3427 = vmatpush1.xpose.msra.mxu0 0.0
    %3428 = vmatprep.subr.mxu0 0.0
    %3429 = vmatpush1.xpose.msra.mxu0 0.0
    %3430 = vmatprep.subr.mxu0 0.0
    %3431 = vmatpush1.xpose.msra.mxu0 0.0
    %3432 = vmatprep.subr.mxu0 0.0
    %3433 = vmatpush1.xpose.msra.mxu0 %v3400
    %3434 = vmatprep.subr.mxu0 0.0
    %3435 = vmatpush2.xpose.msra.mxu0 0.0
    %3436 = vmatprep.subr.mxu0 0.0
    %3437 = vmatpush2.xpose.msra.mxu0 0.0
    %3438 = vmatprep.subr.mxu0 0.0
    %3439 = vmatpush2.xpose.msra.mxu0 0.0
    %3440 = vmatprep.subr.mxu0 0.0
    %3441 = vmatpush2.xpose.msra.mxu0 0.0
    %3442 = vmatprep.subr.mxu0 0.0
    %3443 = vmatpush2.xpose.msra.mxu0 0.0
    %3444 = vmatprep.subr.mxu0 0.0
    %3445 = vmatpush2.xpose.msra.mxu0 0.0
    %3446 = vmatprep.subr.mxu0 0.0
    %3447 = vmatpush2.xpose.msra.mxu0 0.0
    %3448 = vmatprep.subr.mxu0 0.0
    %3449 = vmatpush2.xpose.msra.mxu0 0.0
    %3450 = vmatprep.subr.mxu0 0.0
    %3451 = vmatpush2.xpose.msra.mxu0 0.0
    %3452 = vmatprep.subr.mxu0 0.0
    %3453 = vmatpush2.xpose.msra.mxu0 0.0
    %3454 = vmatprep.subr.mxu0 0.0
    %3455 = vmatpush2.xpose.msra.mxu0 0.0
    %3456 = vmatprep.subr.mxu0 0.0
    %3457 = vmatpush2.xpose.msra.mxu0 0.0
    %3458 = vmatprep.subr.mxu0 0.0
    %3459 = vmatpush2.xpose.msra.mxu0 0.0
    %3460 = vmatprep.subr.mxu0 0.0
    %3461 = vmatpush2.xpose.msra.mxu0 0.0
    %3462 = vmatprep.subr.mxu0 0.0
    %3463 = vmatpush2.xpose.msra.mxu0 0.0
    %3464 = vmatprep.subr.mxu0 0.0
    %3465 = vmatpush2.xpose.msra.mxu0 0.0
    %3466 = vmatprep.mubr.f32.mxu0 0.0
    %3467 = vmatmul.mubr.f32.gmra.mxu0 %v3398
    %v3468 = vpop.f32.mrf.mxu0
    %v3469 = vadd.f32 0.0, %v3468
    %v3470 = vpop.f32.mrf.mxu0
    %3471 = vdwg.mxu0
    %3472 = vrot.lane.b32.xlu0 %v2243, 104
    %v3473 = vpop.permute.xlu0 %3472
    %3474 = vrot.lane.b32.xlu0 %v2323, 104
    %v3475 = vpop.permute.xlu0 %3474
    %v3476 = vsel %vm421, %v3473, 0
    %v3478 = vsel %vm421, %v3475, 0
    %3480 = vmatprep.subr.mxu0 0.0
    %3481 = vmatpush1.xpose.msra.mxu0 0.0
    %3482 = vmatprep.subr.mxu0 0.0
    %3483 = vmatpush1.xpose.msra.mxu0 0.0
    %3484 = vmatprep.subr.mxu0 0.0
    %3485 = vmatpush1.xpose.msra.mxu0 0.0
    %3486 = vmatprep.subr.mxu0 0.0
    %3487 = vmatpush1.xpose.msra.mxu0 0.0
    %3488 = vmatprep.subr.mxu0 0.0
    %3489 = vmatpush1.xpose.msra.mxu0 0.0
    %3490 = vmatprep.subr.mxu0 0.0
    %3491 = vmatpush1.xpose.msra.mxu0 0.0
    %3492 = vmatprep.subr.mxu0 0.0
    %3493 = vmatpush1.xpose.msra.mxu0 0.0
    %3494 = vmatprep.subr.mxu0 0.0
    %3495 = vmatpush1.xpose.msra.mxu0 0.0
    %3496 = vmatprep.subr.mxu0 0.0
    %3497 = vmatpush1.xpose.msra.mxu0 0.0
    %3498 = vmatprep.subr.mxu0 0.0
    %3499 = vmatpush1.xpose.msra.mxu0 0.0
    %3500 = vmatprep.subr.mxu0 0.0
    %3501 = vmatpush1.xpose.msra.mxu0 0.0
    %3502 = vmatprep.subr.mxu0 0.0
    %3503 = vmatpush1.xpose.msra.mxu0 0.0
    %3504 = vmatprep.subr.mxu0 0.0
    %3505 = vmatpush1.xpose.msra.mxu0 0.0
    %3506 = vmatprep.subr.mxu0 0.0
    %3507 = vmatpush1.xpose.msra.mxu0 0.0
    %3508 = vmatprep.subr.mxu0 0.0
    %3509 = vmatpush1.xpose.msra.mxu0 0.0
    %3510 = vmatprep.subr.mxu0 0.0
    %3511 = vmatpush1.xpose.msra.mxu0 %v3478
    %3512 = vmatprep.subr.mxu0 0.0
    %3513 = vmatpush2.xpose.msra.mxu0 0.0
    %3514 = vmatprep.subr.mxu0 0.0
    %3515 = vmatpush2.xpose.msra.mxu0 0.0
    %3516 = vmatprep.subr.mxu0 0.0
    %3517 = vmatpush2.xpose.msra.mxu0 0.0
    %3518 = vmatprep.subr.mxu0 0.0
    %3519 = vmatpush2.xpose.msra.mxu0 0.0
    %3520 = vmatprep.subr.mxu0 0.0
    %3521 = vmatpush2.xpose.msra.mxu0 0.0
    %3522 = vmatprep.subr.mxu0 0.0
    %3523 = vmatpush2.xpose.msra.mxu0 0.0
    %3524 = vmatprep.subr.mxu0 0.0
    %3525 = vmatpush2.xpose.msra.mxu0 0.0
    %3526 = vmatprep.subr.mxu0 0.0
    %3527 = vmatpush2.xpose.msra.mxu0 0.0
    %3528 = vmatprep.subr.mxu0 0.0
    %3529 = vmatpush2.xpose.msra.mxu0 0.0
    %3530 = vmatprep.subr.mxu0 0.0
    %3531 = vmatpush2.xpose.msra.mxu0 0.0
    %3532 = vmatprep.subr.mxu0 0.0
    %3533 = vmatpush2.xpose.msra.mxu0 0.0
    %3534 = vmatprep.subr.mxu0 0.0
    %3535 = vmatpush2.xpose.msra.mxu0 0.0
    %3536 = vmatprep.subr.mxu0 0.0
    %3537 = vmatpush2.xpose.msra.mxu0 0.0
    %3538 = vmatprep.subr.mxu0 0.0
    %3539 = vmatpush2.xpose.msra.mxu0 0.0
    %3540 = vmatprep.subr.mxu0 0.0
    %3541 = vmatpush2.xpose.msra.mxu0 0.0
    %3542 = vmatprep.subr.mxu0 0.0
    %3543 = vmatpush2.xpose.msra.mxu0 0.0
    %3544 = vmatprep.mubr.f32.mxu0 0.0
    %3545 = vmatmul.mubr.f32.gmra.mxu0 %v3476
    %v3546 = vpop.f32.mrf.mxu0
    %v3547 = vadd.f32 0.0, %v3546
    %v3548 = vpop.f32.mrf.mxu0
    %3549 = vdwg.mxu0
    %v3550 = vmul.f32 %v3469, 0.35355338
    %v3551 = vmul.f32 %v3547, 0.35355338
    %v3552 = vsel %vm421, %v3550, -inf
    %3553 = vmax.xlane.f32.xlu0 %v3552
    %v3554 = vpop.xlane.xlu0 %3553
    %v3555 = vsel %vm421, %v3551, -inf
    %3556 = vmax.xlane.f32.xlu0 %v3555
    %v3557 = vpop.xlane.xlu0 %3556
    %v3558 = vsub.f32 %v3550, %v3554
    %v3559 = vsub.f32 %v3551, %v3557
    %v3560 = vmul.f32 %v3558, 1.442695
    %v3561 = vpow.pop %v3560
    %v3562 = vmul.f32 %v3559, 1.442695
    %v3563 = vpow.pop %v3562
    %v3564 = vsel %vm421, %v3561, 0.0
    %3565 = vadd.xlane.f32.xlu0 %v3564
    %v3566 = vpop.xlane.xlu0 %3565
    %v3567 = vsel %vm421, %v3563, 0.0
    %3568 = vadd.xlane.f32.xlu0 %v3567
    %v3569 = vpop.xlane.xlu0 %3568
    %v3570 = vrcp.pop %v3566
    %v3571 = vrcp.pop %v3569
    %v3572 = vmul.f32 %v3561, %v3570
    %v3573 = vmul.f32 %v3563, %v3571
    %3574 = vrot.lane.b32.xlu0 %v2398, 104
    %v3575 = vpop.permute.xlu0 %3574
    %v3578 = vsel %vm421, %v3572, 0
    %3580 = vmatprep.subr.mxu0 0.0
    %3581 = vmatpush1.msra.mxu0 0.0
    %3582 = vmatprep.subr.mxu0 0.0
    %3583 = vmatpush1.msra.mxu0 0.0
    %3584 = vmatprep.subr.mxu0 0.0
    %3585 = vmatpush1.msra.mxu0 0.0
    %3586 = vmatprep.subr.mxu0 0.0
    %3587 = vmatpush1.msra.mxu0 0.0
    %3588 = vmatprep.subr.mxu0 0.0
    %3589 = vmatpush1.msra.mxu0 0.0
    %3590 = vmatprep.subr.mxu0 0.0
    %3591 = vmatpush1.msra.mxu0 0.0
    %3592 = vmatprep.subr.mxu0 0.0
    %3593 = vmatpush1.msra.mxu0 0.0
    %3594 = vmatprep.subr.mxu0 0.0
    %3595 = vmatpush1.msra.mxu0 0.0
    %3596 = vmatprep.subr.mxu0 0.0
    %3597 = vmatpush1.msra.mxu0 0.0
    %3598 = vmatprep.subr.mxu0 0.0
    %3599 = vmatpush1.msra.mxu0 0.0
    %3600 = vmatprep.subr.mxu0 0.0
    %3601 = vmatpush1.msra.mxu0 0.0
    %3602 = vmatprep.subr.mxu0 0.0
    %3603 = vmatpush1.msra.mxu0 0.0
    %3604 = vmatprep.subr.mxu0 0.0
    %3605 = vmatpush1.msra.mxu0 0.0
    %3606 = vmatprep.subr.mxu0 0.0
    %3607 = vmatpush1.msra.mxu0 0.0
    %3608 = vmatprep.subr.mxu0 0.0
    %3609 = vmatpush1.msra.mxu0 0.0
    %3610 = vmatprep.subr.mxu0 0.0
    %3611 = vmatpush1.msra.mxu0 %v3575
    %3612 = vmatprep.subr.mxu0 0.0
    %3613 = vmatpush2.msra.mxu0 0.0
    %3614 = vmatprep.subr.mxu0 0.0
    %3615 = vmatpush2.msra.mxu0 0.0
    %3616 = vmatprep.subr.mxu0 0.0
    %3617 = vmatpush2.msra.mxu0 0.0
    %3618 = vmatprep.subr.mxu0 0.0
    %3619 = vmatpush2.msra.mxu0 0.0
    %3620 = vmatprep.subr.mxu0 0.0
    %3621 = vmatpush2.msra.mxu0 0.0
    %3622 = vmatprep.subr.mxu0 0.0
    %3623 = vmatpush2.msra.mxu0 0.0
    %3624 = vmatprep.subr.mxu0 0.0
    %3625 = vmatpush2.msra.mxu0 0.0
    %3626 = vmatprep.subr.mxu0 0.0
    %3627 = vmatpush2.msra.mxu0 0.0
    %3628 = vmatprep.subr.mxu0 0.0
    %3629 = vmatpush2.msra.mxu0 0.0
    %3630 = vmatprep.subr.mxu0 0.0
    %3631 = vmatpush2.msra.mxu0 0.0
    %3632 = vmatprep.subr.mxu0 0.0
    %3633 = vmatpush2.msra.mxu0 0.0
    %3634 = vmatprep.subr.mxu0 0.0
    %3635 = vmatpush2.msra.mxu0 0.0
    %3636 = vmatprep.subr.mxu0 0.0
    %3637 = vmatpush2.msra.mxu0 0.0
    %3638 = vmatprep.subr.mxu0 0.0
    %3639 = vmatpush2.msra.mxu0 0.0
    %3640 = vmatprep.subr.mxu0 0.0
    %3641 = vmatpush2.msra.mxu0 0.0
    %3642 = vmatprep.subr.mxu0 0.0
    %3643 = vmatpush2.msra.mxu0 0.0
    %3644 = vmatprep.mubr.f32.mxu0 0.0
    %3645 = vmatmul.mubr.f32.gmra.mxu0 %v3578
    %v3646 = vpop.f32.mrf.mxu0
    %v3647 = vadd.f32 0.0, %v3646
    %v3648 = vpop.f32.mrf.mxu0
    %3649 = vdwg.mxu0
    %3650 = vrot.lane.b32.xlu0 %v2403, 104
    %v3651 = vpop.permute.xlu0 %3650
    %v3654 = vsel %vm421, %v3573, 0
    %3656 = vmatprep.subr.mxu0 0.0
    %3657 = vmatpush1.msra.mxu0 0.0
    %3658 = vmatprep.subr.mxu0 0.0
    %3659 = vmatpush1.msra.mxu0 0.0
    %3660 = vmatprep.subr.mxu0 0.0
    %3661 = vmatpush1.msra.mxu0 0.0
    %3662 = vmatprep.subr.mxu0 0.0
    %3663 = vmatpush1.msra.mxu0 0.0
    %3664 = vmatprep.subr.mxu0 0.0
    %3665 = vmatpush1.msra.mxu0 0.0
    %3666 = vmatprep.subr.mxu0 0.0
    %3667 = vmatpush1.msra.mxu0 0.0
    %3668 = vmatprep.subr.mxu0 0.0
    %3669 = vmatpush1.msra.mxu0 0.0
    %3670 = vmatprep.subr.mxu0 0.0
    %3671 = vmatpush1.msra.mxu0 0.0
    %3672 = vmatprep.subr.mxu0 0.0
    %3673 = vmatpush1.msra.mxu0 0.0
    %3674 = vmatprep.subr.mxu0 0.0
    %3675 = vmatpush1.msra.mxu0 0.0
    %3676 = vmatprep.subr.mxu0 0.0
    %3677 = vmatpush1.msra.mxu0 0.0
    %3678 = vmatprep.subr.mxu0 0.0
    %3679 = vmatpush1.msra.mxu0 0.0
    %3680 = vmatprep.subr.mxu0 0.0
    %3681 = vmatpush1.msra.mxu0 0.0
    %3682 = vmatprep.subr.mxu0 0.0
    %3683 = vmatpush1.msra.mxu0 0.0
    %3684 = vmatprep.subr.mxu0 0.0
    %3685 = vmatpush1.msra.mxu0 0.0
    %3686 = vmatprep.subr.mxu0 0.0
    %3687 = vmatpush1.msra.mxu0 %v3651
    %3688 = vmatprep.subr.mxu0 0.0
    %3689 = vmatpush2.msra.mxu0 0.0
    %3690 = vmatprep.subr.mxu0 0.0
    %3691 = vmatpush2.msra.mxu0 0.0
    %3692 = vmatprep.subr.mxu0 0.0
    %3693 = vmatpush2.msra.mxu0 0.0
    %3694 = vmatprep.subr.mxu0 0.0
    %3695 = vmatpush2.msra.mxu0 0.0
    %3696 = vmatprep.subr.mxu0 0.0
    %3697 = vmatpush2.msra.mxu0 0.0
    %3698 = vmatprep.subr.mxu0 0.0
    %3699 = vmatpush2.msra.mxu0 0.0
    %3700 = vmatprep.subr.mxu0 0.0
    %3701 = vmatpush2.msra.mxu0 0.0
    %3702 = vmatprep.subr.mxu0 0.0
    %3703 = vmatpush2.msra.mxu0 0.0
    %3704 = vmatprep.subr.mxu0 0.0
    %3705 = vmatpush2.msra.mxu0 0.0
    %3706 = vmatprep.subr.mxu0 0.0
    %3707 = vmatpush2.msra.mxu0 0.0
    %3708 = vmatprep.subr.mxu0 0.0
    %3709 = vmatpush2.msra.mxu0 0.0
    %3710 = vmatprep.subr.mxu0 0.0
    %3711 = vmatpush2.msra.mxu0 0.0
    %3712 = vmatprep.subr.mxu0 0.0
    %3713 = vmatpush2.msra.mxu0 0.0
    %3714 = vmatprep.subr.mxu0 0.0
    %3715 = vmatpush2.msra.mxu0 0.0
    %3716 = vmatprep.subr.mxu0 0.0
    %3717 = vmatpush2.msra.mxu0 0.0
    %3718 = vmatprep.subr.mxu0 0.0
    %3719 = vmatpush2.msra.mxu0 0.0
    %3720 = vmatprep.mubr.f32.mxu0 0.0
    %3721 = vmatmul.mubr.f32.gmra.mxu0 %v3654
    %v3722 = vpop.f32.mrf.mxu0
    %v3723 = vadd.f32 0.0, %v3722
    %v3724 = vpop.f32.mrf.mxu0
    %3725 = vdwg.mxu0
    %3728 = vrot.lane.b32.xlu0 %v2982, 8
    %v3729 = vpop.permute.xlu0 %3728
    %3730 = vrot.lane.b32.xlu0 %v3059, 8
    %v3731 = vpop.permute.xlu0 %3730
    %3736 = vrot.lane.b32.xlu0 %v3315, 16
    %v3737 = vpop.permute.xlu0 %3736
    %3738 = vrot.lane.b32.xlu0 %v3391, 16
    %v3739 = vpop.permute.xlu0 %3738
    %3744 = vrot.lane.b32.xlu0 %v3647, 24
    %v3745 = vpop.permute.xlu0 %3744
    %3746 = vrot.lane.b32.xlu0 %v3723, 24
    %v3747 = vpop.permute.xlu0 %3746
    %v3750 = vsel %vm421, %v2652, %v3729
    %v3751 = vsel %vm421, %v2725, %v3731
    %v3752 = vsel %vm1768, %v3750, %v3737
    %v3753 = vsel %vm1768, %v3751, %v3739
    %v3754 = vsel %vm1771, %v3752, %v3745
    %v3755 = vsel %vm1771, %v3753, %v3747
    %s3756 = scalar_lea.vmem [#allocation7], 32
    %v3757 = vld [vmem:[%s3756] sm:$0xff]
    %v3758 = vld [vmem:[%s3756 + $0x8] sm:$0xff]
    %v3759 = vld [vmem:[%s3756 + $0x10] sm:$0xff]
    %v3760 = vld [vmem:[%s3756 + $0x18] sm:$0xff]
    %s3761 = scalar_lea.vmem %s7, 1
    %v3762 = vld [vmem:[%s3761] sm:$0x1]
    %v3764 = vlaneseq
    %v3765 = vshrl.u32 %v3764, 7
    %v3766 = vsub.s32 0, %v3765
    %v3767 = vrot.slane %v3762, %v3766
    %v3770 = vsel %vm134, %v3754, 0
    %v3773 = vsel %vm134, %v3755, 0
    %3775 = vmatprep.subr.mxu0 0.0
    %3776 = vmatpush1.msra.mxu0 0.0
    %3777 = vmatprep.subr.mxu0 0.0
    %3778 = vmatpush1.msra.mxu0 0.0
    %3779 = vmatprep.subr.mxu0 0.0
    %3780 = vmatpush1.msra.mxu0 0.0
    %3781 = vmatprep.subr.mxu0 0.0
    %3782 = vmatpush1.msra.mxu0 0.0
    %3783 = vmatprep.subr.mxu0 0.0
    %3784 = vmatpush1.msra.mxu0 0.0
    %3785 = vmatprep.subr.mxu0 0.0
    %3786 = vmatpush1.msra.mxu0 0.0
    %3787 = vmatprep.subr.mxu0 0.0
    %3788 = vmatpush1.msra.mxu0 0.0
    %3789 = vmatprep.subr.mxu0 0.0
    %3790 = vmatpush1.msra.mxu0 0.0
    %3791 = vmatprep.subr.mxu0 0.0
    %3792 = vmatpush1.msra.mxu0 0.0
    %3793 = vmatprep.subr.mxu0 0.0
    %3794 = vmatpush1.msra.mxu0 0.0
    %3795 = vmatprep.subr.mxu0 0.0
    %3796 = vmatpush1.msra.mxu0 0.0
    %3797 = vmatprep.subr.mxu0 0.0
    %3798 = vmatpush1.msra.mxu0 0.0
    %3799 = vmatprep.subr.mxu0 0.0
    %3800 = vmatpush1.msra.mxu0 %v3760
    %3801 = vmatprep.subr.mxu0 0.0
    %3802 = vmatpush1.msra.mxu0 %v3759
    %3803 = vmatprep.subr.mxu0 0.0
    %3804 = vmatpush1.msra.mxu0 %v3758
    %3805 = vmatprep.subr.mxu0 0.0
    %3806 = vmatpush1.msra.mxu0 %v3757
    %3807 = vmatprep.subr.mxu0 0.0
    %3808 = vmatpush2.msra.mxu0 0.0
    %3809 = vmatprep.subr.mxu0 0.0
    %3810 = vmatpush2.msra.mxu0 0.0
    %3811 = vmatprep.subr.mxu0 0.0
    %3812 = vmatpush2.msra.mxu0 0.0
    %3813 = vmatprep.subr.mxu0 0.0
    %3814 = vmatpush2.msra.mxu0 0.0
    %3815 = vmatprep.subr.mxu0 0.0
    %3816 = vmatpush2.msra.mxu0 0.0
    %3817 = vmatprep.subr.mxu0 0.0
    %3818 = vmatpush2.msra.mxu0 0.0
    %3819 = vmatprep.subr.mxu0 0.0
    %3820 = vmatpush2.msra.mxu0 0.0
    %3821 = vmatprep.subr.mxu0 0.0
    %3822 = vmatpush2.msra.mxu0 0.0
    %3823 = vmatprep.subr.mxu0 0.0
    %3824 = vmatpush2.msra.mxu0 0.0
    %3825 = vmatprep.subr.mxu0 0.0
    %3826 = vmatpush2.msra.mxu0 0.0
    %3827 = vmatprep.subr.mxu0 0.0
    %3828 = vmatpush2.msra.mxu0 0.0
    %3829 = vmatprep.subr.mxu0 0.0
    %3830 = vmatpush2.msra.mxu0 0.0
    %3831 = vmatprep.subr.mxu0 0.0
    %3832 = vmatpush2.msra.mxu0 0.0
    %3833 = vmatprep.subr.mxu0 0.0
    %3834 = vmatpush2.msra.mxu0 0.0
    %3835 = vmatprep.subr.mxu0 0.0
    %3836 = vmatpush2.msra.mxu0 0.0
    %3837 = vmatprep.subr.mxu0 0.0
    %3838 = vmatpush2.msra.mxu0 0.0
    %3839 = vmatprep.mubr.f32.mxu0 0.0
    %3840 = vmatmul.mubr.f32.gmra.mxu0 %v3770
    %v3841 = vpop.f32.mrf.mxu0
    %v3842 = vadd.f32 %v3767, %v3841
    %v3843 = vpop.f32.mrf.mxu0
    %3844 = vmatprep.mubr.f32.mxu0 0.0
    %3845 = vmatmul.mubr.f32.gmra.mxu0 %v3773
    %v3846 = vpop.f32.mrf.mxu0
    %v3847 = vadd.f32 %v3767, %v3846
    %v3848 = vpop.f32.mrf.mxu0
    %3849 = vdwg.mxu0
    %v3850 = vadd.f32 %v3842, %v2112
    %v3851 = vadd.f32 %v3847, %v2113
    %s3852 = scalar_lea.vmem %s8, 1
    %v3853 = vld [vmem:[%s3852] sm:$0x1]
    %s3854 = scalar_lea.vmem %s9, 1
    %v3855 = vld [vmem:[%s3854] sm:$0x1]
    %v3856 = vsel %vm134, %v3850, 0.0
    %3857 = vadd.xlane.f32.xlu0 %v3856
    %v3858 = vpop.xlane.xlu0 %3857
    %v3859 = vsel %vm134, %v3851, 0.0
    %3860 = vadd.xlane.f32.xlu0 %v3859
    %v3861 = vpop.xlane.xlu0 %3860
    %v3862 = vmul.f32 %v3858, %v141
    %v3863 = vmul.f32 %v3861, %v141
    %v3864 = vsub.f32 %v3850, %v3862
    %v3865 = vsub.f32 %v3851, %v3863
    %v3866 = vmul.f32 %v3864, %v3864
    %v3867 = vmul.f32 %v3865, %v3865
    %v3868 = vsel %vm134, %v3866, 0.0
    %3869 = vadd.xlane.f32.xlu0 %v3868
    %v3870 = vpop.xlane.xlu0 %3869
    %v3871 = vsel %vm134, %v3867, 0.0
    %3872 = vadd.xlane.f32.xlu0 %v3871
    %v3873 = vpop.xlane.xlu0 %3872
    %v3874 = vmul.f32 %v3870, %v141
    %v3875 = vmul.f32 %v3873, %v141
    %v3876 = vadd.f32 %v3874, 1e-05
    %v3877 = vadd.f32 %v3875, 1e-05
    %v3878 = vrsqrt.pop %v3876
    %v3879 = vrsqrt.pop %v3877
    %v3880 = vmul.f32 %v3864, %v3878
    %v3881 = vmul.f32 %v3865, %v3879
    %v3883 = vlaneseq
    %v3884 = vshrl.u32 %v3883, 7
    %v3885 = vsub.s32 0, %v3884
    %v3886 = vrot.slane %v3853, %v3885
    %v3888 = vmul.f32 %v3880, %v3886
    %v3889 = vmul.f32 %v3881, %v3886
    %v3891 = vlaneseq
    %v3892 = vshrl.u32 %v3891, 7
    %v3893 = vsub.s32 0, %v3892
    %v3894 = vrot.slane %v3855, %v3893
    %v3896 = vadd.f32 %v3888, %v3894
    %v3897 = vadd.f32 %v3889, %v3894
    %s3898 = scalar_lea.vmem [#allocation8], 32
    %v3899 = vld [vmem:[%s3898] sm:$0xff]
    %v3900 = vld [vmem:[%s3898 + $0x8] sm:$0xff]
    %v3901 = vld [vmem:[%s3898 + $0x10] sm:$0xff]
    %v3902 = vld [vmem:[%s3898 + $0x18] sm:$0xff]
    %s3903 = scalar_lea.vmem [#allocation10], 1
    %v3904 = vld [vmem:[%s3903] sm:$0x1]
    %v3906 = vlaneseq
    %v3907 = vshrl.u32 %v3906, 7
    %v3908 = vsub.s32 0, %v3907
    %v3909 = vrot.slane %v3904, %v3908
    %v3912 = vsel %vm134, %v3896, 0
    %v3915 = vsel %vm134, %v3897, 0
    %3917 = vmatprep.subr.mxu0 0.0
    %3918 = vmatpush1.msra.mxu0 0.0
    %3919 = vmatprep.subr.mxu0 0.0
    %3920 = vmatpush1.msra.mxu0 0.0
    %3921 = vmatprep.subr.mxu0 0.0
    %3922 = vmatpush1.msra.mxu0 0.0
    %3923 = vmatprep.subr.mxu0 0.0
    %3924 = vmatpush1.msra.mxu0 0.0
    %3925 = vmatprep.subr.mxu0 0.0
    %3926 = vmatpush1.msra.mxu0 0.0
    %3927 = vmatprep.subr.mxu0 0.0
    %3928 = vmatpush1.msra.mxu0 0.0
    %3929 = vmatprep.subr.mxu0 0.0
    %3930 = vmatpush1.msra.mxu0 0.0
    %3931 = vmatprep.subr.mxu0 0.0
    %3932 = vmatpush1.msra.mxu0 0.0
    %3933 = vmatprep.subr.mxu0 0.0
    %3934 = vmatpush1.msra.mxu0 0.0
    %3935 = vmatprep.subr.mxu0 0.0
    %3936 = vmatpush1.msra.mxu0 0.0
    %3937 = vmatprep.subr.mxu0 0.0
    %3938 = vmatpush1.msra.mxu0 0.0
    %3939 = vmatprep.subr.mxu0 0.0
    %3940 = vmatpush1.msra.mxu0 0.0
    %3941 = vmatprep.subr.mxu0 0.0
    %3942 = vmatpush1.msra.mxu0 %v3902
    %3943 = vmatprep.subr.mxu0 0.0
    %3944 = vmatpush1.msra.mxu0 %v3901
    %3945 = vmatprep.subr.mxu0 0.0
    %3946 = vmatpush1.msra.mxu0 %v3900
    %3947 = vmatprep.subr.mxu0 0.0
    %3948 = vmatpush1.msra.mxu0 %v3899
    %3949 = vmatprep.subr.mxu0 0.0
    %3950 = vmatpush2.msra.mxu0 0.0
    %3951 = vmatprep.subr.mxu0 0.0
    %3952 = vmatpush2.msra.mxu0 0.0
    %3953 = vmatprep.subr.mxu0 0.0
    %3954 = vmatpush2.msra.mxu0 0.0
    %3955 = vmatprep.subr.mxu0 0.0
    %3956 = vmatpush2.msra.mxu0 0.0
    %3957 = vmatprep.subr.mxu0 0.0
    %3958 = vmatpush2.msra.mxu0 0.0
    %3959 = vmatprep.subr.mxu0 0.0
    %3960 = vmatpush2.msra.mxu0 0.0
    %3961 = vmatprep.subr.mxu0 0.0
    %3962 = vmatpush2.msra.mxu0 0.0
    %3963 = vmatprep.subr.mxu0 0.0
    %3964 = vmatpush2.msra.mxu0 0.0
    %3965 = vmatprep.subr.mxu0 0.0
    %3966 = vmatpush2.msra.mxu0 0.0
    %3967 = vmatprep.subr.mxu0 0.0
    %3968 = vmatpush2.msra.mxu0 0.0
    %3969 = vmatprep.subr.mxu0 0.0
    %3970 = vmatpush2.msra.mxu0 0.0
    %3971 = vmatprep.subr.mxu0 0.0
    %3972 = vmatpush2.msra.mxu0 0.0
    %3973 = vmatprep.subr.mxu0 0.0
    %3974 = vmatpush2.msra.mxu0 0.0
    %3975 = vmatprep.subr.mxu0 0.0
    %3976 = vmatpush2.msra.mxu0 0.0
    %3977 = vmatprep.subr.mxu0 0.0
    %3978 = vmatpush2.msra.mxu0 0.0
    %3979 = vmatprep.subr.mxu0 0.0
    %3980 = vmatpush2.msra.mxu0 0.0
    %3981 = vmatprep.mubr.f32.mxu0 0.0
    %3982 = vmatmul.mubr.f32.gmra.mxu0 %v3912
    %v3983 = vpop.f32.mrf.mxu0
    %v3984 = vadd.f32 %v3909, %v3983
    %v3985 = vpop.f32.mrf.mxu0
    %3986 = vmatprep.mubr.f32.mxu0 0.0
    %3987 = vmatmul.mubr.f32.gmra.mxu0 %v3915
    %v3988 = vpop.f32.mrf.mxu0
    %v3989 = vadd.f32 %v3909, %v3988
    %v3990 = vpop.f32.mrf.mxu0
    %3991 = vdwg.mxu0
    %v3992 = vmul.f32 %v3984, 0.5
    %v3993 = vmul.f32 %v3989, 0.5
    %v3994 = vmul.f32 %v3984, %v2006
    %v3995 = vmul.f32 %v3989, %v2006
    %v3996 = verf.f32.pop %v3994
    %v3997 = verf.f32.pop %v3995
    %v3998 = vadd.f32 %v3996, 1.0
    %v3999 = vadd.f32 %v3997, 1.0
    %v4000 = vmul.f32 %v3992, %v3998
    %v4001 = vmul.f32 %v3993, %v3999
    %s4002 = scalar_lea.vmem %s12, 64
    %v4003 = vld [vmem:[%s4002] sm:$0xff]
    %v4004 = vld [vmem:[%s4002 + $0x8] sm:$0xff]
    %v4005 = vld [vmem:[%s4002 + $0x10] sm:$0xff]
    %v4006 = vld [vmem:[%s4002 + $0x18] sm:$0xff]
    %v4007 = vld [vmem:[%s4002 + $0x20] sm:$0xff]
    %v4008 = vld [vmem:[%s4002 + $0x28] sm:$0xff]
    %v4009 = vld [vmem:[%s4002 + $0x30] sm:$0xff]
    %v4010 = vld [vmem:[%s4002 + $0x38] sm:$0xff]
    %s4011 = scalar_lea.vmem [#allocation11], 1
    %v4012 = vld [vmem:[%s4011] sm:$0x1]
    %v4014 = vlaneseq
    %v4015 = vshrl.u32 %v4014, 7
    %v4016 = vsub.s32 0, %v4015
    %v4017 = vrot.slane %v4012, %v4016
    %v4020 = vsel %vm2030, %v4000, 0
    %v4023 = vsel %vm2030, %v4001, 0
    %4025 = vmatprep.subr.mxu0 0.0
    %4026 = vmatpush1.msra.mxu0 0.0
    %4027 = vmatprep.subr.mxu0 0.0
    %4028 = vmatpush1.msra.mxu0 0.0
    %4029 = vmatprep.subr.mxu0 0.0
    %4030 = vmatpush1.msra.mxu0 0.0
    %4031 = vmatprep.subr.mxu0 0.0
    %4032 = vmatpush1.msra.mxu0 0.0
    %4033 = vmatprep.subr.mxu0 0.0
    %4034 = vmatpush1.msra.mxu0 0.0
    %4035 = vmatprep.subr.mxu0 0.0
    %4036 = vmatpush1.msra.mxu0 0.0
    %4037 = vmatprep.subr.mxu0 0.0
    %4038 = vmatpush1.msra.mxu0 0.0
    %4039 = vmatprep.subr.mxu0 0.0
    %4040 = vmatpush1.msra.mxu0 0.0
    %4041 = vmatprep.subr.mxu0 0.0
    %4042 = vmatpush1.msra.mxu0 %v4010
    %4043 = vmatprep.subr.mxu0 0.0
    %4044 = vmatpush1.msra.mxu0 %v4009
    %4045 = vmatprep.subr.mxu0 0.0
    %4046 = vmatpush1.msra.mxu0 %v4008
    %4047 = vmatprep.subr.mxu0 0.0
    %4048 = vmatpush1.msra.mxu0 %v4007
    %4049 = vmatprep.subr.mxu0 0.0
    %4050 = vmatpush1.msra.mxu0 %v4006
    %4051 = vmatprep.subr.mxu0 0.0
    %4052 = vmatpush1.msra.mxu0 %v4005
    %4053 = vmatprep.subr.mxu0 0.0
    %4054 = vmatpush1.msra.mxu0 %v4004
    %4055 = vmatprep.subr.mxu0 0.0
    %4056 = vmatpush1.msra.mxu0 %v4003
    %4057 = vmatprep.subr.mxu0 0.0
    %4058 = vmatpush2.msra.mxu0 0.0
    %4059 = vmatprep.subr.mxu0 0.0
    %4060 = vmatpush2.msra.mxu0 0.0
    %4061 = vmatprep.subr.mxu0 0.0
    %4062 = vmatpush2.msra.mxu0 0.0
    %4063 = vmatprep.subr.mxu0 0.0
    %4064 = vmatpush2.msra.mxu0 0.0
    %4065 = vmatprep.subr.mxu0 0.0
    %4066 = vmatpush2.msra.mxu0 0.0
    %4067 = vmatprep.subr.mxu0 0.0
    %4068 = vmatpush2.msra.mxu0 0.0
    %4069 = vmatprep.subr.mxu0 0.0
    %4070 = vmatpush2.msra.mxu0 0.0
    %4071 = vmatprep.subr.mxu0 0.0
    %4072 = vmatpush2.msra.mxu0 0.0
    %4073 = vmatprep.subr.mxu0 0.0
    %4074 = vmatpush2.msra.mxu0 0.0
    %4075 = vmatprep.subr.mxu0 0.0
    %4076 = vmatpush2.msra.mxu0 0.0
    %4077 = vmatprep.subr.mxu0 0.0
    %4078 = vmatpush2.msra.mxu0 0.0
    %4079 = vmatprep.subr.mxu0 0.0
    %4080 = vmatpush2.msra.mxu0 0.0
    %4081 = vmatprep.subr.mxu0 0.0
    %4082 = vmatpush2.msra.mxu0 0.0
    %4083 = vmatprep.subr.mxu0 0.0
    %4084 = vmatpush2.msra.mxu0 0.0
    %4085 = vmatprep.subr.mxu0 0.0
    %4086 = vmatpush2.msra.mxu0 0.0
    %4087 = vmatprep.subr.mxu0 0.0
    %4088 = vmatpush2.msra.mxu0 0.0
    %4089 = vmatprep.mubr.f32.mxu0 0.0
    %4090 = vmatmul.mubr.f32.gmra.mxu0 %v4020
    %v4091 = vpop.f32.mrf.mxu0
    %v4092 = vadd.f32 %v4017, %v4091
    %v4093 = vpop.f32.mrf.mxu0
    %4094 = vmatprep.mubr.f32.mxu0 0.0
    %4095 = vmatmul.mubr.f32.gmra.mxu0 %v4023
    %v4096 = vpop.f32.mrf.mxu0
    %v4097 = vadd.f32 %v4017, %v4096
    %v4098 = vpop.f32.mrf.mxu0
    %4099 = vdwg.mxu0
    %v4100 = vadd.f32 %v4092, %v3850
    %v4101 = vadd.f32 %v4097, %v3851
    %4102 = vst.msk [vmem:[#allocation13] sm:$0xff] %vm134, %v4100
    %4103 = vst.msk [vmem:[#allocation13 + $0x8] sm:$0xff] %vm134, %v4101
    // Predicated region
    $region82: #{transformer_forward.1} parent=1 // pred_check
      _
    $region83: #{transformer_forward.1} parent=1 // pred_check_branch
      %4105 = sbr.rel (0) target = $region85
    $region84: #{transformer_forward.1} parent=1 // pred_region
      %s4107 = ssub.s32 256, 256
      %4108 = vsyncadd [#allocation4], %s4107
      %s4109 = sshll.u32 [#allocation13], 4
      %s4110 = int_to_ptr.vmem [resolvable:$true] %s4109
      %4115 = dma.vmem_to_hbm [thread:$0]  %s4110, 256, %s14, [#allocation4], 128, 128, 8
    $region85: #{transformer_forward.1} parent=1 // pred_fallthru
      _
    // Predicated region
    $region86: #{transformer_forward.1} parent=1 // pred_check
      _
    $region87: #{transformer_forward.1} parent=1 // pred_check_branch
      %4117 = sbr.rel (0) target = $region89
    $region88: #{transformer_forward.1} parent=1 // pred_region
      %4118 = dma.done [#allocation4], 256
    $region89: #{transformer_forward.1} parent=1 // pred_fallthru
      _
    %4119 = vsyncpa [#allocation3], 1
    %4120 = vsyncpa [#allocation6], 1
    %4121 = vsyncpa [#allocation9], 1
    %4122 = vsyncpa [#allocation12], 1
    %4123 = vsyncpa [#allocation4], 1

</llo_original>
